<compile_context>
chip_gen: v6e
topology: v6e:2x2x1
jax: 0.10.0
libtpu: 0.0.40
codegen_flags: <defaults>
</compile_context>

<pallas_src>
import functools

import jax
import jax.numpy as jnp
import numpy as np
from jax import lax
from jax.experimental import pallas as pl
from jax.experimental.pallas import tpu as pltpu


def _rcab_kernel(x_ref, w1_ref, b1_ref, w2_ref, b2_ref,
                 caw1_ref, cab1_ref, caw2_ref, cab2_ref,
                 o_ref, pad_ref, *, fuse_taps):
    """One grid step = Nb images, NHWC layout.

    x_ref   : (Nb, H, W, C)      f32
    w1/w2   : (9*C, C)           bf16  (tap-major im2col weights)
    b1/b2   : (1, C)             f32
    caw1    : (C, Cr), cab1 (1, Cr), caw2 (Cr, C), cab2 (1, C)   f32
    o_ref   : (Nb, H, W, C)      f32
    pad_ref : (Nb, H+2, W+2, C)  f32 VMEM scratch, reused by both convs.
    """
    Nb, H, W, C = x_ref.shape
    M = Nb * H * W
    f32 = jnp.float32
    bf16 = jnp.bfloat16

    # Zero only the 1-pixel halo of the padded scratch (the interior is fully
    # overwritten below).  Done every step -- not gated on program_id == 0 -- so
    # it stays correct when the batch axis is sharded across TensorCores.
    pad_ref[:, 0:1, :, :] = jnp.zeros((Nb, 1, W + 2, C), f32)
    pad_ref[:, H + 1:H + 2, :, :] = jnp.zeros((Nb, 1, W + 2, C), f32)
    pad_ref[:, :, 0:1, :] = jnp.zeros((Nb, H + 2, 1, C), f32)
    pad_ref[:, :, W + 1:W + 2, :] = jnp.zeros((Nb, H + 2, 1, C), f32)

    def conv3x3(w_ref, b_ref):
        """3x3 same conv of the feature map currently stored in pad_ref."""
        padv = pad_ref[...]                                     # (Nb, H+2, W+2, C)
        co = w_ref.shape[1]
        if fuse_taps:
            # im2col: one big matmul with K = 9*C (much better MXU occupancy
            # than 9 tiny K=C matmuls).
            taps = [padv[:, dy:dy + H, dx:dx + W, :].reshape(M, C)
                    for dy in range(3) for dx in range(3)]
            patches = jnp.concatenate(taps, axis=-1)            # (M, 9*C)
            acc = jnp.dot(patches.astype(bf16), w_ref[...],
                          preferred_element_type=f32)           # (M, C) f32 acc
        else:
            # Fallback: per-tap matmuls (same math, bf16 operands, f32 acc).
            acc = jnp.zeros((M, co), f32)
            for dy in range(3):
                for dx in range(3):
                    t0 = (dy * 3 + dx) * C
                    patch = padv[:, dy:dy + H, dx:dx + W, :].reshape(M, C)
                    acc = acc + jnp.dot(patch.astype(bf16), w_ref[t0:t0 + C, :],
                                        preferred_element_type=f32)
        return acc + b_ref[...]                                 # (M, C) + (1, C)

    # ---- conv1 (3x3, same) + bias + ReLU ---------------------------------
    pad_ref[:, 1:H + 1, 1:W + 1, :] = x_ref[...]
    h = jnp.maximum(conv3x3(w1_ref, b1_ref), 0.0)               # (M, C)

    # ---- conv2 (3x3, same) + bias: reuse the same padded scratch ----------
    pad_ref[:, 1:H + 1, 1:W + 1, :] = h.reshape(Nb, H, W, C)
    r = conv3x3(w2_ref, b2_ref)                                 # (M, C)

    # ---- CALayer: global avg pool -> 1x1 conv -> ReLU -> 1x1 conv -> sigmoid
    r3 = r.reshape(Nb, H * W, C)
    y = jnp.mean(r3, axis=1)                                    # (Nb, C)
    y = jnp.maximum(
        jnp.dot(y, caw1_ref[...], preferred_element_type=f32) + cab1_ref[...], 0.0)
    y = jnp.dot(y, caw2_ref[...], preferred_element_type=f32) + cab2_ref[...]
    y = jax.nn.sigmoid(y)                                       # (Nb, C)

    # ---- channel-wise scale + residual add --------------------------------
    out = r3 * y.reshape(Nb, 1, C) + x_ref[...].reshape(Nb, H * W, C)
    o_ref[...] = out.reshape(Nb, H, W, C).astype(o_ref.dtype)


def _pick_batch_block(n, h, w, c, budget_bytes=6 << 20):
    """Largest divisor of n whose per-step working set stays modest."""
    best = 1
    for nb in range(1, n + 1):
        if n % nb:
            continue
        step = nb * (2 * h * w * c * 4             # x block + out block
                     + (h + 2) * (w + 2) * c * 4   # padded scratch
                     + h * w * 9 * c * 4)          # im2col temporary
        if step <= budget_bytes:
            best = nb
    return best


def _vmem_limit_bytes(nb, h, w, c):
    est = (4 * nb * h * w * c * 4                  # double-buffered in/out blocks
           + nb * (h + 2) * (w + 2) * c * 4        # padded scratch
           + 2 * nb * h * w * 9 * c * 4            # im2col temporaries
           + 4 * 9 * c * c * 2                     # bf16 conv weights (x2 buffers)
           + 16 * c * 4)                           # CA weights / biases
    # headroom, but never beyond ~48 MiB (leave slack on v7x's 64 MiB VMEM).
    return int(min(max(4 * est, 8 << 20), 48 << 20))


def _build_rcab_call(n, h, w, c, cr, nb, fuse_taps):
    kernel = functools.partial(_rcab_kernel, fuse_taps=fuse_taps)
    return pl.pallas_call(
        kernel,
        out_shape=jax.ShapeDtypeStruct((n, h, w, c), jnp.float32),
        grid_spec=pltpu.PrefetchScalarGridSpec(
            num_scalar_prefetch=0,
            grid=(n // nb,),
            in_specs=[
                pl.BlockSpec((nb, h, w, c), lambda i: (i, 0, 0, 0)),   # x (NHWC)
                pl.BlockSpec((9 * c, c), lambda i: (0, 0)),            # w1 (im2col, bf16)
                pl.BlockSpec((1, c), lambda i: (0, 0)),                # b1
                pl.BlockSpec((9 * c, c), lambda i: (0, 0)),            # w2 (im2col, bf16)
                pl.BlockSpec((1, c), lambda i: (0, 0)),                # b2
                pl.BlockSpec((c, cr), lambda i: (0, 0)),               # caw1
                pl.BlockSpec((1, cr), lambda i: (0, 0)),               # cab1
                pl.BlockSpec((cr, c), lambda i: (0, 0)),               # caw2
                pl.BlockSpec((1, c), lambda i: (0, 0)),                # cab2
            ],
            out_specs=pl.BlockSpec((nb, h, w, c), lambda i: (i, 0, 0, 0)),
            scratch_shapes=[pltpu.VMEM((nb, h + 2, w + 2, c), jnp.float32)],
        ),
        compiler_params=pltpu.CompilerParams(
            dimension_semantics=("parallel",),   # batch axis is independent -> v7x 2 TCs
            vmem_limit_bytes=_vmem_limit_bytes(nb, h, w, c)),
    )


def rcab_forward_pallas_nhwc(x_nhwc, params, batch_block=None):
    """NHWC-native entry point (no layout transposes on the HBM path)."""
    w1, b1, w2, b2, caw1, cab1, caw2, cab2 = params
    n, h, w, c = x_nhwc.shape
    cr = caw1.shape[1]
    nb = batch_block or _pick_batch_block(n, h, w, c)
    assert n % nb == 0, "batch block must divide the batch size"

    # 3x3 conv weights -> tap-major im2col form (9*Cin, Cout), shipped as bf16.
    w1m = w1.reshape(9 * c, c).astype(jnp.bfloat16)
    w2m = w2.reshape(9 * c, c).astype(jnp.bfloat16)
    args = (x_nhwc.astype(jnp.float32),
            w1m, b1.reshape(1, c).astype(jnp.float32),
            w2m, b2.reshape(1, c).astype(jnp.float32),
            caw1.astype(jnp.float32), cab1.reshape(1, cr).astype(jnp.float32),
            caw2.astype(jnp.float32), cab2.reshape(1, c).astype(jnp.float32))

    try:
        out = _build_rcab_call(n, h, w, c, cr, nb, fuse_taps=True)(*args)
        return jax.block_until_ready(out)
    except Exception:
        # Conservative fallback (identical math, per-tap matmuls) in case the
        # fused im2col concatenation is not supported by the local Mosaic build.
        return _build_rcab_call(n, h, w, c, cr, nb, fuse_taps=False)(*args)


def rcab_forward_pallas(x_nchw, params, batch_block=None):
    """PyTorch-layout (NCHW) convenience wrapper around the NHWC kernel."""
    x = jnp.transpose(x_nchw, (0, 2, 3, 1))
    out = rcab_forward_pallas_nhwc(x, params, batch_block)
    return jnp.transpose(out, (0, 3, 1, 2))


def rcab_forward_reference(x_nchw, params, matmul_dtype=jnp.float32):
    """Pure-JAX reference.  matmul_dtype=bfloat16 mirrors the kernel's MXU dtype."""
    w1, b1, w2, b2, caw1, cab1, caw2, cab2 = params
    x = jnp.transpose(x_nchw, (0, 2, 3, 1)).astype(jnp.float32)  # NHWC

    def conv3x3(inp, w, b):
        out = lax.conv_general_dilated(
            inp.astype(matmul_dtype), w.astype(matmul_dtype),
            window_strides=(1, 1), padding="SAME",
            dimension_numbers=("NHWC", "HWIO", "NHWC"),
            preferred_element_type=jnp.float32)
        return out + b

    h = jnp.maximum(conv3x3(x, w1, b1), 0.0)
    h = conv3x3(h, w2, b2)
    y = jnp.mean(h, axis=(1, 2))                                  # (N, C)
    y = jnp.maximum(y @ caw1 + cab1, 0.0)
    y = jax.nn.sigmoid(y @ caw2 + cab2)
    out = h * y[:, None, None, :] + x
    return jnp.transpose(out, (0, 3, 1, 2))


def make_params(key, n_feat, reduction):
    """Deterministic synthetic parameters (shapes match RCAB.__init__)."""
    c = n_feat
    cr = n_feat // reduction
    ks = jax.random.split(key, 8)
    w1 = 0.1 * jax.random.normal(ks[0], (3, 3, c, c), jnp.float32)    # HWIO
    b1 = 0.1 * jax.random.normal(ks[1], (c,), jnp.float32)
    w2 = 0.1 * jax.random.normal(ks[2], (3, 3, c, c), jnp.float32)
    b2 = 0.1 * jax.random.normal(ks[3], (c,), jnp.float32)
    caw1 = 0.1 * jax.random.normal(ks[4], (c, cr), jnp.float32)       # 1x1 conv == matmul
    cab1 = 0.1 * jax.random.normal(ks[5], (cr,), jnp.float32)
    caw2 = 0.1 * jax.random.normal(ks[6], (cr, c), jnp.float32)
    cab2 = 0.1 * jax.random.normal(ks[7], (c,), jnp.float32)
    return (w1, b1, w2, b2, caw1, cab1, caw2, cab2)


if __name__ == "__main__":
    N, C, H, W = 2, 16, 8, 8
    REDUCTION = 4

    key = jax.random.PRNGKey(0)
    kx, kp = jax.random.split(key)
    x = jax.random.normal(kx, (N, C, H, W), jnp.float32)   # PyTorch NCHW layout
    params = make_params(kp, C, REDUCTION)

    out = rcab_forward_pallas(x, params)
    out = jax.block_until_ready(out)

    # Strict check vs. a reference using the same bf16 matmul operands, plus a
    # looser check vs. the pure-f32 reference (bf16 operands loosen tolerance).
    ref_bf16 = rcab_forward_reference(x, params, matmul_dtype=jnp.bfloat16)
    ref_f32 = rcab_forward_reference(x, params, matmul_dtype=jnp.float32)
    np.testing.assert_allclose(np.asarray(out), np.asarray(ref_bf16),
                               rtol=5e-3, atol=5e-3)
    np.testing.assert_allclose(np.asarray(out), np.asarray(ref_f32),
                               rtol=5e-2, atol=5e-2)

    print("KERNEL_OK")
</pallas_src>

<mosaic_0001>
module attributes {stable_mosaic.version = 11 : i64} {
  func.func @_rcab_kernel(%arg0: i32, %arg1: memref<2x8x8x16xf32, #tpu.memory_space<vmem>>, %arg2: memref<144x16xbf16, #tpu.memory_space<vmem>>, %arg3: memref<1x16xf32, #tpu.memory_space<vmem>>, %arg4: memref<144x16xbf16, #tpu.memory_space<vmem>>, %arg5: memref<1x16xf32, #tpu.memory_space<vmem>>, %arg6: memref<16x4xf32, #tpu.memory_space<vmem>>, %arg7: memref<1x4xf32, #tpu.memory_space<vmem>>, %arg8: memref<4x16xf32, #tpu.memory_space<vmem>>, %arg9: memref<1x16xf32, #tpu.memory_space<vmem>>, %arg10: memref<2x8x8x16xf32, #tpu.memory_space<vmem>>, %arg11: memref<2x10x10x16xf32, #tpu.memory_space<vmem>>) attributes {dimension_semantics = [#tpu.dimension_semantics<parallel>], iteration_bounds = array<i64: 1>, scalar_prefetch = 0 : i64, scratch_operands = 1 : i64, tpu.core_type = #tpu.core_type<tc>, window_params = [{transform_indices = @transform_0, window_bounds = array<i64: 2, 8, 8, 16>}, {pipeline_mode = #tpu.pipeline_mode<synchronous>, transform_indices = @transform_1, window_bounds = array<i64: 144, 16>}, {pipeline_mode = #tpu.pipeline_mode<synchronous>, transform_indices = @transform_2, window_bounds = array<i64: 1, 16>}, {pipeline_mode = #tpu.pipeline_mode<synchronous>, transform_indices = @transform_3, window_bounds = array<i64: 144, 16>}, {pipeline_mode = #tpu.pipeline_mode<synchronous>, transform_indices = @transform_4, window_bounds = array<i64: 1, 16>}, {pipeline_mode = #tpu.pipeline_mode<synchronous>, transform_indices = @transform_5, window_bounds = array<i64: 16, 4>}, {pipeline_mode = #tpu.pipeline_mode<synchronous>, transform_indices = @transform_6, window_bounds = array<i64: 1, 4>}, {pipeline_mode = #tpu.pipeline_mode<synchronous>, transform_indices = @transform_7, window_bounds = array<i64: 4, 16>}, {pipeline_mode = #tpu.pipeline_mode<synchronous>, transform_indices = @transform_8, window_bounds = array<i64: 1, 16>}, {transform_indices = @transform_9, window_bounds = array<i64: 2, 8, 8, 16>}]} {
    %cst = arith.constant 0.000000e+00 : f32
    %0 = vector.broadcast %cst : f32 to vector<2x1x10x16xf32>
    %c0 = arith.constant 0 : index
    %c0_0 = arith.constant 0 : index
    %c0_1 = arith.constant 0 : index
    %c0_2 = arith.constant 0 : index
    %1 = vector.load %arg11[%c0, %c0_0, %c0_1, %c0_2] : memref<2x10x10x16xf32, #tpu.memory_space<vmem>>, vector<2x1x10x16xf32>
    tpu.vector_store %arg11[%c0, %c0_0, %c0_1, %c0_2], %0 {strides = array<i32>} : memref<2x10x10x16xf32, #tpu.memory_space<vmem>>, vector<2x1x10x16xf32>,
    %cst_3 = arith.constant 0.000000e+00 : f32
    %2 = vector.broadcast %cst_3 : f32 to vector<2x1x10x16xf32>
    %c0_4 = arith.constant 0 : index
    %c9 = arith.constant 9 : index
    %c0_5 = arith.constant 0 : index
    %c0_6 = arith.constant 0 : index
    %3 = vector.load %arg11[%c0_4, %c9, %c0_5, %c0_6] : memref<2x10x10x16xf32, #tpu.memory_space<vmem>>, vector<2x1x10x16xf32>
    tpu.vector_store %arg11[%c0_4, %c9, %c0_5, %c0_6], %2 {strides = array<i32>} : memref<2x10x10x16xf32, #tpu.memory_space<vmem>>, vector<2x1x10x16xf32>,
    %cst_7 = arith.constant 0.000000e+00 : f32
    %4 = vector.broadcast %cst_7 : f32 to vector<2x10x1x16xf32>
    %c0_8 = arith.constant 0 : index
    %c0_9 = arith.constant 0 : index
    %c0_10 = arith.constant 0 : index
    %c0_11 = arith.constant 0 : index
    %5 = vector.load %arg11[%c0_8, %c0_9, %c0_10, %c0_11] : memref<2x10x10x16xf32, #tpu.memory_space<vmem>>, vector<2x10x1x16xf32>
    tpu.vector_store %arg11[%c0_8, %c0_9, %c0_10, %c0_11], %4 {strides = array<i32>} : memref<2x10x10x16xf32, #tpu.memory_space<vmem>>, vector<2x10x1x16xf32>,
    %cst_12 = arith.constant 0.000000e+00 : f32
    %6 = vector.broadcast %cst_12 : f32 to vector<2x10x1x16xf32>
    %c0_13 = arith.constant 0 : index
    %c0_14 = arith.constant 0 : index
    %c9_15 = arith.constant 9 : index
    %c0_16 = arith.constant 0 : index
    %7 = vector.load %arg11[%c0_13, %c0_14, %c9_15, %c0_16] : memref<2x10x10x16xf32, #tpu.memory_space<vmem>>, vector<2x10x1x16xf32>
    tpu.vector_store %arg11[%c0_13, %c0_14, %c9_15, %c0_16], %6 {strides = array<i32>} : memref<2x10x10x16xf32, #tpu.memory_space<vmem>>, vector<2x10x1x16xf32>,
    %c0_17 = arith.constant 0 : index
    %c0_18 = arith.constant 0 : index
    %c0_19 = arith.constant 0 : index
    %c0_20 = arith.constant 0 : index
    %8 = vector.load %arg1[%c0_17, %c0_18, %c0_19, %c0_20] : memref<2x8x8x16xf32, #tpu.memory_space<vmem>>, vector<2x8x8x16xf32>
    %c0_21 = arith.constant 0 : index
    %c1 = arith.constant 1 : index
    %c1_22 = arith.constant 1 : index
    %c0_23 = arith.constant 0 : index
    %9 = vector.load %arg11[%c0_21, %c1, %c1_22, %c0_23] : memref<2x10x10x16xf32, #tpu.memory_space<vmem>>, vector<2x8x8x16xf32>
    tpu.vector_store %arg11[%c0_21, %c1, %c1_22, %c0_23], %8 {strides = array<i32>} : memref<2x10x10x16xf32, #tpu.memory_space<vmem>>, vector<2x8x8x16xf32>,
    %c0_24 = arith.constant 0 : index
    %c0_25 = arith.constant 0 : index
    %c0_26 = arith.constant 0 : index
    %c0_27 = arith.constant 0 : index
    %10 = vector.load %arg11[%c0_24, %c0_25, %c0_26, %c0_27] : memref<2x10x10x16xf32, #tpu.memory_space<vmem>>, vector<2x10x10x16xf32>
    %11 = vector.extract_strided_slice %10 {offsets = [0, 0, 0, 0], sizes = [2, 8, 8, 16], strides = [1, 1, 1, 1]} : vector<2x10x10x16xf32> to vector<2x8x8x16xf32>
    %12 = vector.shape_cast %11 : vector<2x8x8x16xf32> to vector<128x16xf32>
    %13 = vector.extract_strided_slice %10 {offsets = [0, 0, 1, 0], sizes = [2, 8, 8, 16], strides = [1, 1, 1, 1]} : vector<2x10x10x16xf32> to vector<2x8x8x16xf32>
    %14 = vector.shape_cast %13 : vector<2x8x8x16xf32> to vector<128x16xf32>
    %15 = vector.extract_strided_slice %10 {offsets = [0, 0, 2, 0], sizes = [2, 8, 8, 16], strides = [1, 1, 1, 1]} : vector<2x10x10x16xf32> to vector<2x8x8x16xf32>
    %16 = vector.shape_cast %15 : vector<2x8x8x16xf32> to vector<128x16xf32>
    %17 = vector.extract_strided_slice %10 {offsets = [0, 1, 0, 0], sizes = [2, 8, 8, 16], strides = [1, 1, 1, 1]} : vector<2x10x10x16xf32> to vector<2x8x8x16xf32>
    %18 = vector.shape_cast %17 : vector<2x8x8x16xf32> to vector<128x16xf32>
    %19 = vector.extract_strided_slice %10 {offsets = [0, 1, 1, 0], sizes = [2, 8, 8, 16], strides = [1, 1, 1, 1]} : vector<2x10x10x16xf32> to vector<2x8x8x16xf32>
    %20 = vector.shape_cast %19 : vector<2x8x8x16xf32> to vector<128x16xf32>
    %21 = vector.extract_strided_slice %10 {offsets = [0, 1, 2, 0], sizes = [2, 8, 8, 16], strides = [1, 1, 1, 1]} : vector<2x10x10x16xf32> to vector<2x8x8x16xf32>
    %22 = vector.shape_cast %21 : vector<2x8x8x16xf32> to vector<128x16xf32>
    %23 = vector.extract_strided_slice %10 {offsets = [0, 2, 0, 0], sizes = [2, 8, 8, 16], strides = [1, 1, 1, 1]} : vector<2x10x10x16xf32> to vector<2x8x8x16xf32>
    %24 = vector.shape_cast %23 : vector<2x8x8x16xf32> to vector<128x16xf32>
    %25 = vector.extract_strided_slice %10 {offsets = [0, 2, 1, 0], sizes = [2, 8, 8, 16], strides = [1, 1, 1, 1]} : vector<2x10x10x16xf32> to vector<2x8x8x16xf32>
    %26 = vector.shape_cast %25 : vector<2x8x8x16xf32> to vector<128x16xf32>
    %27 = vector.extract_strided_slice %10 {offsets = [0, 2, 2, 0], sizes = [2, 8, 8, 16], strides = [1, 1, 1, 1]} : vector<2x10x10x16xf32> to vector<2x8x8x16xf32>
    %28 = vector.shape_cast %27 : vector<2x8x8x16xf32> to vector<128x16xf32>
    %29 = tpu.concatenate %12, %14, %16, %18, %20, %22, %24, %26, %28 in 1 : vector<128x16xf32>, vector<128x16xf32>, vector<128x16xf32>, vector<128x16xf32>, vector<128x16xf32>, vector<128x16xf32>, vector<128x16xf32>, vector<128x16xf32>, vector<128x16xf32> -> vector<128x144xf32>
    %30 = arith.truncf %29 : vector<128x144xf32> to vector<128x144xbf16>
    %c0_28 = arith.constant 0 : index
    %c0_29 = arith.constant 0 : index
    %31 = vector.load %arg2[%c0_28, %c0_29] : memref<144x16xbf16, #tpu.memory_space<vmem>>, vector<144x16xbf16>
    %cst_30 = arith.constant dense<0.000000e+00> : vector<128x16xf32>
    %32 = tpu.matmul %30, %31, %cst_30 {dimension_numbers = #tpu.dot_dimension_numbers<[1], [0], [0], [1], [0, 0, 1, 1], [], []>} : vector<128x144xbf16>, vector<144x16xbf16>, vector<128x16xf32> -> vector<128x16xf32>
    %c0_31 = arith.constant 0 : index
    %c0_32 = arith.constant 0 : index
    %33 = vector.load %arg3[%c0_31, %c0_32] : memref<1x16xf32, #tpu.memory_space<vmem>>, vector<1x16xf32>
    %34 = vector.broadcast %33 : vector<1x16xf32> to vector<128x16xf32>
    %35 = arith.addf %32, %34 : vector<128x16xf32>
    %cst_33 = arith.constant 0.000000e+00 : f32
    %36 = vector.broadcast %cst_33 : f32 to vector<128x16xf32>
    %37 = arith.maximumf %35, %36 : vector<128x16xf32>
    %38 = vector.shape_cast %37 : vector<128x16xf32> to vector<2x8x8x16xf32>
    %c0_34 = arith.constant 0 : index
    %c1_35 = arith.constant 1 : index
    %c1_36 = arith.constant 1 : index
    %c0_37 = arith.constant 0 : index
    %39 = vector.load %arg11[%c0_34, %c1_35, %c1_36, %c0_37] : memref<2x10x10x16xf32, #tpu.memory_space<vmem>>, vector<2x8x8x16xf32>
    tpu.vector_store %arg11[%c0_34, %c1_35, %c1_36, %c0_37], %38 {strides = array<i32>} : memref<2x10x10x16xf32, #tpu.memory_space<vmem>>, vector<2x8x8x16xf32>,
    %c0_38 = arith.constant 0 : index
    %c0_39 = arith.constant 0 : index
    %c0_40 = arith.constant 0 : index
    %c0_41 = arith.constant 0 : index
    %40 = vector.load %arg11[%c0_38, %c0_39, %c0_40, %c0_41] : memref<2x10x10x16xf32, #tpu.memory_space<vmem>>, vector<2x10x10x16xf32>
    %41 = vector.extract_strided_slice %40 {offsets = [0, 0, 0, 0], sizes = [2, 8, 8, 16], strides = [1, 1, 1, 1]} : vector<2x10x10x16xf32> to vector<2x8x8x16xf32>
    %42 = vector.shape_cast %41 : vector<2x8x8x16xf32> to vector<128x16xf32>
    %43 = vector.extract_strided_slice %40 {offsets = [0, 0, 1, 0], sizes = [2, 8, 8, 16], strides = [1, 1, 1, 1]} : vector<2x10x10x16xf32> to vector<2x8x8x16xf32>
    %44 = vector.shape_cast %43 : vector<2x8x8x16xf32> to vector<128x16xf32>
    %45 = vector.extract_strided_slice %40 {offsets = [0, 0, 2, 0], sizes = [2, 8, 8, 16], strides = [1, 1, 1, 1]} : vector<2x10x10x16xf32> to vector<2x8x8x16xf32>
    %46 = vector.shape_cast %45 : vector<2x8x8x16xf32> to vector<128x16xf32>
    %47 = vector.extract_strided_slice %40 {offsets = [0, 1, 0, 0], sizes = [2, 8, 8, 16], strides = [1, 1, 1, 1]} : vector<2x10x10x16xf32> to vector<2x8x8x16xf32>
    %48 = vector.shape_cast %47 : vector<2x8x8x16xf32> to vector<128x16xf32>
    %49 = vector.extract_strided_slice %40 {offsets = [0, 1, 1, 0], sizes = [2, 8, 8, 16], strides = [1, 1, 1, 1]} : vector<2x10x10x16xf32> to vector<2x8x8x16xf32>
    %50 = vector.shape_cast %49 : vector<2x8x8x16xf32> to vector<128x16xf32>
    %51 = vector.extract_strided_slice %40 {offsets = [0, 1, 2, 0], sizes = [2, 8, 8, 16], strides = [1, 1, 1, 1]} : vector<2x10x10x16xf32> to vector<2x8x8x16xf32>
    %52 = vector.shape_cast %51 : vector<2x8x8x16xf32> to vector<128x16xf32>
    %53 = vector.extract_strided_slice %40 {offsets = [0, 2, 0, 0], sizes = [2, 8, 8, 16], strides = [1, 1, 1, 1]} : vector<2x10x10x16xf32> to vector<2x8x8x16xf32>
    %54 = vector.shape_cast %53 : vector<2x8x8x16xf32> to vector<128x16xf32>
    %55 = vector.extract_strided_slice %40 {offsets = [0, 2, 1, 0], sizes = [2, 8, 8, 16], strides = [1, 1, 1, 1]} : vector<2x10x10x16xf32> to vector<2x8x8x16xf32>
    %56 = vector.shape_cast %55 : vector<2x8x8x16xf32> to vector<128x16xf32>
    %57 = vector.extract_strided_slice %40 {offsets = [0, 2, 2, 0], sizes = [2, 8, 8, 16], strides = [1, 1, 1, 1]} : vector<2x10x10x16xf32> to vector<2x8x8x16xf32>
    %58 = vector.shape_cast %57 : vector<2x8x8x16xf32> to vector<128x16xf32>
    %59 = tpu.concatenate %42, %44, %46, %48, %50, %52, %54, %56, %58 in 1 : vector<128x16xf32>, vector<128x16xf32>, vector<128x16xf32>, vector<128x16xf32>, vector<128x16xf32>, vector<128x16xf32>, vector<128x16xf32>, vector<128x16xf32>, vector<128x16xf32> -> vector<128x144xf32>
    %60 = arith.truncf %59 : vector<128x144xf32> to vector<128x144xbf16>
    %c0_42 = arith.constant 0 : index
    %c0_43 = arith.constant 0 : index
    %61 = vector.load %arg4[%c0_42, %c0_43] : memref<144x16xbf16, #tpu.memory_space<vmem>>, vector<144x16xbf16>
    %cst_44 = arith.constant dense<0.000000e+00> : vector<128x16xf32>
    %62 = tpu.matmul %60, %61, %cst_44 {dimension_numbers = #tpu.dot_dimension_numbers<[1], [0], [0], [1], [0, 0, 1, 1], [], []>} : vector<128x144xbf16>, vector<144x16xbf16>, vector<128x16xf32> -> vector<128x16xf32>
    %c0_45 = arith.constant 0 : index
    %c0_46 = arith.constant 0 : index
    %63 = vector.load %arg5[%c0_45, %c0_46] : memref<1x16xf32, #tpu.memory_space<vmem>>, vector<1x16xf32>
    %64 = vector.broadcast %63 : vector<1x16xf32> to vector<128x16xf32>
    %65 = arith.addf %62, %64 : vector<128x16xf32>
    %66 = vector.shape_cast %65 : vector<128x16xf32> to vector<2x64x16xf32>
    %cst_47 = arith.constant dense<0.000000e+00> : vector<2x16xf32>
    %67 = vector.multi_reduction <add>, %66, %cst_47 [1] : vector<2x64x16xf32> to vector<2x16xf32>
    %cst_48 = arith.constant 6.400000e+01 : f32
    %68 = vector.broadcast %cst_48 : f32 to vector<2x16xf32>
    %69 = arith.divf %67, %68 : vector<2x16xf32>
    %c0_49 = arith.constant 0 : index
    %c0_50 = arith.constant 0 : index
    %70 = vector.load %arg6[%c0_49, %c0_50] : memref<16x4xf32, #tpu.memory_space<vmem>>, vector<16x4xf32>
    %cst_51 = arith.constant dense<0.000000e+00> : vector<2x4xf32>
    %71 = tpu.matmul %69, %70, %cst_51 {dimension_numbers = #tpu.dot_dimension_numbers<[1], [0], [0], [1], [0, 0, 1, 1], [], []>} : vector<2x16xf32>, vector<16x4xf32>, vector<2x4xf32> -> vector<2x4xf32>
    %c0_52 = arith.constant 0 : index
    %c0_53 = arith.constant 0 : index
    %72 = vector.load %arg7[%c0_52, %c0_53] : memref<1x4xf32, #tpu.memory_space<vmem>>, vector<1x4xf32>
    %73 = vector.broadcast %72 : vector<1x4xf32> to vector<2x4xf32>
    %74 = arith.addf %71, %73 : vector<2x4xf32>
    %cst_54 = arith.constant 0.000000e+00 : f32
    %75 = vector.broadcast %cst_54 : f32 to vector<2x4xf32>
    %76 = arith.maximumf %74, %75 : vector<2x4xf32>
    %c0_55 = arith.constant 0 : index
    %c0_56 = arith.constant 0 : index
    %77 = vector.load %arg8[%c0_55, %c0_56] : memref<4x16xf32, #tpu.memory_space<vmem>>, vector<4x16xf32>
    %cst_57 = arith.constant dense<0.000000e+00> : vector<2x16xf32>
    %78 = tpu.matmul %76, %77, %cst_57 {dimension_numbers = #tpu.dot_dimension_numbers<[1], [0], [0], [1], [0, 0, 1, 1], [], []>} : vector<2x4xf32>, vector<4x16xf32>, vector<2x16xf32> -> vector<2x16xf32>
    %c0_58 = arith.constant 0 : index
    %c0_59 = arith.constant 0 : index
    %79 = vector.load %arg9[%c0_58, %c0_59] : memref<1x16xf32, #tpu.memory_space<vmem>>, vector<1x16xf32>
    %80 = vector.broadcast %79 : vector<1x16xf32> to vector<2x16xf32>
    %81 = arith.addf %78, %80 : vector<2x16xf32>
    %82 = arith.negf %81 : vector<2x16xf32>
    %83 = math.exp %82 : vector<2x16xf32>
    %cst_60 = arith.constant 1.000000e+00 : f32
    %84 = vector.broadcast %cst_60 : f32 to vector<2x16xf32>
    %85 = arith.addf %84, %83 : vector<2x16xf32>
    %86 = arith.divf %84, %85 : vector<2x16xf32>
    %87 = vector.shape_cast %86 : vector<2x16xf32> to vector<2x1x16xf32>
    %88 = vector.broadcast %87 : vector<2x1x16xf32> to vector<2x64x16xf32>
    %89 = arith.mulf %66, %88 : vector<2x64x16xf32>
    %c0_61 = arith.constant 0 : index
    %c0_62 = arith.constant 0 : index
    %c0_63 = arith.constant 0 : index
    %c0_64 = arith.constant 0 : index
    %90 = vector.load %arg1[%c0_61, %c0_62, %c0_63, %c0_64] : memref<2x8x8x16xf32, #tpu.memory_space<vmem>>, vector<2x8x8x16xf32>
    %91 = vector.shape_cast %90 : vector<2x8x8x16xf32> to vector<2x64x16xf32>
    %92 = arith.addf %89, %91 : vector<2x64x16xf32>
    %93 = vector.shape_cast %92 : vector<2x64x16xf32> to vector<2x8x8x16xf32>
    %c0_65 = arith.constant 0 : index
    %c0_66 = arith.constant 0 : index
    %c0_67 = arith.constant 0 : index
    %c0_68 = arith.constant 0 : index
    %94 = vector.load %arg10[%c0_65, %c0_66, %c0_67, %c0_68] : memref<2x8x8x16xf32, #tpu.memory_space<vmem>>, vector<2x8x8x16xf32>
    tpu.vector_store %arg10[%c0_65, %c0_66, %c0_67, %c0_68], %93 {strides = array<i32>} : memref<2x8x8x16xf32, #tpu.memory_space<vmem>>, vector<2x8x8x16xf32>,
    return
  }
  func.func @transform_0(%arg0: i32) -> (i32, i32, i32, i32) {
    %c0_i32 = arith.constant 0 : i32
    %c0_i32_0 = arith.constant 0 : i32
    %c0_i32_1 = arith.constant 0 : i32
    %c0_i32_2 = arith.constant 0 : i32
    return %arg0, %c0_i32, %c0_i32_0, %c0_i32_1 : i32, i32, i32, i32
  }
  func.func @transform_1(%arg0: i32) -> (i32, i32) {
    %c0_i32 = arith.constant 0 : i32
    %c0_i32_0 = arith.constant 0 : i32
    %c0_i32_1 = arith.constant 0 : i32
    return %c0_i32, %c0_i32_0 : i32, i32
  }
  func.func @transform_2(%arg0: i32) -> (i32, i32) {
    %c0_i32 = arith.constant 0 : i32
    %c0_i32_0 = arith.constant 0 : i32
    %c0_i32_1 = arith.constant 0 : i32
    return %c0_i32, %c0_i32_0 : i32, i32
  }
  func.func @transform_3(%arg0: i32) -> (i32, i32) {
    %c0_i32 = arith.constant 0 : i32
    %c0_i32_0 = arith.constant 0 : i32
    %c0_i32_1 = arith.constant 0 : i32
    return %c0_i32, %c0_i32_0 : i32, i32
  }
  func.func @transform_4(%arg0: i32) -> (i32, i32) {
    %c0_i32 = arith.constant 0 : i32
    %c0_i32_0 = arith.constant 0 : i32
    %c0_i32_1 = arith.constant 0 : i32
    return %c0_i32, %c0_i32_0 : i32, i32
  }
  func.func @transform_5(%arg0: i32) -> (i32, i32) {
    %c0_i32 = arith.constant 0 : i32
    %c0_i32_0 = arith.constant 0 : i32
    %c0_i32_1 = arith.constant 0 : i32
    return %c0_i32, %c0_i32_0 : i32, i32
  }
  func.func @transform_6(%arg0: i32) -> (i32, i32) {
    %c0_i32 = arith.constant 0 : i32
    %c0_i32_0 = arith.constant 0 : i32
    %c0_i32_1 = arith.constant 0 : i32
    return %c0_i32, %c0_i32_0 : i32, i32
  }
  func.func @transform_7(%arg0: i32) -> (i32, i32) {
    %c0_i32 = arith.constant 0 : i32
    %c0_i32_0 = arith.constant 0 : i32
    %c0_i32_1 = arith.constant 0 : i32
    return %c0_i32, %c0_i32_0 : i32, i32
  }
  func.func @transform_8(%arg0: i32) -> (i32, i32) {
    %c0_i32 = arith.constant 0 : i32
    %c0_i32_0 = arith.constant 0 : i32
    %c0_i32_1 = arith.constant 0 : i32
    return %c0_i32, %c0_i32_0 : i32, i32
  }
  func.func @transform_9(%arg0: i32) -> (i32, i32, i32, i32) {
    %c0_i32 = arith.constant 0 : i32
    %c0_i32_0 = arith.constant 0 : i32
    %c0_i32_1 = arith.constant 0 : i32
    %c0_i32_2 = arith.constant 0 : i32
    return %arg0, %c0_i32, %c0_i32_0, %c0_i32_1 : i32, i32, i32, i32
  }
}

module attributes {stable_mosaic.version = 11 : i64} {
  func.func @_rcab_kernel(%arg0: i32, %arg1: memref<2x8x8x16xf32, #tpu.memory_space<vmem>>, %arg2: memref<144x16xbf16, #tpu.memory_space<vmem>>, %arg3: memref<1x16xf32, #tpu.memory_space<vmem>>, %arg4: memref<144x16xbf16, #tpu.memory_space<vmem>>, %arg5: memref<1x16xf32, #tpu.memory_space<vmem>>, %arg6: memref<16x4xf32, #tpu.memory_space<vmem>>, %arg7: memref<1x4xf32, #tpu.memory_space<vmem>>, %arg8: memref<4x16xf32, #tpu.memory_space<vmem>>, %arg9: memref<1x16xf32, #tpu.memory_space<vmem>>, %arg10: memref<2x8x8x16xf32, #tpu.memory_space<vmem>>, %arg11: memref<2x10x10x16xf32, #tpu.memory_space<vmem>>) attributes {dimension_semantics = [#tpu.dimension_semantics<parallel>], iteration_bounds = array<i64: 1>, scalar_prefetch = 0 : i64, scratch_operands = 1 : i64, tpu.core_type = #tpu.core_type<tc>, window_params = [{transform_indices = @transform_0, window_bounds = array<i64: 2, 8, 8, 16>}, {pipeline_mode = #tpu.pipeline_mode<synchronous>, transform_indices = @transform_1, window_bounds = array<i64: 144, 16>}, {pipeline_mode = #tpu.pipeline_mode<synchronous>, transform_indices = @transform_2, window_bounds = array<i64: 1, 16>}, {pipeline_mode = #tpu.pipeline_mode<synchronous>, transform_indices = @transform_3, window_bounds = array<i64: 144, 16>}, {pipeline_mode = #tpu.pipeline_mode<synchronous>, transform_indices = @transform_4, window_bounds = array<i64: 1, 16>}, {pipeline_mode = #tpu.pipeline_mode<synchronous>, transform_indices = @transform_5, window_bounds = array<i64: 16, 4>}, {pipeline_mode = #tpu.pipeline_mode<synchronous>, transform_indices = @transform_6, window_bounds = array<i64: 1, 4>}, {pipeline_mode = #tpu.pipeline_mode<synchronous>, transform_indices = @transform_7, window_bounds = array<i64: 4, 16>}, {pipeline_mode = #tpu.pipeline_mode<synchronous>, transform_indices = @transform_8, window_bounds = array<i64: 1, 16>}, {transform_indices = @transform_9, window_bounds = array<i64: 2, 8, 8, 16>}]} {
    %cst = arith.constant 0.000000e+00 : f32
    %0 = vector.broadcast %cst : f32 to vector<2x1x10x16xf32>
    %c0 = arith.constant 0 : index
    %c0_0 = arith.constant 0 : index
    %c0_1 = arith.constant 0 : index
    %c0_2 = arith.constant 0 : index
    %1 = vector.load %arg11[%c0, %c0_0, %c0_1, %c0_2] : memref<2x10x10x16xf32, #tpu.memory_space<vmem>>, vector<2x1x10x16xf32>
    tpu.vector_store %arg11[%c0, %c0_0, %c0_1, %c0_2], %0 {strides = array<i32>} : memref<2x10x10x16xf32, #tpu.memory_space<vmem>>, vector<2x1x10x16xf32>,
    %cst_3 = arith.constant 0.000000e+00 : f32
    %2 = vector.broadcast %cst_3 : f32 to vector<2x1x10x16xf32>
    %c0_4 = arith.constant 0 : index
    %c9 = arith.constant 9 : index
    %c0_5 = arith.constant 0 : index
    %c0_6 = arith.constant 0 : index
    %3 = vector.load %arg11[%c0_4, %c9, %c0_5, %c0_6] : memref<2x10x10x16xf32, #tpu.memory_space<vmem>>, vector<2x1x10x16xf32>
    tpu.vector_store %arg11[%c0_4, %c9, %c0_5, %c0_6], %2 {strides = array<i32>} : memref<2x10x10x16xf32, #tpu.memory_space<vmem>>, vector<2x1x10x16xf32>,
    %cst_7 = arith.constant 0.000000e+00 : f32
    %4 = vector.broadcast %cst_7 : f32 to vector<2x10x1x16xf32>
    %c0_8 = arith.constant 0 : index
    %c0_9 = arith.constant 0 : index
    %c0_10 = arith.constant 0 : index
    %c0_11 = arith.constant 0 : index
    %5 = vector.load %arg11[%c0_8, %c0_9, %c0_10, %c0_11] : memref<2x10x10x16xf32, #tpu.memory_space<vmem>>, vector<2x10x1x16xf32>
    tpu.vector_store %arg11[%c0_8, %c0_9, %c0_10, %c0_11], %4 {strides = array<i32>} : memref<2x10x10x16xf32, #tpu.memory_space<vmem>>, vector<2x10x1x16xf32>,
    %cst_12 = arith.constant 0.000000e+00 : f32
    %6 = vector.broadcast %cst_12 : f32 to vector<2x10x1x16xf32>
    %c0_13 = arith.constant 0 : index
    %c0_14 = arith.constant 0 : index
    %c9_15 = arith.constant 9 : index
    %c0_16 = arith.constant 0 : index
    %7 = vector.load %arg11[%c0_13, %c0_14, %c9_15, %c0_16] : memref<2x10x10x16xf32, #tpu.memory_space<vmem>>, vector<2x10x1x16xf32>
    tpu.vector_store %arg11[%c0_13, %c0_14, %c9_15, %c0_16], %6 {strides = array<i32>} : memref<2x10x10x16xf32, #tpu.memory_space<vmem>>, vector<2x10x1x16xf32>,
    %c0_17 = arith.constant 0 : index
    %c0_18 = arith.constant 0 : index
    %c0_19 = arith.constant 0 : index
    %c0_20 = arith.constant 0 : index
    %8 = vector.load %arg1[%c0_17, %c0_18, %c0_19, %c0_20] : memref<2x8x8x16xf32, #tpu.memory_space<vmem>>, vector<2x8x8x16xf32>
    %c0_21 = arith.constant 0 : index
    %c1 = arith.constant 1 : index
    %c1_22 = arith.constant 1 : index
    %c0_23 = arith.constant 0 : index
    %9 = vector.load %arg11[%c0_21, %c1, %c1_22, %c0_23] : memref<2x10x10x16xf32, #tpu.memory_space<vmem>>, vector<2x8x8x16xf32>
    tpu.vector_store %arg11[%c0_21, %c1, %c1_22, %c0_23], %8 {strides = array<i32>} : memref<2x10x10x16xf32, #tpu.memory_space<vmem>>, vector<2x8x8x16xf32>,
    %c0_24 = arith.constant 0 : index
    %c0_25 = arith.constant 0 : index
    %c0_26 = arith.constant 0 : index
    %c0_27 = arith.constant 0 : index
    %10 = vector.load %arg11[%c0_24, %c0_25, %c0_26, %c0_27] : memref<2x10x10x16xf32, #tpu.memory_space<vmem>>, vector<2x10x10x16xf32>
    %cst_28 = arith.constant 0.000000e+00 : f32
    %11 = vector.broadcast %cst_28 : f32 to vector<128x16xf32>
    %12 = vector.extract_strided_slice %10 {offsets = [0, 0, 0, 0], sizes = [2, 8, 8, 16], strides = [1, 1, 1, 1]} : vector<2x10x10x16xf32> to vector<2x8x8x16xf32>
    %13 = vector.shape_cast %12 : vector<2x8x8x16xf32> to vector<128x16xf32>
    %14 = arith.truncf %13 : vector<128x16xf32> to vector<128x16xbf16>
    %c0_29 = arith.constant 0 : index
    %c0_30 = arith.constant 0 : index
    %15 = vector.load %arg2[%c0_29, %c0_30] : memref<144x16xbf16, #tpu.memory_space<vmem>>, vector<16x16xbf16>
    %cst_31 = arith.constant dense<0.000000e+00> : vector<128x16xf32>
    %16 = tpu.matmul %14, %15, %cst_31 {dimension_numbers = #tpu.dot_dimension_numbers<[1], [0], [0], [1], [0, 0, 1, 1], [], []>} : vector<128x16xbf16>, vector<16x16xbf16>, vector<128x16xf32> -> vector<128x16xf32>
    %17 = arith.addf %11, %16 : vector<128x16xf32>
    %18 = vector.extract_strided_slice %10 {offsets = [0, 0, 1, 0], sizes = [2, 8, 8, 16], strides = [1, 1, 1, 1]} : vector<2x10x10x16xf32> to vector<2x8x8x16xf32>
    %19 = vector.shape_cast %18 : vector<2x8x8x16xf32> to vector<128x16xf32>
    %20 = arith.truncf %19 : vector<128x16xf32> to vector<128x16xbf16>
    %c16 = arith.constant 16 : index
    %c0_32 = arith.constant 0 : index
    %21 = vector.load %arg2[%c16, %c0_32] : memref<144x16xbf16, #tpu.memory_space<vmem>>, vector<16x16xbf16>
    %cst_33 = arith.constant dense<0.000000e+00> : vector<128x16xf32>
    %22 = tpu.matmul %20, %21, %cst_33 {dimension_numbers = #tpu.dot_dimension_numbers<[1], [0], [0], [1], [0, 0, 1, 1], [], []>} : vector<128x16xbf16>, vector<16x16xbf16>, vector<128x16xf32> -> vector<128x16xf32>
    %23 = arith.addf %17, %22 : vector<128x16xf32>
    %24 = vector.extract_strided_slice %10 {offsets = [0, 0, 2, 0], sizes = [2, 8, 8, 16], strides = [1, 1, 1, 1]} : vector<2x10x10x16xf32> to vector<2x8x8x16xf32>
    %25 = vector.shape_cast %24 : vector<2x8x8x16xf32> to vector<128x16xf32>
    %26 = arith.truncf %25 : vector<128x16xf32> to vector<128x16xbf16>
    %c32 = arith.constant 32 : index
    %c0_34 = arith.constant 0 : index
    %27 = vector.load %arg2[%c32, %c0_34] : memref<144x16xbf16, #tpu.memory_space<vmem>>, vector<16x16xbf16>
    %cst_35 = arith.constant dense<0.000000e+00> : vector<128x16xf32>
    %28 = tpu.matmul %26, %27, %cst_35 {dimension_numbers = #tpu.dot_dimension_numbers<[1], [0], [0], [1], [0, 0, 1, 1], [], []>} : vector<128x16xbf16>, vector<16x16xbf16>, vector<128x16xf32> -> vector<128x16xf32>
    %29 = arith.addf %23, %28 : vector<128x16xf32>
    %30 = vector.extract_strided_slice %10 {offsets = [0, 1, 0, 0], sizes = [2, 8, 8, 16], strides = [1, 1, 1, 1]} : vector<2x10x10x16xf32> to vector<2x8x8x16xf32>
    %31 = vector.shape_cast %30 : vector<2x8x8x16xf32> to vector<128x16xf32>
    %32 = arith.truncf %31 : vector<128x16xf32> to vector<128x16xbf16>
    %c48 = arith.constant 48 : index
    %c0_36 = arith.constant 0 : index
    %33 = vector.load %arg2[%c48, %c0_36] : memref<144x16xbf16, #tpu.memory_space<vmem>>, vector<16x16xbf16>
    %cst_37 = arith.constant dense<0.000000e+00> : vector<128x16xf32>
    %34 = tpu.matmul %32, %33, %cst_37 {dimension_numbers = #tpu.dot_dimension_numbers<[1], [0], [0], [1], [0, 0, 1, 1], [], []>} : vector<128x16xbf16>, vector<16x16xbf16>, vector<128x16xf32> -> vector<128x16xf32>
    %35 = arith.addf %29, %34 : vector<128x16xf32>
    %36 = vector.extract_strided_slice %10 {offsets = [0, 1, 1, 0], sizes = [2, 8, 8, 16], strides = [1, 1, 1, 1]} : vector<2x10x10x16xf32> to vector<2x8x8x16xf32>
    %37 = vector.shape_cast %36 : vector<2x8x8x16xf32> to vector<128x16xf32>
    %38 = arith.truncf %37 : vector<128x16xf32> to vector<128x16xbf16>
    %c64 = arith.constant 64 : index
    %c0_38 = arith.constant 0 : index
    %39 = vector.load %arg2[%c64, %c0_38] : memref<144x16xbf16, #tpu.memory_space<vmem>>, vector<16x16xbf16>
    %cst_39 = arith.constant dense<0.000000e+00> : vector<128x16xf32>
    %40 = tpu.matmul %38, %39, %cst_39 {dimension_numbers = #tpu.dot_dimension_numbers<[1], [0], [0], [1], [0, 0, 1, 1], [], []>} : vector<128x16xbf16>, vector<16x16xbf16>, vector<128x16xf32> -> vector<128x16xf32>
    %41 = arith.addf %35, %40 : vector<128x16xf32>
    %42 = vector.extract_strided_slice %10 {offsets = [0, 1, 2, 0], sizes = [2, 8, 8, 16], strides = [1, 1, 1, 1]} : vector<2x10x10x16xf32> to vector<2x8x8x16xf32>
    %43 = vector.shape_cast %42 : vector<2x8x8x16xf32> to vector<128x16xf32>
    %44 = arith.truncf %43 : vector<128x16xf32> to vector<128x16xbf16>
    %c80 = arith.constant 80 : index
    %c0_40 = arith.constant 0 : index
    %45 = vector.load %arg2[%c80, %c0_40] : memref<144x16xbf16, #tpu.memory_space<vmem>>, vector<16x16xbf16>
    %cst_41 = arith.constant dense<0.000000e+00> : vector<128x16xf32>
    %46 = tpu.matmul %44, %45, %cst_41 {dimension_numbers = #tpu.dot_dimension_numbers<[1], [0], [0], [1], [0, 0, 1, 1], [], []>} : vector<128x16xbf16>, vector<16x16xbf16>, vector<128x16xf32> -> vector<128x16xf32>
    %47 = arith.addf %41, %46 : vector<128x16xf32>
    %48 = vector.extract_strided_slice %10 {offsets = [0, 2, 0, 0], sizes = [2, 8, 8, 16], strides = [1, 1, 1, 1]} : vector<2x10x10x16xf32> to vector<2x8x8x16xf32>
    %49 = vector.shape_cast %48 : vector<2x8x8x16xf32> to vector<128x16xf32>
    %50 = arith.truncf %49 : vector<128x16xf32> to vector<128x16xbf16>
    %c96 = arith.constant 96 : index
    %c0_42 = arith.constant 0 : index
    %51 = vector.load %arg2[%c96, %c0_42] : memref<144x16xbf16, #tpu.memory_space<vmem>>, vector<16x16xbf16>
    %cst_43 = arith.constant dense<0.000000e+00> : vector<128x16xf32>
    %52 = tpu.matmul %50, %51, %cst_43 {dimension_numbers = #tpu.dot_dimension_numbers<[1], [0], [0], [1], [0, 0, 1, 1], [], []>} : vector<128x16xbf16>, vector<16x16xbf16>, vector<128x16xf32> -> vector<128x16xf32>
    %53 = arith.addf %47, %52 : vector<128x16xf32>
    %54 = vector.extract_strided_slice %10 {offsets = [0, 2, 1, 0], sizes = [2, 8, 8, 16], strides = [1, 1, 1, 1]} : vector<2x10x10x16xf32> to vector<2x8x8x16xf32>
    %55 = vector.shape_cast %54 : vector<2x8x8x16xf32> to vector<128x16xf32>
    %56 = arith.truncf %55 : vector<128x16xf32> to vector<128x16xbf16>
    %c112 = arith.constant 112 : index
    %c0_44 = arith.constant 0 : index
    %57 = vector.load %arg2[%c112, %c0_44] : memref<144x16xbf16, #tpu.memory_space<vmem>>, vector<16x16xbf16>
    %cst_45 = arith.constant dense<0.000000e+00> : vector<128x16xf32>
    %58 = tpu.matmul %56, %57, %cst_45 {dimension_numbers = #tpu.dot_dimension_numbers<[1], [0], [0], [1], [0, 0, 1, 1], [], []>} : vector<128x16xbf16>, vector<16x16xbf16>, vector<128x16xf32> -> vector<128x16xf32>
    %59 = arith.addf %53, %58 : vector<128x16xf32>
    %60 = vector.extract_strided_slice %10 {offsets = [0, 2, 2, 0], sizes = [2, 8, 8, 16], strides = [1, 1, 1, 1]} : vector<2x10x10x16xf32> to vector<2x8x8x16xf32>
    %61 = vector.shape_cast %60 : vector<2x8x8x16xf32> to vector<128x16xf32>
    %62 = arith.truncf %61 : vector<128x16xf32> to vector<128x16xbf16>
    %c128 = arith.constant 128 : index
    %c0_46 = arith.constant 0 : index
    %63 = vector.load %arg2[%c128, %c0_46] : memref<144x16xbf16, #tpu.memory_space<vmem>>, vector<16x16xbf16>
    %cst_47 = arith.constant dense<0.000000e+00> : vector<128x16xf32>
    %64 = tpu.matmul %62, %63, %cst_47 {dimension_numbers = #tpu.dot_dimension_numbers<[1], [0], [0], [1], [0, 0, 1, 1], [], []>} : vector<128x16xbf16>, vector<16x16xbf16>, vector<128x16xf32> -> vector<128x16xf32>
    %65 = arith.addf %59, %64 : vector<128x16xf32>
    %c0_48 = arith.constant 0 : index
    %c0_49 = arith.constant 0 : index
    %66 = vector.load %arg3[%c0_48, %c0_49] : memref<1x16xf32, #tpu.memory_space<vmem>>, vector<1x16xf32>
    %67 = vector.broadcast %66 : vector<1x16xf32> to vector<128x16xf32>
    %68 = arith.addf %65, %67 : vector<128x16xf32>
    %cst_50 = arith.constant 0.000000e+00 : f32
    %69 = vector.broadcast %cst_50 : f32 to vector<128x16xf32>
    %70 = arith.maximumf %68, %69 : vector<128x16xf32>
    %71 = vector.shape_cast %70 : vector<128x16xf32> to vector<2x8x8x16xf32>
    %c0_51 = arith.constant 0 : index
    %c1_52 = arith.constant 1 : index
    %c1_53 = arith.constant 1 : index
    %c0_54 = arith.constant 0 : index
    %72 = vector.load %arg11[%c0_51, %c1_52, %c1_53, %c0_54] : memref<2x10x10x16xf32, #tpu.memory_space<vmem>>, vector<2x8x8x16xf32>
    tpu.vector_store %arg11[%c0_51, %c1_52, %c1_53, %c0_54], %71 {strides = array<i32>} : memref<2x10x10x16xf32, #tpu.memory_space<vmem>>, vector<2x8x8x16xf32>,
    %c0_55 = arith.constant 0 : index
    %c0_56 = arith.constant 0 : index
    %c0_57 = arith.constant 0 : index
    %c0_58 = arith.constant 0 : index
    %73 = vector.load %arg11[%c0_55, %c0_56, %c0_57, %c0_58] : memref<2x10x10x16xf32, #tpu.memory_space<vmem>>, vector<2x10x10x16xf32>
    %cst_59 = arith.constant 0.000000e+00 : f32
    %74 = vector.broadcast %cst_59 : f32 to vector<128x16xf32>
    %75 = vector.extract_strided_slice %73 {offsets = [0, 0, 0, 0], sizes = [2, 8, 8, 16], strides = [1, 1, 1, 1]} : vector<2x10x10x16xf32> to vector<2x8x8x16xf32>
    %76 = vector.shape_cast %75 : vector<2x8x8x16xf32> to vector<128x16xf32>
    %77 = arith.truncf %76 : vector<128x16xf32> to vector<128x16xbf16>
    %c0_60 = arith.constant 0 : index
    %c0_61 = arith.constant 0 : index
    %78 = vector.load %arg4[%c0_60, %c0_61] : memref<144x16xbf16, #tpu.memory_space<vmem>>, vector<16x16xbf16>
    %cst_62 = arith.constant dense<0.000000e+00> : vector<128x16xf32>
    %79 = tpu.matmul %77, %78, %cst_62 {dimension_numbers = #tpu.dot_dimension_numbers<[1], [0], [0], [1], [0, 0, 1, 1], [], []>} : vector<128x16xbf16>, vector<16x16xbf16>, vector<128x16xf32> -> vector<128x16xf32>
    %80 = arith.addf %74, %79 : vector<128x16xf32>
    %81 = vector.extract_strided_slice %73 {offsets = [0, 0, 1, 0], sizes = [2, 8, 8, 16], strides = [1, 1, 1, 1]} : vector<2x10x10x16xf32> to vector<2x8x8x16xf32>
    %82 = vector.shape_cast %81 : vector<2x8x8x16xf32> to vector<128x16xf32>
    %83 = arith.truncf %82 : vector<128x16xf32> to vector<128x16xbf16>
    %c16_63 = arith.constant 16 : index
    %c0_64 = arith.constant 0 : index
    %84 = vector.load %arg4[%c16_63, %c0_64] : memref<144x16xbf16, #tpu.memory_space<vmem>>, vector<16x16xbf16>
    %cst_65 = arith.constant dense<0.000000e+00> : vector<128x16xf32>
    %85 = tpu.matmul %83, %84, %cst_65 {dimension_numbers = #tpu.dot_dimension_numbers<[1], [0], [0], [1], [0, 0, 1, 1], [], []>} : vector<128x16xbf16>, vector<16x16xbf16>, vector<128x16xf32> -> vector<128x16xf32>
    %86 = arith.addf %80, %85 : vector<128x16xf32>
    %87 = vector.extract_strided_slice %73 {offsets = [0, 0, 2, 0], sizes = [2, 8, 8, 16], strides = [1, 1, 1, 1]} : vector<2x10x10x16xf32> to vector<2x8x8x16xf32>
    %88 = vector.shape_cast %87 : vector<2x8x8x16xf32> to vector<128x16xf32>
    %89 = arith.truncf %88 : vector<128x16xf32> to vector<128x16xbf16>
    %c32_66 = arith.constant 32 : index
    %c0_67 = arith.constant 0 : index
    %90 = vector.load %arg4[%c32_66, %c0_67] : memref<144x16xbf16, #tpu.memory_space<vmem>>, vector<16x16xbf16>
    %cst_68 = arith.constant dense<0.000000e+00> : vector<128x16xf32>
    %91 = tpu.matmul %89, %90, %cst_68 {dimension_numbers = #tpu.dot_dimension_numbers<[1], [0], [0], [1], [0, 0, 1, 1], [], []>} : vector<128x16xbf16>, vector<16x16xbf16>, vector<128x16xf32> -> vector<128x16xf32>
    %92 = arith.addf %86, %91 : vector<128x16xf32>
    %93 = vector.extract_strided_slice %73 {offsets = [0, 1, 0, 0], sizes = [2, 8, 8, 16], strides = [1, 1, 1, 1]} : vector<2x10x10x16xf32> to vector<2x8x8x16xf32>
    %94 = vector.shape_cast %93 : vector<2x8x8x16xf32> to vector<128x16xf32>
    %95 = arith.truncf %94 : vector<128x16xf32> to vector<128x16xbf16>
    %c48_69 = arith.constant 48 : index
    %c0_70 = arith.constant 0 : index
    %96 = vector.load %arg4[%c48_69, %c0_70] : memref<144x16xbf16, #tpu.memory_space<vmem>>, vector<16x16xbf16>
    %cst_71 = arith.constant dense<0.000000e+00> : vector<128x16xf32>
    %97 = tpu.matmul %95, %96, %cst_71 {dimension_numbers = #tpu.dot_dimension_numbers<[1], [0], [0], [1], [0, 0, 1, 1], [], []>} : vector<128x16xbf16>, vector<16x16xbf16>, vector<128x16xf32> -> vector<128x16xf32>
    %98 = arith.addf %92, %97 : vector<128x16xf32>
    %99 = vector.extract_strided_slice %73 {offsets = [0, 1, 1, 0], sizes = [2, 8, 8, 16], strides = [1, 1, 1, 1]} : vector<2x10x10x16xf32> to vector<2x8x8x16xf32>
    %100 = vector.shape_cast %99 : vector<2x8x8x16xf32> to vector<128x16xf32>
    %101 = arith.truncf %100 : vector<128x16xf32> to vector<128x16xbf16>
    %c64_72 = arith.constant 64 : index
    %c0_73 = arith.constant 0 : index
    %102 = vector.load %arg4[%c64_72, %c0_73] : memref<144x16xbf16, #tpu.memory_space<vmem>>, vector<16x16xbf16>
    %cst_74 = arith.constant dense<0.000000e+00> : vector<128x16xf32>
    %103 = tpu.matmul %101, %102, %cst_74 {dimension_numbers = #tpu.dot_dimension_numbers<[1], [0], [0], [1], [0, 0, 1, 1], [], []>} : vector<128x16xbf16>, vector<16x16xbf16>, vector<128x16xf32> -> vector<128x16xf32>
    %104 = arith.addf %98, %103 : vector<128x16xf32>
    %105 = vector.extract_strided_slice %73 {offsets = [0, 1, 2, 0], sizes = [2, 8, 8, 16], strides = [1, 1, 1, 1]} : vector<2x10x10x16xf32> to vector<2x8x8x16xf32>
    %106 = vector.shape_cast %105 : vector<2x8x8x16xf32> to vector<128x16xf32>
    %107 = arith.truncf %106 : vector<128x16xf32> to vector<128x16xbf16>
    %c80_75 = arith.constant 80 : index
    %c0_76 = arith.constant 0 : index
    %108 = vector.load %arg4[%c80_75, %c0_76] : memref<144x16xbf16, #tpu.memory_space<vmem>>, vector<16x16xbf16>
    %cst_77 = arith.constant dense<0.000000e+00> : vector<128x16xf32>
    %109 = tpu.matmul %107, %108, %cst_77 {dimension_numbers = #tpu.dot_dimension_numbers<[1], [0], [0], [1], [0, 0, 1, 1], [], []>} : vector<128x16xbf16>, vector<16x16xbf16>, vector<128x16xf32> -> vector<128x16xf32>
    %110 = arith.addf %104, %109 : vector<128x16xf32>
    %111 = vector.extract_strided_slice %73 {offsets = [0, 2, 0, 0], sizes = [2, 8, 8, 16], strides = [1, 1, 1, 1]} : vector<2x10x10x16xf32> to vector<2x8x8x16xf32>
    %112 = vector.shape_cast %111 : vector<2x8x8x16xf32> to vector<128x16xf32>
    %113 = arith.truncf %112 : vector<128x16xf32> to vector<128x16xbf16>
    %c96_78 = arith.constant 96 : index
    %c0_79 = arith.constant 0 : index
    %114 = vector.load %arg4[%c96_78, %c0_79] : memref<144x16xbf16, #tpu.memory_space<vmem>>, vector<16x16xbf16>
    %cst_80 = arith.constant dense<0.000000e+00> : vector<128x16xf32>
    %115 = tpu.matmul %113, %114, %cst_80 {dimension_numbers = #tpu.dot_dimension_numbers<[1], [0], [0], [1], [0, 0, 1, 1], [], []>} : vector<128x16xbf16>, vector<16x16xbf16>, vector<128x16xf32> -> vector<128x16xf32>
    %116 = arith.addf %110, %115 : vector<128x16xf32>
    %117 = vector.extract_strided_slice %73 {offsets = [0, 2, 1, 0], sizes = [2, 8, 8, 16], strides = [1, 1, 1, 1]} : vector<2x10x10x16xf32> to vector<2x8x8x16xf32>
    %118 = vector.shape_cast %117 : vector<2x8x8x16xf32> to vector<128x16xf32>
    %119 = arith.truncf %118 : vector<128x16xf32> to vector<128x16xbf16>
    %c112_81 = arith.constant 112 : index
    %c0_82 = arith.constant 0 : index
    %120 = vector.load %arg4[%c112_81, %c0_82] : memref<144x16xbf16, #tpu.memory_space<vmem>>, vector<16x16xbf16>
    %cst_83 = arith.constant dense<0.000000e+00> : vector<128x16xf32>
    %121 = tpu.matmul %119, %120, %cst_83 {dimension_numbers = #tpu.dot_dimension_numbers<[1], [0], [0], [1], [0, 0, 1, 1], [], []>} : vector<128x16xbf16>, vector<16x16xbf16>, vector<128x16xf32> -> vector<128x16xf32>
    %122 = arith.addf %116, %121 : vector<128x16xf32>
    %123 = vector.extract_strided_slice %73 {offsets = [0, 2, 2, 0], sizes = [2, 8, 8, 16], strides = [1, 1, 1, 1]} : vector<2x10x10x16xf32> to vector<2x8x8x16xf32>
    %124 = vector.shape_cast %123 : vector<2x8x8x16xf32> to vector<128x16xf32>
    %125 = arith.truncf %124 : vector<128x16xf32> to vector<128x16xbf16>
    %c128_84 = arith.constant 128 : index
    %c0_85 = arith.constant 0 : index
    %126 = vector.load %arg4[%c128_84, %c0_85] : memref<144x16xbf16, #tpu.memory_space<vmem>>, vector<16x16xbf16>
    %cst_86 = arith.constant dense<0.000000e+00> : vector<128x16xf32>
    %127 = tpu.matmul %125, %126, %cst_86 {dimension_numbers = #tpu.dot_dimension_numbers<[1], [0], [0], [1], [0, 0, 1, 1], [], []>} : vector<128x16xbf16>, vector<16x16xbf16>, vector<128x16xf32> -> vector<128x16xf32>
    %128 = arith.addf %122, %127 : vector<128x16xf32>
    %c0_87 = arith.constant 0 : index
    %c0_88 = arith.constant 0 : index
    %129 = vector.load %arg5[%c0_87, %c0_88] : memref<1x16xf32, #tpu.memory_space<vmem>>, vector<1x16xf32>
    %130 = vector.broadcast %129 : vector<1x16xf32> to vector<128x16xf32>
    %131 = arith.addf %128, %130 : vector<128x16xf32>
    %132 = vector.shape_cast %131 : vector<128x16xf32> to vector<2x64x16xf32>
    %cst_89 = arith.constant dense<0.000000e+00> : vector<2x16xf32>
    %133 = vector.multi_reduction <add>, %132, %cst_89 [1] : vector<2x64x16xf32> to vector<2x16xf32>
    %cst_90 = arith.constant 6.400000e+01 : f32
    %134 = vector.broadcast %cst_90 : f32 to vector<2x16xf32>
    %135 = arith.divf %133, %134 : vector<2x16xf32>
    %c0_91 = arith.constant 0 : index
    %c0_92 = arith.constant 0 : index
    %136 = vector.load %arg6[%c0_91, %c0_92] : memref<16x4xf32, #tpu.memory_space<vmem>>, vector<16x4xf32>
    %cst_93 = arith.constant dense<0.000000e+00> : vector<2x4xf32>
    %137 = tpu.matmul %135, %136, %cst_93 {dimension_numbers = #tpu.dot_dimension_numbers<[1], [0], [0], [1], [0, 0, 1, 1], [], []>} : vector<2x16xf32>, vector<16x4xf32>, vector<2x4xf32> -> vector<2x4xf32>
    %c0_94 = arith.constant 0 : index
    %c0_95 = arith.constant 0 : index
    %138 = vector.load %arg7[%c0_94, %c0_95] : memref<1x4xf32, #tpu.memory_space<vmem>>, vector<1x4xf32>
    %139 = vector.broadcast %138 : vector<1x4xf32> to vector<2x4xf32>
    %140 = arith.addf %137, %139 : vector<2x4xf32>
    %cst_96 = arith.constant 0.000000e+00 : f32
    %141 = vector.broadcast %cst_96 : f32 to vector<2x4xf32>
    %142 = arith.maximumf %140, %141 : vector<2x4xf32>
    %c0_97 = arith.constant 0 : index
    %c0_98 = arith.constant 0 : index
    %143 = vector.load %arg8[%c0_97, %c0_98] : memref<4x16xf32, #tpu.memory_space<vmem>>, vector<4x16xf32>
    %cst_99 = arith.constant dense<0.000000e+00> : vector<2x16xf32>
    %144 = tpu.matmul %142, %143, %cst_99 {dimension_numbers = #tpu.dot_dimension_numbers<[1], [0], [0], [1], [0, 0, 1, 1], [], []>} : vector<2x4xf32>, vector<4x16xf32>, vector<2x16xf32> -> vector<2x16xf32>
    %c0_100 = arith.constant 0 : index
    %c0_101 = arith.constant 0 : index
    %145 = vector.load %arg9[%c0_100, %c0_101] : memref<1x16xf32, #tpu.memory_space<vmem>>, vector<1x16xf32>
    %146 = vector.broadcast %145 : vector<1x16xf32> to vector<2x16xf32>
    %147 = arith.addf %144, %146 : vector<2x16xf32>
    %148 = arith.negf %147 : vector<2x16xf32>
    %149 = math.exp %148 : vector<2x16xf32>
    %cst_102 = arith.constant 1.000000e+00 : f32
    %150 = vector.broadcast %cst_102 : f32 to vector<2x16xf32>
    %151 = arith.addf %150, %149 : vector<2x16xf32>
    %152 = arith.divf %150, %151 : vector<2x16xf32>
    %153 = vector.shape_cast %152 : vector<2x16xf32> to vector<2x1x16xf32>
    %154 = vector.broadcast %153 : vector<2x1x16xf32> to vector<2x64x16xf32>
    %155 = arith.mulf %132, %154 : vector<2x64x16xf32>
    %c0_103 = arith.constant 0 : index
    %c0_104 = arith.constant 0 : index
    %c0_105 = arith.constant 0 : index
    %c0_106 = arith.constant 0 : index
    %156 = vector.load %arg1[%c0_103, %c0_104, %c0_105, %c0_106] : memref<2x8x8x16xf32, #tpu.memory_space<vmem>>, vector<2x8x8x16xf32>
    %157 = vector.shape_cast %156 : vector<2x8x8x16xf32> to vector<2x64x16xf32>
    %158 = arith.addf %155, %157 : vector<2x64x16xf32>
    %159 = vector.shape_cast %158 : vector<2x64x16xf32> to vector<2x8x8x16xf32>
    %c0_107 = arith.constant 0 : index
    %c0_108 = arith.constant 0 : index
    %c0_109 = arith.constant 0 : index
    %c0_110 = arith.constant 0 : index
    %160 = vector.load %arg10[%c0_107, %c0_108, %c0_109, %c0_110] : memref<2x8x8x16xf32, #tpu.memory_space<vmem>>, vector<2x8x8x16xf32>
    tpu.vector_store %arg10[%c0_107, %c0_108, %c0_109, %c0_110], %159 {strides = array<i32>} : memref<2x8x8x16xf32, #tpu.memory_space<vmem>>, vector<2x8x8x16xf32>,
    return
  }
  func.func @transform_0(%arg0: i32) -> (i32, i32, i32, i32) {
    %c0_i32 = arith.constant 0 : i32
    %c0_i32_0 = arith.constant 0 : i32
    %c0_i32_1 = arith.constant 0 : i32
    %c0_i32_2 = arith.constant 0 : i32
    return %arg0, %c0_i32, %c0_i32_0, %c0_i32_1 : i32, i32, i32, i32
  }
  func.func @transform_1(%arg0: i32) -> (i32, i32) {
    %c0_i32 = arith.constant 0 : i32
    %c0_i32_0 = arith.constant 0 : i32
    %c0_i32_1 = arith.constant 0 : i32
    return %c0_i32, %c0_i32_0 : i32, i32
  }
  func.func @transform_2(%arg0: i32) -> (i32, i32) {
    %c0_i32 = arith.constant 0 : i32
    %c0_i32_0 = arith.constant 0 : i32
    %c0_i32_1 = arith.constant 0 : i32
    return %c0_i32, %c0_i32_0 : i32, i32
  }
  func.func @transform_3(%arg0: i32) -> (i32, i32) {
    %c0_i32 = arith.constant 0 : i32
    %c0_i32_0 = arith.constant 0 : i32
    %c0_i32_1 = arith.constant 0 : i32
    return %c0_i32, %c0_i32_0 : i32, i32
  }
  func.func @transform_4(%arg0: i32) -> (i32, i32) {
    %c0_i32 = arith.constant 0 : i32
    %c0_i32_0 = arith.constant 0 : i32
    %c0_i32_1 = arith.constant 0 : i32
    return %c0_i32, %c0_i32_0 : i32, i32
  }
  func.func @transform_5(%arg0: i32) -> (i32, i32) {
    %c0_i32 = arith.constant 0 : i32
    %c0_i32_0 = arith.constant 0 : i32
    %c0_i32_1 = arith.constant 0 : i32
    return %c0_i32, %c0_i32_0 : i32, i32
  }
  func.func @transform_6(%arg0: i32) -> (i32, i32) {
    %c0_i32 = arith.constant 0 : i32
    %c0_i32_0 = arith.constant 0 : i32
    %c0_i32_1 = arith.constant 0 : i32
    return %c0_i32, %c0_i32_0 : i32, i32
  }
  func.func @transform_7(%arg0: i32) -> (i32, i32) {
    %c0_i32 = arith.constant 0 : i32
    %c0_i32_0 = arith.constant 0 : i32
    %c0_i32_1 = arith.constant 0 : i32
    return %c0_i32, %c0_i32_0 : i32, i32
  }
  func.func @transform_8(%arg0: i32) -> (i32, i32) {
    %c0_i32 = arith.constant 0 : i32
    %c0_i32_0 = arith.constant 0 : i32
    %c0_i32_1 = arith.constant 0 : i32
    return %c0_i32, %c0_i32_0 : i32, i32
  }
  func.func @transform_9(%arg0: i32) -> (i32, i32, i32, i32) {
    %c0_i32 = arith.constant 0 : i32
    %c0_i32_0 = arith.constant 0 : i32
    %c0_i32_1 = arith.constant 0 : i32
    %c0_i32_2 = arith.constant 0 : i32
    return %arg0, %c0_i32, %c0_i32_0, %c0_i32_1 : i32, i32, i32, i32
  }
}

</mosaic_0001>

<llo_original>
// kernel: tpu_custom_call.1
$region0: #{tpu_custom_call.1}
  #allocation0 [shape = 'u32[]', space=smem, size = 0x4, offset = 0x4, fixed_abs, tag = 'smem constant byte address 0x4 - core index']
  #allocation1 [shape = 'u32[144,128]{1,0:T(1,128)}', space=vmem, size = 0x12000, scoped, tag = 'internal scratch']
  #allocation2 [shape = 'f32[2,10,10,16]{3,2,1,0:T(8,128)}', space=vmem, size = 0x28000, scoped, tag = 'scratch operand']
  %s0 = inlined_call_operand.vmem [shape: f32[2,8,8,16], index: 0, kind: input, shape index: {}]
  %s1 = inlined_call_operand.vmem [shape: bf16[144,16], index: 1, kind: input, shape index: {}]
  %s2 = inlined_call_operand.vmem [shape: f32[1,16], index: 2, kind: input, shape index: {}]
  %s3 = inlined_call_operand.vmem [shape: bf16[144,16], index: 3, kind: input, shape index: {}]
  %s4 = inlined_call_operand.vmem [shape: f32[1,16], index: 4, kind: input, shape index: {}]
  %s5 = inlined_call_operand.vmem [shape: f32[16,4], index: 5, kind: input, shape index: {}]
  %s6 = inlined_call_operand.vmem [shape: f32[1,4], index: 6, kind: input, shape index: {}]
  %s7 = inlined_call_operand.vmem [shape: f32[4,16], index: 7, kind: input, shape index: {}]
  %s8 = inlined_call_operand.vmem [shape: f32[1,16], index: 8, kind: input, shape index: {}]
  %s9 = inlined_call_operand.hbm [shape: f32[2,8,8,16], index: 9, kind: output, shape index: {}]
  %s10 = sld [smem:[#allocation0]]
  $region46: #{tpu_custom_call.1} parent=0
    _
  %s12 = ssub.s32 1, %s10
  %s13 = scalar_select 0, %s12, %s10
  $region1: #{tpu_custom_call.1} parent=0
    #allocation3 [shape = 'u8[65536]{0}', space=vmem, size = 0x10000, scoped, tag = 'output window, operand 0, single buffered']
    #allocation4 [shape = 's32[1]{0}', space=sflag, size = 0x4, scoped, tag = 'scoped memory for tpu_custom_call.1']
    %14 = vsyncpa [#allocation4], 0
    // Predicated region
    $region2: #{tpu_custom_call.1} parent=1 // pred_check
      _
    $region3: #{tpu_custom_call.1} parent=1 // pred_check_branch
      %16 = sbr.rel (0) target = $region5
    $region4: #{tpu_custom_call.1} parent=1 // pred_region
      _
    $region5: #{tpu_custom_call.1} parent=1 // pred_fallthru
      _
    // Predicated region
    $region6: #{tpu_custom_call.1} parent=1 // pred_check
      _
    $region7: #{tpu_custom_call.1} parent=1 // pred_check_branch
      %18 = sbr.rel (0) target = $region9
    $region8: #{tpu_custom_call.1} parent=1 // pred_region
      _
    $region9: #{tpu_custom_call.1} parent=1 // pred_fallthru
      _
    // Predicated region
    $region10: #{tpu_custom_call.1} parent=1 // pred_check
      _
    $region11: #{tpu_custom_call.1} parent=1 // pred_check_branch
      %20 = sbr.rel (0) target = $region13
    $region12: #{tpu_custom_call.1} parent=1 // pred_region
      _
    $region13: #{tpu_custom_call.1} parent=1 // pred_fallthru
      _
    // Predicated region
    $region14: #{tpu_custom_call.1} parent=1 // pred_check
      _
    $region15: #{tpu_custom_call.1} parent=1 // pred_check_branch
      %22 = sbr.rel (0) target = $region17
    $region16: #{tpu_custom_call.1} parent=1 // pred_region
      _
    $region17: #{tpu_custom_call.1} parent=1 // pred_fallthru
      _
    // Predicated region
    $region18: #{tpu_custom_call.1} parent=1 // pred_check
      _
    $region19: #{tpu_custom_call.1} parent=1 // pred_check_branch
      %24 = sbr.rel (0) target = $region21
    $region20: #{tpu_custom_call.1} parent=1 // pred_region
      _
    $region21: #{tpu_custom_call.1} parent=1 // pred_fallthru
      _
    // Predicated region
    $region22: #{tpu_custom_call.1} parent=1 // pred_check
      _
    $region23: #{tpu_custom_call.1} parent=1 // pred_check_branch
      %26 = sbr.rel (0) target = $region25
    $region24: #{tpu_custom_call.1} parent=1 // pred_region
      _
    $region25: #{tpu_custom_call.1} parent=1 // pred_fallthru
      _
    // Predicated region
    $region26: #{tpu_custom_call.1} parent=1 // pred_check
      _
    $region27: #{tpu_custom_call.1} parent=1 // pred_check_branch
      %28 = sbr.rel (0) target = $region29
    $region28: #{tpu_custom_call.1} parent=1 // pred_region
      _
    $region29: #{tpu_custom_call.1} parent=1 // pred_fallthru
      _
    // Predicated region
    $region30: #{tpu_custom_call.1} parent=1 // pred_check
      _
    $region31: #{tpu_custom_call.1} parent=1 // pred_check_branch
      %30 = sbr.rel (0) target = $region33
    $region32: #{tpu_custom_call.1} parent=1 // pred_region
      _
    $region33: #{tpu_custom_call.1} parent=1 // pred_fallthru
      _
    // Predicated region
    $region34: #{tpu_custom_call.1} parent=1 // pred_check
      _
    $region35: #{tpu_custom_call.1} parent=1 // pred_check_branch
      %32 = sbr.rel (0) target = $region37
    $region36: #{tpu_custom_call.1} parent=1 // pred_region
      _
    $region37: #{tpu_custom_call.1} parent=1 // pred_fallthru
      _
    %vm34 = vcmask 130048
    %35 = vst.msk [vmem:[#allocation2] sm:$0xff] %vm34, 0.0
    %vm36 = vcmask 123904
    %37 = vst.msk [vmem:[#allocation2 + $0x8] sm:$0x3] %vm36, 0.0
    %38 = vst.msk [vmem:[#allocation2 + $0xa0] sm:$0xff] %vm34, 0.0
    %39 = vst.msk [vmem:[#allocation2 + $0xa8] sm:$0x3] %vm36, 0.0
    %s40 = scalar_lea.vmem [#allocation2], 144
    %41 = vst.msk [vmem:[%s40] sm:$0xff] %vm34, 0.0
    %42 = vst.msk [vmem:[%s40 + $0x8] sm:$0x3] %vm36, 0.0
    %43 = vst.msk [vmem:[%s40 + $0xa0] sm:$0xff] %vm34, 0.0
    %44 = vst.msk [vmem:[%s40 + $0xa8] sm:$0x3] %vm36, 0.0
    %vm45 = vcmask 122880
    %46 = vst.msk [vmem:[#allocation2] sm:$0x1] %vm45, 0.0
    %47 = vst.msk [vmem:[#allocation2 + $0x10] sm:$0x1] %vm45, 0.0
    %48 = vst.msk [vmem:[#allocation2 + $0x20] sm:$0x1] %vm45, 0.0
    %49 = vst.msk [vmem:[#allocation2 + $0x30] sm:$0x1] %vm45, 0.0
    %50 = vst.msk [vmem:[#allocation2 + $0x40] sm:$0x1] %vm45, 0.0
    %51 = vst.msk [vmem:[#allocation2 + $0x50] sm:$0x1] %vm45, 0.0
    %52 = vst.msk [vmem:[#allocation2 + $0x60] sm:$0x1] %vm45, 0.0
    %53 = vst.msk [vmem:[#allocation2 + $0x70] sm:$0x1] %vm45, 0.0
    %54 = vst.msk [vmem:[#allocation2 + $0x80] sm:$0x1] %vm45, 0.0
    %55 = vst.msk [vmem:[#allocation2 + $0x90] sm:$0x1] %vm45, 0.0
    %56 = vst.msk [vmem:[#allocation2 + $0xa0] sm:$0x1] %vm45, 0.0
    %57 = vst.msk [vmem:[#allocation2 + $0xb0] sm:$0x1] %vm45, 0.0
    %58 = vst.msk [vmem:[#allocation2 + $0xc0] sm:$0x1] %vm45, 0.0
    %59 = vst.msk [vmem:[#allocation2 + $0xd0] sm:$0x1] %vm45, 0.0
    %60 = vst.msk [vmem:[#allocation2 + $0xe0] sm:$0x1] %vm45, 0.0
    %61 = vst.msk [vmem:[#allocation2 + $0xf0] sm:$0x1] %vm45, 0.0
    %62 = vst.msk [vmem:[#allocation2 + $0x100] sm:$0x1] %vm45, 0.0
    %63 = vst.msk [vmem:[#allocation2 + $0x110] sm:$0x1] %vm45, 0.0
    %64 = vst.msk [vmem:[#allocation2 + $0x120] sm:$0x1] %vm45, 0.0
    %65 = vst.msk [vmem:[#allocation2 + $0x130] sm:$0x1] %vm45, 0.0
    %66 = vst.msk [vmem:[#allocation2 + $0x9] sm:$0x1] %vm45, 0.0
    %67 = vst.msk [vmem:[#allocation2 + $0x19] sm:$0x1] %vm45, 0.0
    %68 = vst.msk [vmem:[#allocation2 + $0x29] sm:$0x1] %vm45, 0.0
    %69 = vst.msk [vmem:[#allocation2 + $0x39] sm:$0x1] %vm45, 0.0
    %70 = vst.msk [vmem:[#allocation2 + $0x49] sm:$0x1] %vm45, 0.0
    %71 = vst.msk [vmem:[#allocation2 + $0x59] sm:$0x1] %vm45, 0.0
    %72 = vst.msk [vmem:[#allocation2 + $0x69] sm:$0x1] %vm45, 0.0
    %73 = vst.msk [vmem:[#allocation2 + $0x79] sm:$0x1] %vm45, 0.0
    %74 = vst.msk [vmem:[#allocation2 + $0x89] sm:$0x1] %vm45, 0.0
    %75 = vst.msk [vmem:[#allocation2 + $0x99] sm:$0x1] %vm45, 0.0
    %76 = vst.msk [vmem:[#allocation2 + $0xa9] sm:$0x1] %vm45, 0.0
    %77 = vst.msk [vmem:[#allocation2 + $0xb9] sm:$0x1] %vm45, 0.0
    %78 = vst.msk [vmem:[#allocation2 + $0xc9] sm:$0x1] %vm45, 0.0
    %79 = vst.msk [vmem:[#allocation2 + $0xd9] sm:$0x1] %vm45, 0.0
    %80 = vst.msk [vmem:[#allocation2 + $0xe9] sm:$0x1] %vm45, 0.0
    %81 = vst.msk [vmem:[#allocation2 + $0xf9] sm:$0x1] %vm45, 0.0
    %82 = vst.msk [vmem:[#allocation2 + $0x109] sm:$0x1] %vm45, 0.0
    %83 = vst.msk [vmem:[#allocation2 + $0x119] sm:$0x1] %vm45, 0.0
    %84 = vst.msk [vmem:[#allocation2 + $0x129] sm:$0x1] %vm45, 0.0
    %85 = vst.msk [vmem:[#allocation2 + $0x139] sm:$0x1] %vm45, 0.0
    %v86 = vld [vmem:[%s0] sm:$0xff]
    %v87 = vld [vmem:[%s0 + $0x8] sm:$0xff]
    %v88 = vld [vmem:[%s0 + $0x10] sm:$0xff]
    %v89 = vld [vmem:[%s0 + $0x18] sm:$0xff]
    %v90 = vld [vmem:[%s0 + $0x20] sm:$0xff]
    %v91 = vld [vmem:[%s0 + $0x28] sm:$0xff]
    %v92 = vld [vmem:[%s0 + $0x30] sm:$0xff]
    %v93 = vld [vmem:[%s0 + $0x38] sm:$0xff]
    %v94 = vld [vmem:[%s0 + $0x40] sm:$0xff]
    %v95 = vld [vmem:[%s0 + $0x48] sm:$0xff]
    %v96 = vld [vmem:[%s0 + $0x50] sm:$0xff]
    %v97 = vld [vmem:[%s0 + $0x58] sm:$0xff]
    %v98 = vld [vmem:[%s0 + $0x60] sm:$0xff]
    %v99 = vld [vmem:[%s0 + $0x68] sm:$0xff]
    %v100 = vld [vmem:[%s0 + $0x70] sm:$0xff]
    %v101 = vld [vmem:[%s0 + $0x78] sm:$0xff]
    %s102 = scalar_lea.vmem [#allocation2], 16
    %103 = vst.msk [vmem:[%s102 + $0x1] sm:$0xff] %vm34, %v86
    %104 = vst.msk [vmem:[%s102 + $0x11] sm:$0xff] %vm34, %v87
    %105 = vst.msk [vmem:[%s102 + $0x21] sm:$0xff] %vm34, %v88
    %106 = vst.msk [vmem:[%s102 + $0x31] sm:$0xff] %vm34, %v89
    %107 = vst.msk [vmem:[%s102 + $0x41] sm:$0xff] %vm34, %v90
    %108 = vst.msk [vmem:[%s102 + $0x51] sm:$0xff] %vm34, %v91
    %109 = vst.msk [vmem:[%s102 + $0x61] sm:$0xff] %vm34, %v92
    %110 = vst.msk [vmem:[%s102 + $0x71] sm:$0xff] %vm34, %v93
    %111 = vst.msk [vmem:[%s102 + $0xa1] sm:$0xff] %vm34, %v94
    %112 = vst.msk [vmem:[%s102 + $0xb1] sm:$0xff] %vm34, %v95
    %113 = vst.msk [vmem:[%s102 + $0xc1] sm:$0xff] %vm34, %v96
    %114 = vst.msk [vmem:[%s102 + $0xd1] sm:$0xff] %vm34, %v97
    %115 = vst.msk [vmem:[%s102 + $0xe1] sm:$0xff] %vm34, %v98
    %116 = vst.msk [vmem:[%s102 + $0xf1] sm:$0xff] %vm34, %v99
    %117 = vst.msk [vmem:[%s102 + $0x101] sm:$0xff] %vm34, %v100
    %118 = vst.msk [vmem:[%s102 + $0x111] sm:$0xff] %vm34, %v101
    %v119 = vld [vmem:[#allocation2] sm:$0xff]
    %v120 = vld [vmem:[#allocation2 + $0x8] sm:$0x3]
    %v121 = vld [vmem:[#allocation2 + $0x10] sm:$0xff]
    %v122 = vld [vmem:[#allocation2 + $0x18] sm:$0x3]
    %v123 = vld [vmem:[#allocation2 + $0x20] sm:$0xff]
    %v124 = vld [vmem:[#allocation2 + $0x28] sm:$0x3]
    %v125 = vld [vmem:[#allocation2 + $0x30] sm:$0xff]
    %v126 = vld [vmem:[#allocation2 + $0x38] sm:$0x3]
    %v127 = vld [vmem:[#allocation2 + $0x40] sm:$0xff]
    %v128 = vld [vmem:[#allocation2 + $0x48] sm:$0x3]
    %v129 = vld [vmem:[#allocation2 + $0x50] sm:$0xff]
    %v130 = vld [vmem:[#allocation2 + $0x58] sm:$0x3]
    %v131 = vld [vmem:[#allocation2 + $0x60] sm:$0xff]
    %v132 = vld [vmem:[#allocation2 + $0x68] sm:$0x3]
    %v133 = vld [vmem:[#allocation2 + $0x70] sm:$0xff]
    %v134 = vld [vmem:[#allocation2 + $0x78] sm:$0x3]
    %v135 = vld [vmem:[#allocation2 + $0x80] sm:$0xff]
    %v136 = vld [vmem:[#allocation2 + $0x88] sm:$0x3]
    %v137 = vld [vmem:[#allocation2 + $0x90] sm:$0xff]
    %v138 = vld [vmem:[#allocation2 + $0x98] sm:$0x3]
    %v139 = vld [vmem:[#allocation2 + $0xa0] sm:$0xff]
    %v140 = vld [vmem:[#allocation2 + $0xa8] sm:$0x3]
    %v141 = vld [vmem:[#allocation2 + $0xb0] sm:$0xff]
    %v142 = vld [vmem:[#allocation2 + $0xb8] sm:$0x3]
    %v143 = vld [vmem:[#allocation2 + $0xc0] sm:$0xff]
    %v144 = vld [vmem:[#allocation2 + $0xc8] sm:$0x3]
    %v145 = vld [vmem:[#allocation2 + $0xd0] sm:$0xff]
    %v146 = vld [vmem:[#allocation2 + $0xd8] sm:$0x3]
    %v147 = vld [vmem:[#allocation2 + $0xe0] sm:$0xff]
    %v148 = vld [vmem:[#allocation2 + $0xe8] sm:$0x3]
    %v149 = vld [vmem:[#allocation2 + $0xf0] sm:$0xff]
    %v150 = vld [vmem:[#allocation2 + $0xf8] sm:$0x3]
    %v151 = vld [vmem:[#allocation2 + $0x100] sm:$0xff]
    %v152 = vld [vmem:[#allocation2 + $0x108] sm:$0x3]
    %v153 = vld [vmem:[#allocation2 + $0x110] sm:$0xff]
    %v154 = vld [vmem:[#allocation2 + $0x118] sm:$0x3]
    %v155 = vld [vmem:[#allocation2 + $0x120] sm:$0xff]
    %v156 = vld [vmem:[#allocation2 + $0x128] sm:$0x3]
    %v157 = vld [vmem:[#allocation2 + $0x130] sm:$0xff]
    %v158 = vld [vmem:[#allocation2 + $0x138] sm:$0x3]
    %vm191 = vcmask 1046528
    %v192 = vrot.slane %v119, 1
    %v193 = vrot.slane %v120, 1
    %v194 = vsel %vm191, %v192, %v193
    %v195 = vrot.slane %v121, 1
    %v196 = vrot.slane %v122, 1
    %v197 = vsel %vm191, %v195, %v196
    %v198 = vrot.slane %v123, 1
    %v199 = vrot.slane %v124, 1
    %v200 = vsel %vm191, %v198, %v199
    %v201 = vrot.slane %v125, 1
    %v202 = vrot.slane %v126, 1
    %v203 = vsel %vm191, %v201, %v202
    %v204 = vrot.slane %v127, 1
    %v205 = vrot.slane %v128, 1
    %v206 = vsel %vm191, %v204, %v205
    %v207 = vrot.slane %v129, 1
    %v208 = vrot.slane %v130, 1
    %v209 = vsel %vm191, %v207, %v208
    %v210 = vrot.slane %v131, 1
    %v211 = vrot.slane %v132, 1
    %v212 = vsel %vm191, %v210, %v211
    %v213 = vrot.slane %v133, 1
    %v214 = vrot.slane %v134, 1
    %v215 = vsel %vm191, %v213, %v214
    %v216 = vrot.slane %v139, 1
    %v217 = vrot.slane %v140, 1
    %v218 = vsel %vm191, %v216, %v217
    %v219 = vrot.slane %v141, 1
    %v220 = vrot.slane %v142, 1
    %v221 = vsel %vm191, %v219, %v220
    %v222 = vrot.slane %v143, 1
    %v223 = vrot.slane %v144, 1
    %v224 = vsel %vm191, %v222, %v223
    %v225 = vrot.slane %v145, 1
    %v226 = vrot.slane %v146, 1
    %v227 = vsel %vm191, %v225, %v226
    %v228 = vrot.slane %v147, 1
    %v229 = vrot.slane %v148, 1
    %v230 = vsel %vm191, %v228, %v229
    %v231 = vrot.slane %v149, 1
    %v232 = vrot.slane %v150, 1
    %v233 = vsel %vm191, %v231, %v232
    %v234 = vrot.slane %v151, 1
    %v235 = vrot.slane %v152, 1
    %v236 = vsel %vm191, %v234, %v235
    %v237 = vrot.slane %v153, 1
    %v238 = vrot.slane %v154, 1
    %v239 = vsel %vm191, %v237, %v238
    %vm240 = vcmask 1045504
    %v241 = vrot.slane %v119, 2
    %v242 = vrot.slane %v120, 2
    %v243 = vsel %vm240, %v241, %v242
    %v244 = vrot.slane %v121, 2
    %v245 = vrot.slane %v122, 2
    %v246 = vsel %vm240, %v244, %v245
    %v247 = vrot.slane %v123, 2
    %v248 = vrot.slane %v124, 2
    %v249 = vsel %vm240, %v247, %v248
    %v250 = vrot.slane %v125, 2
    %v251 = vrot.slane %v126, 2
    %v252 = vsel %vm240, %v250, %v251
    %v253 = vrot.slane %v127, 2
    %v254 = vrot.slane %v128, 2
    %v255 = vsel %vm240, %v253, %v254
    %v256 = vrot.slane %v129, 2
    %v257 = vrot.slane %v130, 2
    %v258 = vsel %vm240, %v256, %v257
    %v259 = vrot.slane %v131, 2
    %v260 = vrot.slane %v132, 2
    %v261 = vsel %vm240, %v259, %v260
    %v262 = vrot.slane %v133, 2
    %v263 = vrot.slane %v134, 2
    %v264 = vsel %vm240, %v262, %v263
    %v265 = vrot.slane %v139, 2
    %v266 = vrot.slane %v140, 2
    %v267 = vsel %vm240, %v265, %v266
    %v268 = vrot.slane %v141, 2
    %v269 = vrot.slane %v142, 2
    %v270 = vsel %vm240, %v268, %v269
    %v271 = vrot.slane %v143, 2
    %v272 = vrot.slane %v144, 2
    %v273 = vsel %vm240, %v271, %v272
    %v274 = vrot.slane %v145, 2
    %v275 = vrot.slane %v146, 2
    %v276 = vsel %vm240, %v274, %v275
    %v277 = vrot.slane %v147, 2
    %v278 = vrot.slane %v148, 2
    %v279 = vsel %vm240, %v277, %v278
    %v280 = vrot.slane %v149, 2
    %v281 = vrot.slane %v150, 2
    %v282 = vsel %vm240, %v280, %v281
    %v283 = vrot.slane %v151, 2
    %v284 = vrot.slane %v152, 2
    %v285 = vsel %vm240, %v283, %v284
    %v286 = vrot.slane %v153, 2
    %v287 = vrot.slane %v154, 2
    %v288 = vsel %vm240, %v286, %v287
    %v293 = vrot.slane %v135, 1
    %v294 = vrot.slane %v136, 1
    %v295 = vsel %vm191, %v293, %v294
    %v296 = vrot.slane %v155, 1
    %v297 = vrot.slane %v156, 1
    %v298 = vsel %vm191, %v296, %v297
    %v299 = vrot.slane %v135, 2
    %v300 = vrot.slane %v136, 2
    %v301 = vsel %vm240, %v299, %v300
    %v302 = vrot.slane %v155, 2
    %v303 = vrot.slane %v156, 2
    %v304 = vsel %vm240, %v302, %v303
    %v309 = vrot.slane %v137, 1
    %v310 = vrot.slane %v138, 1
    %v311 = vsel %vm191, %v309, %v310
    %v312 = vrot.slane %v157, 1
    %v313 = vrot.slane %v158, 1
    %v314 = vsel %vm191, %v312, %v313
    %v315 = vrot.slane %v137, 2
    %v316 = vrot.slane %v138, 2
    %v317 = vsel %vm240, %v315, %v316
    %v318 = vrot.slane %v157, 2
    %v319 = vrot.slane %v158, 2
    %v320 = vsel %vm240, %v318, %v319
    %337 = vrot.lane.b32.xlu0 %v194, 16
    %v338 = vpop.permute.xlu0 %337
    %339 = vrot.lane.b32.xlu0 %v197, 16
    %v340 = vpop.permute.xlu0 %339
    %341 = vrot.lane.b32.xlu0 %v200, 16
    %v342 = vpop.permute.xlu0 %341
    %343 = vrot.lane.b32.xlu0 %v203, 16
    %v344 = vpop.permute.xlu0 %343
    %345 = vrot.lane.b32.xlu0 %v206, 16
    %v346 = vpop.permute.xlu0 %345
    %347 = vrot.lane.b32.xlu0 %v209, 16
    %v348 = vpop.permute.xlu0 %347
    %349 = vrot.lane.b32.xlu0 %v212, 16
    %v350 = vpop.permute.xlu0 %349
    %351 = vrot.lane.b32.xlu0 %v215, 16
    %v352 = vpop.permute.xlu0 %351
    %353 = vrot.lane.b32.xlu0 %v218, 16
    %v354 = vpop.permute.xlu0 %353
    %355 = vrot.lane.b32.xlu0 %v221, 16
    %v356 = vpop.permute.xlu0 %355
    %357 = vrot.lane.b32.xlu0 %v224, 16
    %v358 = vpop.permute.xlu0 %357
    %359 = vrot.lane.b32.xlu0 %v227, 16
    %v360 = vpop.permute.xlu0 %359
    %361 = vrot.lane.b32.xlu0 %v230, 16
    %v362 = vpop.permute.xlu0 %361
    %363 = vrot.lane.b32.xlu0 %v233, 16
    %v364 = vpop.permute.xlu0 %363
    %365 = vrot.lane.b32.xlu0 %v236, 16
    %v366 = vpop.permute.xlu0 %365
    %367 = vrot.lane.b32.xlu0 %v239, 16
    %v368 = vpop.permute.xlu0 %367
    %385 = vrot.lane.b32.xlu0 %v243, 32
    %v386 = vpop.permute.xlu0 %385
    %387 = vrot.lane.b32.xlu0 %v246, 32
    %v388 = vpop.permute.xlu0 %387
    %389 = vrot.lane.b32.xlu0 %v249, 32
    %v390 = vpop.permute.xlu0 %389
    %391 = vrot.lane.b32.xlu0 %v252, 32
    %v392 = vpop.permute.xlu0 %391
    %393 = vrot.lane.b32.xlu0 %v255, 32
    %v394 = vpop.permute.xlu0 %393
    %395 = vrot.lane.b32.xlu0 %v258, 32
    %v396 = vpop.permute.xlu0 %395
    %397 = vrot.lane.b32.xlu0 %v261, 32
    %v398 = vpop.permute.xlu0 %397
    %399 = vrot.lane.b32.xlu0 %v264, 32
    %v400 = vpop.permute.xlu0 %399
    %401 = vrot.lane.b32.xlu0 %v267, 32
    %v402 = vpop.permute.xlu0 %401
    %403 = vrot.lane.b32.xlu0 %v270, 32
    %v404 = vpop.permute.xlu0 %403
    %405 = vrot.lane.b32.xlu0 %v273, 32
    %v406 = vpop.permute.xlu0 %405
    %407 = vrot.lane.b32.xlu0 %v276, 32
    %v408 = vpop.permute.xlu0 %407
    %409 = vrot.lane.b32.xlu0 %v279, 32
    %v410 = vpop.permute.xlu0 %409
    %411 = vrot.lane.b32.xlu0 %v282, 32
    %v412 = vpop.permute.xlu0 %411
    %413 = vrot.lane.b32.xlu0 %v285, 32
    %v414 = vpop.permute.xlu0 %413
    %415 = vrot.lane.b32.xlu0 %v288, 32
    %v416 = vpop.permute.xlu0 %415
    %433 = vrot.lane.b32.xlu0 %v121, 48
    %v434 = vpop.permute.xlu0 %433
    %435 = vrot.lane.b32.xlu0 %v123, 48
    %v436 = vpop.permute.xlu0 %435
    %437 = vrot.lane.b32.xlu0 %v125, 48
    %v438 = vpop.permute.xlu0 %437
    %439 = vrot.lane.b32.xlu0 %v127, 48
    %v440 = vpop.permute.xlu0 %439
    %441 = vrot.lane.b32.xlu0 %v129, 48
    %v442 = vpop.permute.xlu0 %441
    %443 = vrot.lane.b32.xlu0 %v131, 48
    %v444 = vpop.permute.xlu0 %443
    %445 = vrot.lane.b32.xlu0 %v133, 48
    %v446 = vpop.permute.xlu0 %445
    %447 = vrot.lane.b32.xlu0 %v135, 48
    %v448 = vpop.permute.xlu0 %447
    %449 = vrot.lane.b32.xlu0 %v141, 48
    %v450 = vpop.permute.xlu0 %449
    %451 = vrot.lane.b32.xlu0 %v143, 48
    %v452 = vpop.permute.xlu0 %451
    %453 = vrot.lane.b32.xlu0 %v145, 48
    %v454 = vpop.permute.xlu0 %453
    %455 = vrot.lane.b32.xlu0 %v147, 48
    %v456 = vpop.permute.xlu0 %455
    %457 = vrot.lane.b32.xlu0 %v149, 48
    %v458 = vpop.permute.xlu0 %457
    %459 = vrot.lane.b32.xlu0 %v151, 48
    %v460 = vpop.permute.xlu0 %459
    %461 = vrot.lane.b32.xlu0 %v153, 48
    %v462 = vpop.permute.xlu0 %461
    %463 = vrot.lane.b32.xlu0 %v155, 48
    %v464 = vpop.permute.xlu0 %463
    %481 = vrot.lane.b32.xlu0 %v197, 64
    %v482 = vpop.permute.xlu0 %481
    %483 = vrot.lane.b32.xlu0 %v200, 64
    %v484 = vpop.permute.xlu0 %483
    %485 = vrot.lane.b32.xlu0 %v203, 64
    %v486 = vpop.permute.xlu0 %485
    %487 = vrot.lane.b32.xlu0 %v206, 64
    %v488 = vpop.permute.xlu0 %487
    %489 = vrot.lane.b32.xlu0 %v209, 64
    %v490 = vpop.permute.xlu0 %489
    %491 = vrot.lane.b32.xlu0 %v212, 64
    %v492 = vpop.permute.xlu0 %491
    %493 = vrot.lane.b32.xlu0 %v215, 64
    %v494 = vpop.permute.xlu0 %493
    %495 = vrot.lane.b32.xlu0 %v295, 64
    %v496 = vpop.permute.xlu0 %495
    %497 = vrot.lane.b32.xlu0 %v221, 64
    %v498 = vpop.permute.xlu0 %497
    %499 = vrot.lane.b32.xlu0 %v224, 64
    %v500 = vpop.permute.xlu0 %499
    %501 = vrot.lane.b32.xlu0 %v227, 64
    %v502 = vpop.permute.xlu0 %501
    %503 = vrot.lane.b32.xlu0 %v230, 64
    %v504 = vpop.permute.xlu0 %503
    %505 = vrot.lane.b32.xlu0 %v233, 64
    %v506 = vpop.permute.xlu0 %505
    %507 = vrot.lane.b32.xlu0 %v236, 64
    %v508 = vpop.permute.xlu0 %507
    %509 = vrot.lane.b32.xlu0 %v239, 64
    %v510 = vpop.permute.xlu0 %509
    %511 = vrot.lane.b32.xlu0 %v298, 64
    %v512 = vpop.permute.xlu0 %511
    %529 = vrot.lane.b32.xlu0 %v246, 80
    %v530 = vpop.permute.xlu0 %529
    %531 = vrot.lane.b32.xlu0 %v249, 80
    %v532 = vpop.permute.xlu0 %531
    %533 = vrot.lane.b32.xlu0 %v252, 80
    %v534 = vpop.permute.xlu0 %533
    %535 = vrot.lane.b32.xlu0 %v255, 80
    %v536 = vpop.permute.xlu0 %535
    %537 = vrot.lane.b32.xlu0 %v258, 80
    %v538 = vpop.permute.xlu0 %537
    %539 = vrot.lane.b32.xlu0 %v261, 80
    %v540 = vpop.permute.xlu0 %539
    %541 = vrot.lane.b32.xlu0 %v264, 80
    %v542 = vpop.permute.xlu0 %541
    %543 = vrot.lane.b32.xlu0 %v301, 80
    %v544 = vpop.permute.xlu0 %543
    %545 = vrot.lane.b32.xlu0 %v270, 80
    %v546 = vpop.permute.xlu0 %545
    %547 = vrot.lane.b32.xlu0 %v273, 80
    %v548 = vpop.permute.xlu0 %547
    %549 = vrot.lane.b32.xlu0 %v276, 80
    %v550 = vpop.permute.xlu0 %549
    %551 = vrot.lane.b32.xlu0 %v279, 80
    %v552 = vpop.permute.xlu0 %551
    %553 = vrot.lane.b32.xlu0 %v282, 80
    %v554 = vpop.permute.xlu0 %553
    %555 = vrot.lane.b32.xlu0 %v285, 80
    %v556 = vpop.permute.xlu0 %555
    %557 = vrot.lane.b32.xlu0 %v288, 80
    %v558 = vpop.permute.xlu0 %557
    %559 = vrot.lane.b32.xlu0 %v304, 80
    %v560 = vpop.permute.xlu0 %559
    %577 = vrot.lane.b32.xlu0 %v123, 96
    %v578 = vpop.permute.xlu0 %577
    %579 = vrot.lane.b32.xlu0 %v125, 96
    %v580 = vpop.permute.xlu0 %579
    %581 = vrot.lane.b32.xlu0 %v127, 96
    %v582 = vpop.permute.xlu0 %581
    %583 = vrot.lane.b32.xlu0 %v129, 96
    %v584 = vpop.permute.xlu0 %583
    %585 = vrot.lane.b32.xlu0 %v131, 96
    %v586 = vpop.permute.xlu0 %585
    %587 = vrot.lane.b32.xlu0 %v133, 96
    %v588 = vpop.permute.xlu0 %587
    %589 = vrot.lane.b32.xlu0 %v135, 96
    %v590 = vpop.permute.xlu0 %589
    %591 = vrot.lane.b32.xlu0 %v137, 96
    %v592 = vpop.permute.xlu0 %591
    %593 = vrot.lane.b32.xlu0 %v143, 96
    %v594 = vpop.permute.xlu0 %593
    %595 = vrot.lane.b32.xlu0 %v145, 96
    %v596 = vpop.permute.xlu0 %595
    %597 = vrot.lane.b32.xlu0 %v147, 96
    %v598 = vpop.permute.xlu0 %597
    %599 = vrot.lane.b32.xlu0 %v149, 96
    %v600 = vpop.permute.xlu0 %599
    %601 = vrot.lane.b32.xlu0 %v151, 96
    %v602 = vpop.permute.xlu0 %601
    %603 = vrot.lane.b32.xlu0 %v153, 96
    %v604 = vpop.permute.xlu0 %603
    %605 = vrot.lane.b32.xlu0 %v155, 96
    %v606 = vpop.permute.xlu0 %605
    %607 = vrot.lane.b32.xlu0 %v157, 96
    %v608 = vpop.permute.xlu0 %607
    %625 = vrot.lane.b32.xlu0 %v200, 112
    %v626 = vpop.permute.xlu0 %625
    %627 = vrot.lane.b32.xlu0 %v203, 112
    %v628 = vpop.permute.xlu0 %627
    %629 = vrot.lane.b32.xlu0 %v206, 112
    %v630 = vpop.permute.xlu0 %629
    %631 = vrot.lane.b32.xlu0 %v209, 112
    %v632 = vpop.permute.xlu0 %631
    %633 = vrot.lane.b32.xlu0 %v212, 112
    %v634 = vpop.permute.xlu0 %633
    %635 = vrot.lane.b32.xlu0 %v215, 112
    %v636 = vpop.permute.xlu0 %635
    %637 = vrot.lane.b32.xlu0 %v295, 112
    %v638 = vpop.permute.xlu0 %637
    %639 = vrot.lane.b32.xlu0 %v311, 112
    %v640 = vpop.permute.xlu0 %639
    %641 = vrot.lane.b32.xlu0 %v224, 112
    %v642 = vpop.permute.xlu0 %641
    %643 = vrot.lane.b32.xlu0 %v227, 112
    %v644 = vpop.permute.xlu0 %643
    %645 = vrot.lane.b32.xlu0 %v230, 112
    %v646 = vpop.permute.xlu0 %645
    %647 = vrot.lane.b32.xlu0 %v233, 112
    %v648 = vpop.permute.xlu0 %647
    %649 = vrot.lane.b32.xlu0 %v236, 112
    %v650 = vpop.permute.xlu0 %649
    %651 = vrot.lane.b32.xlu0 %v239, 112
    %v652 = vpop.permute.xlu0 %651
    %653 = vrot.lane.b32.xlu0 %v298, 112
    %v654 = vpop.permute.xlu0 %653
    %655 = vrot.lane.b32.xlu0 %v314, 112
    %v656 = vpop.permute.xlu0 %655
    %v673 = vsel %vm34, %v119, %v338
    %v674 = vsel %vm34, %v121, %v340
    %v675 = vsel %vm34, %v123, %v342
    %v676 = vsel %vm34, %v125, %v344
    %v677 = vsel %vm34, %v127, %v346
    %v678 = vsel %vm34, %v129, %v348
    %v679 = vsel %vm34, %v131, %v350
    %v680 = vsel %vm34, %v133, %v352
    %v681 = vsel %vm34, %v139, %v354
    %v682 = vsel %vm34, %v141, %v356
    %v683 = vsel %vm34, %v143, %v358
    %v684 = vsel %vm34, %v145, %v360
    %v685 = vsel %vm34, %v147, %v362
    %v686 = vsel %vm34, %v149, %v364
    %v687 = vsel %vm34, %v151, %v366
    %v688 = vsel %vm34, %v153, %v368
    %vm689 = vcmask 261120
    %v690 = vsel %vm689, %v673, %v386
    %v691 = vsel %vm689, %v674, %v388
    %v692 = vsel %vm689, %v675, %v390
    %v693 = vsel %vm689, %v676, %v392
    %v694 = vsel %vm689, %v677, %v394
    %v695 = vsel %vm689, %v678, %v396
    %v696 = vsel %vm689, %v679, %v398
    %v697 = vsel %vm689, %v680, %v400
    %v698 = vsel %vm689, %v681, %v402
    %v699 = vsel %vm689, %v682, %v404
    %v700 = vsel %vm689, %v683, %v406
    %v701 = vsel %vm689, %v684, %v408
    %v702 = vsel %vm689, %v685, %v410
    %v703 = vsel %vm689, %v686, %v412
    %v704 = vsel %vm689, %v687, %v414
    %v705 = vsel %vm689, %v688, %v416
    %vm706 = vcmask 392192
    %v707 = vsel %vm706, %v690, %v434
    %v708 = vsel %vm706, %v691, %v436
    %v709 = vsel %vm706, %v692, %v438
    %v710 = vsel %vm706, %v693, %v440
    %v711 = vsel %vm706, %v694, %v442
    %v712 = vsel %vm706, %v695, %v444
    %v713 = vsel %vm706, %v696, %v446
    %v714 = vsel %vm706, %v697, %v448
    %v715 = vsel %vm706, %v698, %v450
    %v716 = vsel %vm706, %v699, %v452
    %v717 = vsel %vm706, %v700, %v454
    %v718 = vsel %vm706, %v701, %v456
    %v719 = vsel %vm706, %v702, %v458
    %v720 = vsel %vm706, %v703, %v460
    %v721 = vsel %vm706, %v704, %v462
    %v722 = vsel %vm706, %v705, %v464
    %vm723 = vcmask 523264
    %v724 = vsel %vm723, %v707, %v482
    %v725 = vsel %vm723, %v708, %v484
    %v726 = vsel %vm723, %v709, %v486
    %v727 = vsel %vm723, %v710, %v488
    %v728 = vsel %vm723, %v711, %v490
    %v729 = vsel %vm723, %v712, %v492
    %v730 = vsel %vm723, %v713, %v494
    %v731 = vsel %vm723, %v714, %v496
    %v732 = vsel %vm723, %v715, %v498
    %v733 = vsel %vm723, %v716, %v500
    %v734 = vsel %vm723, %v717, %v502
    %v735 = vsel %vm723, %v718, %v504
    %v736 = vsel %vm723, %v719, %v506
    %v737 = vsel %vm723, %v720, %v508
    %v738 = vsel %vm723, %v721, %v510
    %v739 = vsel %vm723, %v722, %v512
    %vm740 = vcmask 654336
    %v741 = vsel %vm740, %v724, %v530
    %v742 = vsel %vm740, %v725, %v532
    %v743 = vsel %vm740, %v726, %v534
    %v744 = vsel %vm740, %v727, %v536
    %v745 = vsel %vm740, %v728, %v538
    %v746 = vsel %vm740, %v729, %v540
    %v747 = vsel %vm740, %v730, %v542
    %v748 = vsel %vm740, %v731, %v544
    %v749 = vsel %vm740, %v732, %v546
    %v750 = vsel %vm740, %v733, %v548
    %v751 = vsel %vm740, %v734, %v550
    %v752 = vsel %vm740, %v735, %v552
    %v753 = vsel %vm740, %v736, %v554
    %v754 = vsel %vm740, %v737, %v556
    %v755 = vsel %vm740, %v738, %v558
    %v756 = vsel %vm740, %v739, %v560
    %vm757 = vcmask 785408
    %v758 = vsel %vm757, %v741, %v578
    %v759 = vsel %vm757, %v742, %v580
    %v760 = vsel %vm757, %v743, %v582
    %v761 = vsel %vm757, %v744, %v584
    %v762 = vsel %vm757, %v745, %v586
    %v763 = vsel %vm757, %v746, %v588
    %v764 = vsel %vm757, %v747, %v590
    %v765 = vsel %vm757, %v748, %v592
    %v766 = vsel %vm757, %v749, %v594
    %v767 = vsel %vm757, %v750, %v596
    %v768 = vsel %vm757, %v751, %v598
    %v769 = vsel %vm757, %v752, %v600
    %v770 = vsel %vm757, %v753, %v602
    %v771 = vsel %vm757, %v754, %v604
    %v772 = vsel %vm757, %v755, %v606
    %v773 = vsel %vm757, %v756, %v608
    %vm774 = vcmask 916480
    %v775 = vsel %vm774, %v758, %v626
    %v776 = vsel %vm774, %v759, %v628
    %v777 = vsel %vm774, %v760, %v630
    %v778 = vsel %vm774, %v761, %v632
    %v779 = vsel %vm774, %v762, %v634
    %v780 = vsel %vm774, %v763, %v636
    %v781 = vsel %vm774, %v764, %v638
    %v782 = vsel %vm774, %v765, %v640
    %v783 = vsel %vm774, %v766, %v642
    %v784 = vsel %vm774, %v767, %v644
    %v785 = vsel %vm774, %v768, %v646
    %v786 = vsel %vm774, %v769, %v648
    %v787 = vsel %vm774, %v770, %v650
    %v788 = vsel %vm774, %v771, %v652
    %v789 = vsel %vm774, %v772, %v654
    %v790 = vsel %vm774, %v773, %v656
    %v791 = vpack.c.bf16 %v776, %v775
    %v792 = vpack.c.bf16 %v252, %v249
    %v793 = vpack.c.bf16 %v778, %v777
    %v794 = vpack.c.bf16 %v258, %v255
    %v795 = vpack.c.bf16 %v780, %v779
    %v796 = vpack.c.bf16 %v264, %v261
    %v797 = vpack.c.bf16 %v782, %v781
    %v798 = vpack.c.bf16 %v317, %v301
    %v799 = vpack.c.bf16 %v784, %v783
    %v800 = vpack.c.bf16 %v276, %v273
    %v801 = vpack.c.bf16 %v786, %v785
    %v802 = vpack.c.bf16 %v282, %v279
    %v803 = vpack.c.bf16 %v788, %v787
    %v804 = vpack.c.bf16 %v288, %v285
    %v805 = vpack.c.bf16 %v790, %v789
    %v806 = vpack.c.bf16 %v320, %v304
    %v807 = vld [vmem:[%s1] sm:$0xf]
    %v808 = vld [vmem:[%s1 + $0x4] sm:$0xf]
    %v809 = vld [vmem:[%s1 + $0x8] sm:$0xf]
    %v810 = vld [vmem:[%s1 + $0xc] sm:$0xf]
    %v811 = vld [vmem:[%s1 + $0x10] sm:$0xf]
    %v812 = vld [vmem:[%s1 + $0x14] sm:$0xf]
    %v813 = vld [vmem:[%s1 + $0x18] sm:$0xf]
    %v814 = vld [vmem:[%s1 + $0x1c] sm:$0xf]
    %v815 = vld [vmem:[%s1 + $0x20] sm:$0xf]
    %v816 = vld [vmem:[%s1 + $0x24] sm:$0xf]
    %v817 = vld [vmem:[%s1 + $0x28] sm:$0xf]
    %v818 = vld [vmem:[%s1 + $0x2c] sm:$0xf]
    %v819 = vld [vmem:[%s1 + $0x30] sm:$0xf]
    %v820 = vld [vmem:[%s1 + $0x34] sm:$0xf]
    %v821 = vld [vmem:[%s1 + $0x38] sm:$0xf]
    %v822 = vld [vmem:[%s1 + $0x3c] sm:$0xf]
    %v823 = vld [vmem:[%s1 + $0x40] sm:$0xf]
    %v824 = vld [vmem:[%s1 + $0x44] sm:$0xf]
    %v825 = vld [vmem:[%s2] sm:$0x1]
    %v827 = vlaneseq
    %v828 = vshrl.u32 %v827, 7
    %v829 = vsub.s32 0, %v828
    %v830 = vrot.slane %v825, %v829
    %v850 = vunpack.c.l.b16 %v807
    %v851 = vunpack.c.l.b16 %v808
    %v852 = vunpack.c.l.b16 %v809
    %v853 = vunpack.c.l.b16 %v810
    %v854 = vunpack.c.l.b16 %v811
    %v855 = vunpack.c.l.b16 %v812
    %v856 = vunpack.c.l.b16 %v813
    %v857 = vunpack.c.l.b16 %v814
    %v858 = vunpack.c.l.b16 %v815
    %v859 = vunpack.c.l.b16 %v816
    %v860 = vunpack.c.l.b16 %v817
    %v861 = vunpack.c.l.b16 %v818
    %v862 = vunpack.c.l.b16 %v819
    %v863 = vunpack.c.l.b16 %v820
    %v864 = vunpack.c.l.b16 %v821
    %v865 = vunpack.c.l.b16 %v822
    %v866 = vunpack.c.l.b16 %v823
    %v867 = vunpack.c.l.b16 %v824
    %v868 = vpack.c.b16 %v851, %v850
    %v869 = vpack.c.b16 %v853, %v852
    %v870 = vpack.c.b16 %v855, %v854
    %v871 = vpack.c.b16 %v857, %v856
    %v872 = vpack.c.b16 %v859, %v858
    %v873 = vpack.c.b16 %v861, %v860
    %v874 = vpack.c.b16 %v863, %v862
    %v875 = vpack.c.b16 %v865, %v864
    %v876 = vpack.c.b16 %v867, %v866
    %v887 = vsel %vm34, %v792, 0
    %v890 = vsel %vm34, %v794, 0
    %v893 = vsel %vm34, %v796, 0
    %v896 = vsel %vm34, %v798, 0
    %v899 = vsel %vm34, %v800, 0
    %v902 = vsel %vm34, %v802, 0
    %v905 = vsel %vm34, %v804, 0
    %v908 = vsel %vm34, %v806, 0
    %910 = vmatprep.subr.bf16.mxu0 0
    %911 = vmatpush1.bf16.msra.mxu0 %v875
    %912 = vmatprep.subr.bf16.mxu0 0
    %913 = vmatpush1.bf16.msra.mxu0 %v874
    %914 = vmatprep.subr.bf16.mxu0 0
    %915 = vmatpush1.bf16.msra.mxu0 %v873
    %916 = vmatprep.subr.bf16.mxu0 0
    %917 = vmatpush1.bf16.msra.mxu0 %v872
    %918 = vmatprep.subr.bf16.mxu0 0
    %919 = vmatpush1.bf16.msra.mxu0 %v871
    %920 = vmatprep.subr.bf16.mxu0 0
    %921 = vmatpush1.bf16.msra.mxu0 %v870
    %922 = vmatprep.subr.bf16.mxu0 0
    %923 = vmatpush1.bf16.msra.mxu0 %v869
    %924 = vmatprep.subr.bf16.mxu0 0
    %925 = vmatpush1.bf16.msra.mxu0 %v868
    %926 = vmatprep.subr.bf16.mxu0 0
    %927 = vmatpush2.bf16.msra.mxu0 0
    %928 = vmatprep.subr.bf16.mxu0 0
    %929 = vmatpush2.bf16.msra.mxu0 0
    %930 = vmatprep.subr.bf16.mxu0 0
    %931 = vmatpush2.bf16.msra.mxu0 0
    %932 = vmatprep.subr.bf16.mxu0 0
    %933 = vmatpush2.bf16.msra.mxu0 0
    %934 = vmatprep.subr.bf16.mxu0 0
    %935 = vmatpush2.bf16.msra.mxu0 0
    %936 = vmatprep.subr.bf16.mxu0 0
    %937 = vmatpush2.bf16.msra.mxu0 0
    %938 = vmatprep.subr.bf16.mxu0 0
    %939 = vmatpush2.bf16.msra.mxu0 0
    %940 = vmatprep.subr.bf16.mxu0 0
    %941 = vmatpush2.bf16.msra.mxu0 %v876
    %942 = vmatprep.mubr.bf16.mxu0 %v887
    %943 = vmatmul.mubr.bf16.gmra.mxu0 %v791
    %v944 = vpop.f32.mrf.mxu0
    %v945 = vadd.f32 %v830, %v944
    %v946 = vpop.f32.mrf.mxu0
    %v947 = vpop.f32.mrf.mxu0
    %v948 = vadd.f32 %v830, %v947
    %v949 = vpop.f32.mrf.mxu0
    %950 = vmatprep.mubr.bf16.mxu0 %v890
    %951 = vmatmul.mubr.bf16.gmra.mxu0 %v793
    %v952 = vpop.f32.mrf.mxu0
    %v953 = vadd.f32 %v830, %v952
    %v954 = vpop.f32.mrf.mxu0
    %v955 = vpop.f32.mrf.mxu0
    %v956 = vadd.f32 %v830, %v955
    %v957 = vpop.f32.mrf.mxu0
    %958 = vmatprep.mubr.bf16.mxu0 %v893
    %959 = vmatmul.mubr.bf16.gmra.mxu0 %v795
    %v960 = vpop.f32.mrf.mxu0
    %v961 = vadd.f32 %v830, %v960
    %v962 = vpop.f32.mrf.mxu0
    %v963 = vpop.f32.mrf.mxu0
    %v964 = vadd.f32 %v830, %v963
    %v965 = vpop.f32.mrf.mxu0
    %966 = vmatprep.mubr.bf16.mxu0 %v896
    %967 = vmatmul.mubr.bf16.gmra.mxu0 %v797
    %v968 = vpop.f32.mrf.mxu0
    %v969 = vadd.f32 %v830, %v968
    %v970 = vpop.f32.mrf.mxu0
    %v971 = vpop.f32.mrf.mxu0
    %v972 = vadd.f32 %v830, %v971
    %v973 = vpop.f32.mrf.mxu0
    %974 = vmatprep.mubr.bf16.mxu0 %v899
    %975 = vmatmul.mubr.bf16.gmra.mxu0 %v799
    %v976 = vpop.f32.mrf.mxu0
    %v977 = vadd.f32 %v830, %v976
    %v978 = vpop.f32.mrf.mxu0
    %v979 = vpop.f32.mrf.mxu0
    %v980 = vadd.f32 %v830, %v979
    %v981 = vpop.f32.mrf.mxu0
    %982 = vmatprep.mubr.bf16.mxu0 %v902
    %983 = vmatmul.mubr.bf16.gmra.mxu0 %v801
    %v984 = vpop.f32.mrf.mxu0
    %v985 = vadd.f32 %v830, %v984
    %v986 = vpop.f32.mrf.mxu0
    %v987 = vpop.f32.mrf.mxu0
    %v988 = vadd.f32 %v830, %v987
    %v989 = vpop.f32.mrf.mxu0
    %990 = vmatprep.mubr.bf16.mxu0 %v905
    %991 = vmatmul.mubr.bf16.gmra.mxu0 %v803
    %v992 = vpop.f32.mrf.mxu0
    %v993 = vadd.f32 %v830, %v992
    %v994 = vpop.f32.mrf.mxu0
    %v995 = vpop.f32.mrf.mxu0
    %v996 = vadd.f32 %v830, %v995
    %v997 = vpop.f32.mrf.mxu0
    %998 = vmatprep.mubr.bf16.mxu0 %v908
    %999 = vmatmul.mubr.bf16.gmra.mxu0 %v805
    %v1000 = vpop.f32.mrf.mxu0
    %v1001 = vadd.f32 %v830, %v1000
    %v1002 = vpop.f32.mrf.mxu0
    %v1003 = vpop.f32.mrf.mxu0
    %v1004 = vadd.f32 %v830, %v1003
    %v1005 = vpop.f32.mrf.mxu0
    %1006 = vdwg.mxu0
    %v1007 = vmax.f32 %v945, 0.0
    %v1008 = vmax.f32 %v948, 0.0
    %v1009 = vmax.f32 %v953, 0.0
    %v1010 = vmax.f32 %v956, 0.0
    %v1011 = vmax.f32 %v961, 0.0
    %v1012 = vmax.f32 %v964, 0.0
    %v1013 = vmax.f32 %v969, 0.0
    %v1014 = vmax.f32 %v972, 0.0
    %v1015 = vmax.f32 %v977, 0.0
    %v1016 = vmax.f32 %v980, 0.0
    %v1017 = vmax.f32 %v985, 0.0
    %v1018 = vmax.f32 %v988, 0.0
    %v1019 = vmax.f32 %v993, 0.0
    %v1020 = vmax.f32 %v996, 0.0
    %v1021 = vmax.f32 %v1001, 0.0
    %v1022 = vmax.f32 %v1004, 0.0
    %1023 = vst.msk [vmem:[%s102 + $0x1] sm:$0xff] %vm34, %v1007
    %1024 = vst.msk [vmem:[%s102 + $0x11] sm:$0xff] %vm34, %v1008
    %1025 = vst.msk [vmem:[%s102 + $0x21] sm:$0xff] %vm34, %v1009
    %1026 = vst.msk [vmem:[%s102 + $0x31] sm:$0xff] %vm34, %v1010
    %1027 = vst.msk [vmem:[%s102 + $0x41] sm:$0xff] %vm34, %v1011
    %1028 = vst.msk [vmem:[%s102 + $0x51] sm:$0xff] %vm34, %v1012
    %1029 = vst.msk [vmem:[%s102 + $0x61] sm:$0xff] %vm34, %v1013
    %1030 = vst.msk [vmem:[%s102 + $0x71] sm:$0xff] %vm34, %v1014
    %1031 = vst.msk [vmem:[%s102 + $0xa1] sm:$0xff] %vm34, %v1015
    %1032 = vst.msk [vmem:[%s102 + $0xb1] sm:$0xff] %vm34, %v1016
    %1033 = vst.msk [vmem:[%s102 + $0xc1] sm:$0xff] %vm34, %v1017
    %1034 = vst.msk [vmem:[%s102 + $0xd1] sm:$0xff] %vm34, %v1018
    %1035 = vst.msk [vmem:[%s102 + $0xe1] sm:$0xff] %vm34, %v1019
    %1036 = vst.msk [vmem:[%s102 + $0xf1] sm:$0xff] %vm34, %v1020
    %1037 = vst.msk [vmem:[%s102 + $0x101] sm:$0xff] %vm34, %v1021
    %1038 = vst.msk [vmem:[%s102 + $0x111] sm:$0xff] %vm34, %v1022
    %v1039 = vld [vmem:[#allocation2] sm:$0xff]
    %v1040 = vld [vmem:[#allocation2 + $0x8] sm:$0x3]
    %v1041 = vld [vmem:[#allocation2 + $0x10] sm:$0xff]
    %v1042 = vld [vmem:[#allocation2 + $0x18] sm:$0x3]
    %v1043 = vld [vmem:[#allocation2 + $0x20] sm:$0xff]
    %v1044 = vld [vmem:[#allocation2 + $0x28] sm:$0x3]
    %v1045 = vld [vmem:[#allocation2 + $0x30] sm:$0xff]
    %v1046 = vld [vmem:[#allocation2 + $0x38] sm:$0x3]
    %v1047 = vld [vmem:[#allocation2 + $0x40] sm:$0xff]
    %v1048 = vld [vmem:[#allocation2 + $0x48] sm:$0x3]
    %v1049 = vld [vmem:[#allocation2 + $0x50] sm:$0xff]
    %v1050 = vld [vmem:[#allocation2 + $0x58] sm:$0x3]
    %v1051 = vld [vmem:[#allocation2 + $0x60] sm:$0xff]
    %v1052 = vld [vmem:[#allocation2 + $0x68] sm:$0x3]
    %v1053 = vld [vmem:[#allocation2 + $0x70] sm:$0xff]
    %v1054 = vld [vmem:[#allocation2 + $0x78] sm:$0x3]
    %v1055 = vld [vmem:[#allocation2 + $0x80] sm:$0xff]
    %v1056 = vld [vmem:[#allocation2 + $0x88] sm:$0x3]
    %v1057 = vld [vmem:[#allocation2 + $0x90] sm:$0xff]
    %v1058 = vld [vmem:[#allocation2 + $0x98] sm:$0x3]
    %v1059 = vld [vmem:[#allocation2 + $0xa0] sm:$0xff]
    %v1060 = vld [vmem:[#allocation2 + $0xa8] sm:$0x3]
    %v1061 = vld [vmem:[#allocation2 + $0xb0] sm:$0xff]
    %v1062 = vld [vmem:[#allocation2 + $0xb8] sm:$0x3]
    %v1063 = vld [vmem:[#allocation2 + $0xc0] sm:$0xff]
    %v1064 = vld [vmem:[#allocation2 + $0xc8] sm:$0x3]
    %v1065 = vld [vmem:[#allocation2 + $0xd0] sm:$0xff]
    %v1066 = vld [vmem:[#allocation2 + $0xd8] sm:$0x3]
    %v1067 = vld [vmem:[#allocation2 + $0xe0] sm:$0xff]
    %v1068 = vld [vmem:[#allocation2 + $0xe8] sm:$0x3]
    %v1069 = vld [vmem:[#allocation2 + $0xf0] sm:$0xff]
    %v1070 = vld [vmem:[#allocation2 + $0xf8] sm:$0x3]
    %v1071 = vld [vmem:[#allocation2 + $0x100] sm:$0xff]
    %v1072 = vld [vmem:[#allocation2 + $0x108] sm:$0x3]
    %v1073 = vld [vmem:[#allocation2 + $0x110] sm:$0xff]
    %v1074 = vld [vmem:[#allocation2 + $0x118] sm:$0x3]
    %v1075 = vld [vmem:[#allocation2 + $0x120] sm:$0xff]
    %v1076 = vld [vmem:[#allocation2 + $0x128] sm:$0x3]
    %v1077 = vld [vmem:[#allocation2 + $0x130] sm:$0xff]
    %v1078 = vld [vmem:[#allocation2 + $0x138] sm:$0x3]
    %v1111 = vrot.slane %v1039, 1
    %v1112 = vrot.slane %v1040, 1
    %v1113 = vsel %vm191, %v1111, %v1112
    %v1114 = vrot.slane %v1041, 1
    %v1115 = vrot.slane %v1042, 1
    %v1116 = vsel %vm191, %v1114, %v1115
    %v1117 = vrot.slane %v1043, 1
    %v1118 = vrot.slane %v1044, 1
    %v1119 = vsel %vm191, %v1117, %v1118
    %v1120 = vrot.slane %v1045, 1
    %v1121 = vrot.slane %v1046, 1
    %v1122 = vsel %vm191, %v1120, %v1121
    %v1123 = vrot.slane %v1047, 1
    %v1124 = vrot.slane %v1048, 1
    %v1125 = vsel %vm191, %v1123, %v1124
    %v1126 = vrot.slane %v1049, 1
    %v1127 = vrot.slane %v1050, 1
    %v1128 = vsel %vm191, %v1126, %v1127
    %v1129 = vrot.slane %v1051, 1
    %v1130 = vrot.slane %v1052, 1
    %v1131 = vsel %vm191, %v1129, %v1130
    %v1132 = vrot.slane %v1053, 1
    %v1133 = vrot.slane %v1054, 1
    %v1134 = vsel %vm191, %v1132, %v1133
    %v1135 = vrot.slane %v1059, 1
    %v1136 = vrot.slane %v1060, 1
    %v1137 = vsel %vm191, %v1135, %v1136
    %v1138 = vrot.slane %v1061, 1
    %v1139 = vrot.slane %v1062, 1
    %v1140 = vsel %vm191, %v1138, %v1139
    %v1141 = vrot.slane %v1063, 1
    %v1142 = vrot.slane %v1064, 1
    %v1143 = vsel %vm191, %v1141, %v1142
    %v1144 = vrot.slane %v1065, 1
    %v1145 = vrot.slane %v1066, 1
    %v1146 = vsel %vm191, %v1144, %v1145
    %v1147 = vrot.slane %v1067, 1
    %v1148 = vrot.slane %v1068, 1
    %v1149 = vsel %vm191, %v1147, %v1148
    %v1150 = vrot.slane %v1069, 1
    %v1151 = vrot.slane %v1070, 1
    %v1152 = vsel %vm191, %v1150, %v1151
    %v1153 = vrot.slane %v1071, 1
    %v1154 = vrot.slane %v1072, 1
    %v1155 = vsel %vm191, %v1153, %v1154
    %v1156 = vrot.slane %v1073, 1
    %v1157 = vrot.slane %v1074, 1
    %v1158 = vsel %vm191, %v1156, %v1157
    %v1159 = vrot.slane %v1039, 2
    %v1160 = vrot.slane %v1040, 2
    %v1161 = vsel %vm240, %v1159, %v1160
    %v1162 = vrot.slane %v1041, 2
    %v1163 = vrot.slane %v1042, 2
    %v1164 = vsel %vm240, %v1162, %v1163
    %v1165 = vrot.slane %v1043, 2
    %v1166 = vrot.slane %v1044, 2
    %v1167 = vsel %vm240, %v1165, %v1166
    %v1168 = vrot.slane %v1045, 2
    %v1169 = vrot.slane %v1046, 2
    %v1170 = vsel %vm240, %v1168, %v1169
    %v1171 = vrot.slane %v1047, 2
    %v1172 = vrot.slane %v1048, 2
    %v1173 = vsel %vm240, %v1171, %v1172
    %v1174 = vrot.slane %v1049, 2
    %v1175 = vrot.slane %v1050, 2
    %v1176 = vsel %vm240, %v1174, %v1175
    %v1177 = vrot.slane %v1051, 2
    %v1178 = vrot.slane %v1052, 2
    %v1179 = vsel %vm240, %v1177, %v1178
    %v1180 = vrot.slane %v1053, 2
    %v1181 = vrot.slane %v1054, 2
    %v1182 = vsel %vm240, %v1180, %v1181
    %v1183 = vrot.slane %v1059, 2
    %v1184 = vrot.slane %v1060, 2
    %v1185 = vsel %vm240, %v1183, %v1184
    %v1186 = vrot.slane %v1061, 2
    %v1187 = vrot.slane %v1062, 2
    %v1188 = vsel %vm240, %v1186, %v1187
    %v1189 = vrot.slane %v1063, 2
    %v1190 = vrot.slane %v1064, 2
    %v1191 = vsel %vm240, %v1189, %v1190
    %v1192 = vrot.slane %v1065, 2
    %v1193 = vrot.slane %v1066, 2
    %v1194 = vsel %vm240, %v1192, %v1193
    %v1195 = vrot.slane %v1067, 2
    %v1196 = vrot.slane %v1068, 2
    %v1197 = vsel %vm240, %v1195, %v1196
    %v1198 = vrot.slane %v1069, 2
    %v1199 = vrot.slane %v1070, 2
    %v1200 = vsel %vm240, %v1198, %v1199
    %v1201 = vrot.slane %v1071, 2
    %v1202 = vrot.slane %v1072, 2
    %v1203 = vsel %vm240, %v1201, %v1202
    %v1204 = vrot.slane %v1073, 2
    %v1205 = vrot.slane %v1074, 2
    %v1206 = vsel %vm240, %v1204, %v1205
    %v1211 = vrot.slane %v1055, 1
    %v1212 = vrot.slane %v1056, 1
    %v1213 = vsel %vm191, %v1211, %v1212
    %v1214 = vrot.slane %v1075, 1
    %v1215 = vrot.slane %v1076, 1
    %v1216 = vsel %vm191, %v1214, %v1215
    %v1217 = vrot.slane %v1055, 2
    %v1218 = vrot.slane %v1056, 2
    %v1219 = vsel %vm240, %v1217, %v1218
    %v1220 = vrot.slane %v1075, 2
    %v1221 = vrot.slane %v1076, 2
    %v1222 = vsel %vm240, %v1220, %v1221
    %v1227 = vrot.slane %v1057, 1
    %v1228 = vrot.slane %v1058, 1
    %v1229 = vsel %vm191, %v1227, %v1228
    %v1230 = vrot.slane %v1077, 1
    %v1231 = vrot.slane %v1078, 1
    %v1232 = vsel %vm191, %v1230, %v1231
    %v1233 = vrot.slane %v1057, 2
    %v1234 = vrot.slane %v1058, 2
    %v1235 = vsel %vm240, %v1233, %v1234
    %v1236 = vrot.slane %v1077, 2
    %v1237 = vrot.slane %v1078, 2
    %v1238 = vsel %vm240, %v1236, %v1237
    %1255 = vrot.lane.b32.xlu0 %v1113, 16
    %v1256 = vpop.permute.xlu0 %1255
    %1257 = vrot.lane.b32.xlu0 %v1116, 16
    %v1258 = vpop.permute.xlu0 %1257
    %1259 = vrot.lane.b32.xlu0 %v1119, 16
    %v1260 = vpop.permute.xlu0 %1259
    %1261 = vrot.lane.b32.xlu0 %v1122, 16
    %v1262 = vpop.permute.xlu0 %1261
    %1263 = vrot.lane.b32.xlu0 %v1125, 16
    %v1264 = vpop.permute.xlu0 %1263
    %1265 = vrot.lane.b32.xlu0 %v1128, 16
    %v1266 = vpop.permute.xlu0 %1265
    %1267 = vrot.lane.b32.xlu0 %v1131, 16
    %v1268 = vpop.permute.xlu0 %1267
    %1269 = vrot.lane.b32.xlu0 %v1134, 16
    %v1270 = vpop.permute.xlu0 %1269
    %1271 = vrot.lane.b32.xlu0 %v1137, 16
    %v1272 = vpop.permute.xlu0 %1271
    %1273 = vrot.lane.b32.xlu0 %v1140, 16
    %v1274 = vpop.permute.xlu0 %1273
    %1275 = vrot.lane.b32.xlu0 %v1143, 16
    %v1276 = vpop.permute.xlu0 %1275
    %1277 = vrot.lane.b32.xlu0 %v1146, 16
    %v1278 = vpop.permute.xlu0 %1277
    %1279 = vrot.lane.b32.xlu0 %v1149, 16
    %v1280 = vpop.permute.xlu0 %1279
    %1281 = vrot.lane.b32.xlu0 %v1152, 16
    %v1282 = vpop.permute.xlu0 %1281
    %1283 = vrot.lane.b32.xlu0 %v1155, 16
    %v1284 = vpop.permute.xlu0 %1283
    %1285 = vrot.lane.b32.xlu0 %v1158, 16
    %v1286 = vpop.permute.xlu0 %1285
    %1303 = vrot.lane.b32.xlu0 %v1161, 32
    %v1304 = vpop.permute.xlu0 %1303
    %1305 = vrot.lane.b32.xlu0 %v1164, 32
    %v1306 = vpop.permute.xlu0 %1305
    %1307 = vrot.lane.b32.xlu0 %v1167, 32
    %v1308 = vpop.permute.xlu0 %1307
    %1309 = vrot.lane.b32.xlu0 %v1170, 32
    %v1310 = vpop.permute.xlu0 %1309
    %1311 = vrot.lane.b32.xlu0 %v1173, 32
    %v1312 = vpop.permute.xlu0 %1311
    %1313 = vrot.lane.b32.xlu0 %v1176, 32
    %v1314 = vpop.permute.xlu0 %1313
    %1315 = vrot.lane.b32.xlu0 %v1179, 32
    %v1316 = vpop.permute.xlu0 %1315
    %1317 = vrot.lane.b32.xlu0 %v1182, 32
    %v1318 = vpop.permute.xlu0 %1317
    %1319 = vrot.lane.b32.xlu0 %v1185, 32
    %v1320 = vpop.permute.xlu0 %1319
    %1321 = vrot.lane.b32.xlu0 %v1188, 32
    %v1322 = vpop.permute.xlu0 %1321
    %1323 = vrot.lane.b32.xlu0 %v1191, 32
    %v1324 = vpop.permute.xlu0 %1323
    %1325 = vrot.lane.b32.xlu0 %v1194, 32
    %v1326 = vpop.permute.xlu0 %1325
    %1327 = vrot.lane.b32.xlu0 %v1197, 32
    %v1328 = vpop.permute.xlu0 %1327
    %1329 = vrot.lane.b32.xlu0 %v1200, 32
    %v1330 = vpop.permute.xlu0 %1329
    %1331 = vrot.lane.b32.xlu0 %v1203, 32
    %v1332 = vpop.permute.xlu0 %1331
    %1333 = vrot.lane.b32.xlu0 %v1206, 32
    %v1334 = vpop.permute.xlu0 %1333
    %1351 = vrot.lane.b32.xlu0 %v1041, 48
    %v1352 = vpop.permute.xlu0 %1351
    %1353 = vrot.lane.b32.xlu0 %v1043, 48
    %v1354 = vpop.permute.xlu0 %1353
    %1355 = vrot.lane.b32.xlu0 %v1045, 48
    %v1356 = vpop.permute.xlu0 %1355
    %1357 = vrot.lane.b32.xlu0 %v1047, 48
    %v1358 = vpop.permute.xlu0 %1357
    %1359 = vrot.lane.b32.xlu0 %v1049, 48
    %v1360 = vpop.permute.xlu0 %1359
    %1361 = vrot.lane.b32.xlu0 %v1051, 48
    %v1362 = vpop.permute.xlu0 %1361
    %1363 = vrot.lane.b32.xlu0 %v1053, 48
    %v1364 = vpop.permute.xlu0 %1363
    %1365 = vrot.lane.b32.xlu0 %v1055, 48
    %v1366 = vpop.permute.xlu0 %1365
    %1367 = vrot.lane.b32.xlu0 %v1061, 48
    %v1368 = vpop.permute.xlu0 %1367
    %1369 = vrot.lane.b32.xlu0 %v1063, 48
    %v1370 = vpop.permute.xlu0 %1369
    %1371 = vrot.lane.b32.xlu0 %v1065, 48
    %v1372 = vpop.permute.xlu0 %1371
    %1373 = vrot.lane.b32.xlu0 %v1067, 48
    %v1374 = vpop.permute.xlu0 %1373
    %1375 = vrot.lane.b32.xlu0 %v1069, 48
    %v1376 = vpop.permute.xlu0 %1375
    %1377 = vrot.lane.b32.xlu0 %v1071, 48
    %v1378 = vpop.permute.xlu0 %1377
    %1379 = vrot.lane.b32.xlu0 %v1073, 48
    %v1380 = vpop.permute.xlu0 %1379
    %1381 = vrot.lane.b32.xlu0 %v1075, 48
    %v1382 = vpop.permute.xlu0 %1381
    %1399 = vrot.lane.b32.xlu0 %v1116, 64
    %v1400 = vpop.permute.xlu0 %1399
    %1401 = vrot.lane.b32.xlu0 %v1119, 64
    %v1402 = vpop.permute.xlu0 %1401
    %1403 = vrot.lane.b32.xlu0 %v1122, 64
    %v1404 = vpop.permute.xlu0 %1403
    %1405 = vrot.lane.b32.xlu0 %v1125, 64
    %v1406 = vpop.permute.xlu0 %1405
    %1407 = vrot.lane.b32.xlu0 %v1128, 64
    %v1408 = vpop.permute.xlu0 %1407
    %1409 = vrot.lane.b32.xlu0 %v1131, 64
    %v1410 = vpop.permute.xlu0 %1409
    %1411 = vrot.lane.b32.xlu0 %v1134, 64
    %v1412 = vpop.permute.xlu0 %1411
    %1413 = vrot.lane.b32.xlu0 %v1213, 64
    %v1414 = vpop.permute.xlu0 %1413
    %1415 = vrot.lane.b32.xlu0 %v1140, 64
    %v1416 = vpop.permute.xlu0 %1415
    %1417 = vrot.lane.b32.xlu0 %v1143, 64
    %v1418 = vpop.permute.xlu0 %1417
    %1419 = vrot.lane.b32.xlu0 %v1146, 64
    %v1420 = vpop.permute.xlu0 %1419
    %1421 = vrot.lane.b32.xlu0 %v1149, 64
    %v1422 = vpop.permute.xlu0 %1421
    %1423 = vrot.lane.b32.xlu0 %v1152, 64
    %v1424 = vpop.permute.xlu0 %1423
    %1425 = vrot.lane.b32.xlu0 %v1155, 64
    %v1426 = vpop.permute.xlu0 %1425
    %1427 = vrot.lane.b32.xlu0 %v1158, 64
    %v1428 = vpop.permute.xlu0 %1427
    %1429 = vrot.lane.b32.xlu0 %v1216, 64
    %v1430 = vpop.permute.xlu0 %1429
    %1447 = vrot.lane.b32.xlu0 %v1164, 80
    %v1448 = vpop.permute.xlu0 %1447
    %1449 = vrot.lane.b32.xlu0 %v1167, 80
    %v1450 = vpop.permute.xlu0 %1449
    %1451 = vrot.lane.b32.xlu0 %v1170, 80
    %v1452 = vpop.permute.xlu0 %1451
    %1453 = vrot.lane.b32.xlu0 %v1173, 80
    %v1454 = vpop.permute.xlu0 %1453
    %1455 = vrot.lane.b32.xlu0 %v1176, 80
    %v1456 = vpop.permute.xlu0 %1455
    %1457 = vrot.lane.b32.xlu0 %v1179, 80
    %v1458 = vpop.permute.xlu0 %1457
    %1459 = vrot.lane.b32.xlu0 %v1182, 80
    %v1460 = vpop.permute.xlu0 %1459
    %1461 = vrot.lane.b32.xlu0 %v1219, 80
    %v1462 = vpop.permute.xlu0 %1461
    %1463 = vrot.lane.b32.xlu0 %v1188, 80
    %v1464 = vpop.permute.xlu0 %1463
    %1465 = vrot.lane.b32.xlu0 %v1191, 80
    %v1466 = vpop.permute.xlu0 %1465
    %1467 = vrot.lane.b32.xlu0 %v1194, 80
    %v1468 = vpop.permute.xlu0 %1467
    %1469 = vrot.lane.b32.xlu0 %v1197, 80
    %v1470 = vpop.permute.xlu0 %1469
    %1471 = vrot.lane.b32.xlu0 %v1200, 80
    %v1472 = vpop.permute.xlu0 %1471
    %1473 = vrot.lane.b32.xlu0 %v1203, 80
    %v1474 = vpop.permute.xlu0 %1473
    %1475 = vrot.lane.b32.xlu0 %v1206, 80
    %v1476 = vpop.permute.xlu0 %1475
    %1477 = vrot.lane.b32.xlu0 %v1222, 80
    %v1478 = vpop.permute.xlu0 %1477
    %1495 = vrot.lane.b32.xlu0 %v1043, 96
    %v1496 = vpop.permute.xlu0 %1495
    %1497 = vrot.lane.b32.xlu0 %v1045, 96
    %v1498 = vpop.permute.xlu0 %1497
    %1499 = vrot.lane.b32.xlu0 %v1047, 96
    %v1500 = vpop.permute.xlu0 %1499
    %1501 = vrot.lane.b32.xlu0 %v1049, 96
    %v1502 = vpop.permute.xlu0 %1501
    %1503 = vrot.lane.b32.xlu0 %v1051, 96
    %v1504 = vpop.permute.xlu0 %1503
    %1505 = vrot.lane.b32.xlu0 %v1053, 96
    %v1506 = vpop.permute.xlu0 %1505
    %1507 = vrot.lane.b32.xlu0 %v1055, 96
    %v1508 = vpop.permute.xlu0 %1507
    %1509 = vrot.lane.b32.xlu0 %v1057, 96
    %v1510 = vpop.permute.xlu0 %1509
    %1511 = vrot.lane.b32.xlu0 %v1063, 96
    %v1512 = vpop.permute.xlu0 %1511
    %1513 = vrot.lane.b32.xlu0 %v1065, 96
    %v1514 = vpop.permute.xlu0 %1513
    %1515 = vrot.lane.b32.xlu0 %v1067, 96
    %v1516 = vpop.permute.xlu0 %1515
    %1517 = vrot.lane.b32.xlu0 %v1069, 96
    %v1518 = vpop.permute.xlu0 %1517
    %1519 = vrot.lane.b32.xlu0 %v1071, 96
    %v1520 = vpop.permute.xlu0 %1519
    %1521 = vrot.lane.b32.xlu0 %v1073, 96
    %v1522 = vpop.permute.xlu0 %1521
    %1523 = vrot.lane.b32.xlu0 %v1075, 96
    %v1524 = vpop.permute.xlu0 %1523
    %1525 = vrot.lane.b32.xlu0 %v1077, 96
    %v1526 = vpop.permute.xlu0 %1525
    %1543 = vrot.lane.b32.xlu0 %v1119, 112
    %v1544 = vpop.permute.xlu0 %1543
    %1545 = vrot.lane.b32.xlu0 %v1122, 112
    %v1546 = vpop.permute.xlu0 %1545
    %1547 = vrot.lane.b32.xlu0 %v1125, 112
    %v1548 = vpop.permute.xlu0 %1547
    %1549 = vrot.lane.b32.xlu0 %v1128, 112
    %v1550 = vpop.permute.xlu0 %1549
    %1551 = vrot.lane.b32.xlu0 %v1131, 112
    %v1552 = vpop.permute.xlu0 %1551
    %1553 = vrot.lane.b32.xlu0 %v1134, 112
    %v1554 = vpop.permute.xlu0 %1553
    %1555 = vrot.lane.b32.xlu0 %v1213, 112
    %v1556 = vpop.permute.xlu0 %1555
    %1557 = vrot.lane.b32.xlu0 %v1229, 112
    %v1558 = vpop.permute.xlu0 %1557
    %1559 = vrot.lane.b32.xlu0 %v1143, 112
    %v1560 = vpop.permute.xlu0 %1559
    %1561 = vrot.lane.b32.xlu0 %v1146, 112
    %v1562 = vpop.permute.xlu0 %1561
    %1563 = vrot.lane.b32.xlu0 %v1149, 112
    %v1564 = vpop.permute.xlu0 %1563
    %1565 = vrot.lane.b32.xlu0 %v1152, 112
    %v1566 = vpop.permute.xlu0 %1565
    %1567 = vrot.lane.b32.xlu0 %v1155, 112
    %v1568 = vpop.permute.xlu0 %1567
    %1569 = vrot.lane.b32.xlu0 %v1158, 112
    %v1570 = vpop.permute.xlu0 %1569
    %1571 = vrot.lane.b32.xlu0 %v1216, 112
    %v1572 = vpop.permute.xlu0 %1571
    %1573 = vrot.lane.b32.xlu0 %v1232, 112
    %v1574 = vpop.permute.xlu0 %1573
    %v1591 = vsel %vm34, %v1039, %v1256
    %v1592 = vsel %vm34, %v1041, %v1258
    %v1593 = vsel %vm34, %v1043, %v1260
    %v1594 = vsel %vm34, %v1045, %v1262
    %v1595 = vsel %vm34, %v1047, %v1264
    %v1596 = vsel %vm34, %v1049, %v1266
    %v1597 = vsel %vm34, %v1051, %v1268
    %v1598 = vsel %vm34, %v1053, %v1270
    %v1599 = vsel %vm34, %v1059, %v1272
    %v1600 = vsel %vm34, %v1061, %v1274
    %v1601 = vsel %vm34, %v1063, %v1276
    %v1602 = vsel %vm34, %v1065, %v1278
    %v1603 = vsel %vm34, %v1067, %v1280
    %v1604 = vsel %vm34, %v1069, %v1282
    %v1605 = vsel %vm34, %v1071, %v1284
    %v1606 = vsel %vm34, %v1073, %v1286
    %v1607 = vsel %vm689, %v1591, %v1304
    %v1608 = vsel %vm689, %v1592, %v1306
    %v1609 = vsel %vm689, %v1593, %v1308
    %v1610 = vsel %vm689, %v1594, %v1310
    %v1611 = vsel %vm689, %v1595, %v1312
    %v1612 = vsel %vm689, %v1596, %v1314
    %v1613 = vsel %vm689, %v1597, %v1316
    %v1614 = vsel %vm689, %v1598, %v1318
    %v1615 = vsel %vm689, %v1599, %v1320
    %v1616 = vsel %vm689, %v1600, %v1322
    %v1617 = vsel %vm689, %v1601, %v1324
    %v1618 = vsel %vm689, %v1602, %v1326
    %v1619 = vsel %vm689, %v1603, %v1328
    %v1620 = vsel %vm689, %v1604, %v1330
    %v1621 = vsel %vm689, %v1605, %v1332
    %v1622 = vsel %vm689, %v1606, %v1334
    %v1623 = vsel %vm706, %v1607, %v1352
    %v1624 = vsel %vm706, %v1608, %v1354
    %v1625 = vsel %vm706, %v1609, %v1356
    %v1626 = vsel %vm706, %v1610, %v1358
    %v1627 = vsel %vm706, %v1611, %v1360
    %v1628 = vsel %vm706, %v1612, %v1362
    %v1629 = vsel %vm706, %v1613, %v1364
    %v1630 = vsel %vm706, %v1614, %v1366
    %v1631 = vsel %vm706, %v1615, %v1368
    %v1632 = vsel %vm706, %v1616, %v1370
    %v1633 = vsel %vm706, %v1617, %v1372
    %v1634 = vsel %vm706, %v1618, %v1374
    %v1635 = vsel %vm706, %v1619, %v1376
    %v1636 = vsel %vm706, %v1620, %v1378
    %v1637 = vsel %vm706, %v1621, %v1380
    %v1638 = vsel %vm706, %v1622, %v1382
    %v1639 = vsel %vm723, %v1623, %v1400
    %v1640 = vsel %vm723, %v1624, %v1402
    %v1641 = vsel %vm723, %v1625, %v1404
    %v1642 = vsel %vm723, %v1626, %v1406
    %v1643 = vsel %vm723, %v1627, %v1408
    %v1644 = vsel %vm723, %v1628, %v1410
    %v1645 = vsel %vm723, %v1629, %v1412
    %v1646 = vsel %vm723, %v1630, %v1414
    %v1647 = vsel %vm723, %v1631, %v1416
    %v1648 = vsel %vm723, %v1632, %v1418
    %v1649 = vsel %vm723, %v1633, %v1420
    %v1650 = vsel %vm723, %v1634, %v1422
    %v1651 = vsel %vm723, %v1635, %v1424
    %v1652 = vsel %vm723, %v1636, %v1426
    %v1653 = vsel %vm723, %v1637, %v1428
    %v1654 = vsel %vm723, %v1638, %v1430
    %v1655 = vsel %vm740, %v1639, %v1448
    %v1656 = vsel %vm740, %v1640, %v1450
    %v1657 = vsel %vm740, %v1641, %v1452
    %v1658 = vsel %vm740, %v1642, %v1454
    %v1659 = vsel %vm740, %v1643, %v1456
    %v1660 = vsel %vm740, %v1644, %v1458
    %v1661 = vsel %vm740, %v1645, %v1460
    %v1662 = vsel %vm740, %v1646, %v1462
    %v1663 = vsel %vm740, %v1647, %v1464
    %v1664 = vsel %vm740, %v1648, %v1466
    %v1665 = vsel %vm740, %v1649, %v1468
    %v1666 = vsel %vm740, %v1650, %v1470
    %v1667 = vsel %vm740, %v1651, %v1472
    %v1668 = vsel %vm740, %v1652, %v1474
    %v1669 = vsel %vm740, %v1653, %v1476
    %v1670 = vsel %vm740, %v1654, %v1478
    %v1671 = vsel %vm757, %v1655, %v1496
    %v1672 = vsel %vm757, %v1656, %v1498
    %v1673 = vsel %vm757, %v1657, %v1500
    %v1674 = vsel %vm757, %v1658, %v1502
    %v1675 = vsel %vm757, %v1659, %v1504
    %v1676 = vsel %vm757, %v1660, %v1506
    %v1677 = vsel %vm757, %v1661, %v1508
    %v1678 = vsel %vm757, %v1662, %v1510
    %v1679 = vsel %vm757, %v1663, %v1512
    %v1680 = vsel %vm757, %v1664, %v1514
    %v1681 = vsel %vm757, %v1665, %v1516
    %v1682 = vsel %vm757, %v1666, %v1518
    %v1683 = vsel %vm757, %v1667, %v1520
    %v1684 = vsel %vm757, %v1668, %v1522
    %v1685 = vsel %vm757, %v1669, %v1524
    %v1686 = vsel %vm757, %v1670, %v1526
    %v1687 = vsel %vm774, %v1671, %v1544
    %v1688 = vsel %vm774, %v1672, %v1546
    %v1689 = vsel %vm774, %v1673, %v1548
    %v1690 = vsel %vm774, %v1674, %v1550
    %v1691 = vsel %vm774, %v1675, %v1552
    %v1692 = vsel %vm774, %v1676, %v1554
    %v1693 = vsel %vm774, %v1677, %v1556
    %v1694 = vsel %vm774, %v1678, %v1558
    %v1695 = vsel %vm774, %v1679, %v1560
    %v1696 = vsel %vm774, %v1680, %v1562
    %v1697 = vsel %vm774, %v1681, %v1564
    %v1698 = vsel %vm774, %v1682, %v1566
    %v1699 = vsel %vm774, %v1683, %v1568
    %v1700 = vsel %vm774, %v1684, %v1570
    %v1701 = vsel %vm774, %v1685, %v1572
    %v1702 = vsel %vm774, %v1686, %v1574
    %v1703 = vpack.c.bf16 %v1688, %v1687
    %v1704 = vpack.c.bf16 %v1170, %v1167
    %v1705 = vpack.c.bf16 %v1690, %v1689
    %v1706 = vpack.c.bf16 %v1176, %v1173
    %v1707 = vpack.c.bf16 %v1692, %v1691
    %v1708 = vpack.c.bf16 %v1182, %v1179
    %v1709 = vpack.c.bf16 %v1694, %v1693
    %v1710 = vpack.c.bf16 %v1235, %v1219
    %v1711 = vpack.c.bf16 %v1696, %v1695
    %v1712 = vpack.c.bf16 %v1194, %v1191
    %v1713 = vpack.c.bf16 %v1698, %v1697
    %v1714 = vpack.c.bf16 %v1200, %v1197
    %v1715 = vpack.c.bf16 %v1700, %v1699
    %v1716 = vpack.c.bf16 %v1206, %v1203
    %v1717 = vpack.c.bf16 %v1702, %v1701
    %v1718 = vpack.c.bf16 %v1238, %v1222
    %v1719 = vld [vmem:[%s3] sm:$0xf]
    %v1720 = vld [vmem:[%s3 + $0x4] sm:$0xf]
    %v1721 = vld [vmem:[%s3 + $0x8] sm:$0xf]
    %v1722 = vld [vmem:[%s3 + $0xc] sm:$0xf]
    %v1723 = vld [vmem:[%s3 + $0x10] sm:$0xf]
    %v1724 = vld [vmem:[%s3 + $0x14] sm:$0xf]
    %v1725 = vld [vmem:[%s3 + $0x18] sm:$0xf]
    %v1726 = vld [vmem:[%s3 + $0x1c] sm:$0xf]
    %v1727 = vld [vmem:[%s3 + $0x20] sm:$0xf]
    %v1728 = vld [vmem:[%s3 + $0x24] sm:$0xf]
    %v1729 = vld [vmem:[%s3 + $0x28] sm:$0xf]
    %v1730 = vld [vmem:[%s3 + $0x2c] sm:$0xf]
    %v1731 = vld [vmem:[%s3 + $0x30] sm:$0xf]
    %v1732 = vld [vmem:[%s3 + $0x34] sm:$0xf]
    %v1733 = vld [vmem:[%s3 + $0x38] sm:$0xf]
    %v1734 = vld [vmem:[%s3 + $0x3c] sm:$0xf]
    %v1735 = vld [vmem:[%s3 + $0x40] sm:$0xf]
    %v1736 = vld [vmem:[%s3 + $0x44] sm:$0xf]
    %v1737 = vld [vmem:[%s4] sm:$0x1]
    %v1739 = vlaneseq
    %v1740 = vshrl.u32 %v1739, 7
    %v1741 = vsub.s32 0, %v1740
    %v1742 = vrot.slane %v1737, %v1741
    %v1762 = vunpack.c.l.b16 %v1719
    %v1763 = vunpack.c.l.b16 %v1720
    %v1764 = vunpack.c.l.b16 %v1721
    %v1765 = vunpack.c.l.b16 %v1722
    %v1766 = vunpack.c.l.b16 %v1723
    %v1767 = vunpack.c.l.b16 %v1724
    %v1768 = vunpack.c.l.b16 %v1725
    %v1769 = vunpack.c.l.b16 %v1726
    %v1770 = vunpack.c.l.b16 %v1727
    %v1771 = vunpack.c.l.b16 %v1728
    %v1772 = vunpack.c.l.b16 %v1729
    %v1773 = vunpack.c.l.b16 %v1730
    %v1774 = vunpack.c.l.b16 %v1731
    %v1775 = vunpack.c.l.b16 %v1732
    %v1776 = vunpack.c.l.b16 %v1733
    %v1777 = vunpack.c.l.b16 %v1734
    %v1778 = vunpack.c.l.b16 %v1735
    %v1779 = vunpack.c.l.b16 %v1736
    %v1780 = vpack.c.b16 %v1763, %v1762
    %v1781 = vpack.c.b16 %v1765, %v1764
    %v1782 = vpack.c.b16 %v1767, %v1766
    %v1783 = vpack.c.b16 %v1769, %v1768
    %v1784 = vpack.c.b16 %v1771, %v1770
    %v1785 = vpack.c.b16 %v1773, %v1772
    %v1786 = vpack.c.b16 %v1775, %v1774
    %v1787 = vpack.c.b16 %v1777, %v1776
    %v1788 = vpack.c.b16 %v1779, %v1778
    %v1799 = vsel %vm34, %v1704, 0
    %v1802 = vsel %vm34, %v1706, 0
    %v1805 = vsel %vm34, %v1708, 0
    %v1808 = vsel %vm34, %v1710, 0
    %v1811 = vsel %vm34, %v1712, 0
    %v1814 = vsel %vm34, %v1714, 0
    %v1817 = vsel %vm34, %v1716, 0
    %v1820 = vsel %vm34, %v1718, 0
    %1822 = vmatprep.subr.bf16.mxu0 0
    %1823 = vmatpush1.bf16.msra.mxu0 %v1787
    %1824 = vmatprep.subr.bf16.mxu0 0
    %1825 = vmatpush1.bf16.msra.mxu0 %v1786
    %1826 = vmatprep.subr.bf16.mxu0 0
    %1827 = vmatpush1.bf16.msra.mxu0 %v1785
    %1828 = vmatprep.subr.bf16.mxu0 0
    %1829 = vmatpush1.bf16.msra.mxu0 %v1784
    %1830 = vmatprep.subr.bf16.mxu0 0
    %1831 = vmatpush1.bf16.msra.mxu0 %v1783
    %1832 = vmatprep.subr.bf16.mxu0 0
    %1833 = vmatpush1.bf16.msra.mxu0 %v1782
    %1834 = vmatprep.subr.bf16.mxu0 0
    %1835 = vmatpush1.bf16.msra.mxu0 %v1781
    %1836 = vmatprep.subr.bf16.mxu0 0
    %1837 = vmatpush1.bf16.msra.mxu0 %v1780
    %1838 = vmatprep.subr.bf16.mxu0 0
    %1839 = vmatpush2.bf16.msra.mxu0 0
    %1840 = vmatprep.subr.bf16.mxu0 0
    %1841 = vmatpush2.bf16.msra.mxu0 0
    %1842 = vmatprep.subr.bf16.mxu0 0
    %1843 = vmatpush2.bf16.msra.mxu0 0
    %1844 = vmatprep.subr.bf16.mxu0 0
    %1845 = vmatpush2.bf16.msra.mxu0 0
    %1846 = vmatprep.subr.bf16.mxu0 0
    %1847 = vmatpush2.bf16.msra.mxu0 0
    %1848 = vmatprep.subr.bf16.mxu0 0
    %1849 = vmatpush2.bf16.msra.mxu0 0
    %1850 = vmatprep.subr.bf16.mxu0 0
    %1851 = vmatpush2.bf16.msra.mxu0 0
    %1852 = vmatprep.subr.bf16.mxu0 0
    %1853 = vmatpush2.bf16.msra.mxu0 %v1788
    %1854 = vmatprep.mubr.bf16.mxu0 %v1799
    %1855 = vmatmul.mubr.bf16.gmra.mxu0 %v1703
    %v1856 = vpop.f32.mrf.mxu0
    %v1857 = vadd.f32 %v1742, %v1856
    %v1858 = vpop.f32.mrf.mxu0
    %v1859 = vpop.f32.mrf.mxu0
    %v1860 = vadd.f32 %v1742, %v1859
    %v1861 = vpop.f32.mrf.mxu0
    %1862 = vmatprep.mubr.bf16.mxu0 %v1802
    %1863 = vmatmul.mubr.bf16.gmra.mxu0 %v1705
    %v1864 = vpop.f32.mrf.mxu0
    %v1865 = vadd.f32 %v1742, %v1864
    %v1866 = vpop.f32.mrf.mxu0
    %v1867 = vpop.f32.mrf.mxu0
    %v1868 = vadd.f32 %v1742, %v1867
    %v1869 = vpop.f32.mrf.mxu0
    %1870 = vmatprep.mubr.bf16.mxu0 %v1805
    %1871 = vmatmul.mubr.bf16.gmra.mxu0 %v1707
    %v1872 = vpop.f32.mrf.mxu0
    %v1873 = vadd.f32 %v1742, %v1872
    %v1874 = vpop.f32.mrf.mxu0
    %v1875 = vpop.f32.mrf.mxu0
    %v1876 = vadd.f32 %v1742, %v1875
    %v1877 = vpop.f32.mrf.mxu0
    %1878 = vmatprep.mubr.bf16.mxu0 %v1808
    %1879 = vmatmul.mubr.bf16.gmra.mxu0 %v1709
    %v1880 = vpop.f32.mrf.mxu0
    %v1881 = vadd.f32 %v1742, %v1880
    %v1882 = vpop.f32.mrf.mxu0
    %v1883 = vpop.f32.mrf.mxu0
    %v1884 = vadd.f32 %v1742, %v1883
    %v1885 = vpop.f32.mrf.mxu0
    %1886 = vmatprep.mubr.bf16.mxu0 %v1811
    %1887 = vmatmul.mubr.bf16.gmra.mxu0 %v1711
    %v1888 = vpop.f32.mrf.mxu0
    %v1889 = vadd.f32 %v1742, %v1888
    %v1890 = vpop.f32.mrf.mxu0
    %v1891 = vpop.f32.mrf.mxu0
    %v1892 = vadd.f32 %v1742, %v1891
    %v1893 = vpop.f32.mrf.mxu0
    %1894 = vmatprep.mubr.bf16.mxu0 %v1814
    %1895 = vmatmul.mubr.bf16.gmra.mxu0 %v1713
    %v1896 = vpop.f32.mrf.mxu0
    %v1897 = vadd.f32 %v1742, %v1896
    %v1898 = vpop.f32.mrf.mxu0
    %v1899 = vpop.f32.mrf.mxu0
    %v1900 = vadd.f32 %v1742, %v1899
    %v1901 = vpop.f32.mrf.mxu0
    %1902 = vmatprep.mubr.bf16.mxu0 %v1817
    %1903 = vmatmul.mubr.bf16.gmra.mxu0 %v1715
    %v1904 = vpop.f32.mrf.mxu0
    %v1905 = vadd.f32 %v1742, %v1904
    %v1906 = vpop.f32.mrf.mxu0
    %v1907 = vpop.f32.mrf.mxu0
    %v1908 = vadd.f32 %v1742, %v1907
    %v1909 = vpop.f32.mrf.mxu0
    %1910 = vmatprep.mubr.bf16.mxu0 %v1820
    %1911 = vmatmul.mubr.bf16.gmra.mxu0 %v1717
    %v1912 = vpop.f32.mrf.mxu0
    %v1913 = vadd.f32 %v1742, %v1912
    %v1914 = vpop.f32.mrf.mxu0
    %v1915 = vpop.f32.mrf.mxu0
    %v1916 = vadd.f32 %v1742, %v1915
    %v1917 = vpop.f32.mrf.mxu0
    %1918 = vdwg.mxu0
    %v1919 = vsel %vm34, %v1857, 0.0
    %v1920 = vsel %vm34, %v1860, 0.0
    %v1921 = vadd.f32 %v1919, %v1920
    %v1922 = vsel %vm34, %v1865, 0.0
    %v1923 = vadd.f32 %v1921, %v1922
    %v1924 = vsel %vm34, %v1868, 0.0
    %v1925 = vadd.f32 %v1923, %v1924
    %v1926 = vsel %vm34, %v1873, 0.0
    %v1927 = vadd.f32 %v1925, %v1926
    %v1928 = vsel %vm34, %v1876, 0.0
    %v1929 = vadd.f32 %v1927, %v1928
    %v1930 = vsel %vm34, %v1881, 0.0
    %v1931 = vadd.f32 %v1929, %v1930
    %v1932 = vsel %vm34, %v1884, 0.0
    %v1933 = vadd.f32 %v1931, %v1932
    %v1934 = vrot.slane %v1933, 4
    %v1935 = vadd.f32 %v1933, %v1934
    %v1936 = vrot.slane %v1935, 2
    %v1937 = vadd.f32 %v1935, %v1936
    %v1938 = vrot.slane %v1937, 1
    %v1939 = vadd.f32 %v1937, %v1938
    %v1940 = vsel %vm34, %v1889, 0.0
    %v1941 = vsel %vm34, %v1892, 0.0
    %v1942 = vadd.f32 %v1940, %v1941
    %v1943 = vsel %vm34, %v1897, 0.0
    %v1944 = vadd.f32 %v1942, %v1943
    %v1945 = vsel %vm34, %v1900, 0.0
    %v1946 = vadd.f32 %v1944, %v1945
    %v1947 = vsel %vm34, %v1905, 0.0
    %v1948 = vadd.f32 %v1946, %v1947
    %v1949 = vsel %vm34, %v1908, 0.0
    %v1950 = vadd.f32 %v1948, %v1949
    %v1951 = vsel %vm34, %v1913, 0.0
    %v1952 = vadd.f32 %v1950, %v1951
    %v1953 = vsel %vm34, %v1916, 0.0
    %v1954 = vadd.f32 %v1952, %v1953
    %v1955 = vrot.slane %v1954, 4
    %v1956 = vadd.f32 %v1954, %v1955
    %v1957 = vrot.slane %v1956, 2
    %v1958 = vadd.f32 %v1956, %v1957
    %v1959 = vrot.slane %v1958, 1
    %v1960 = vadd.f32 %v1958, %v1959
    %v1961 = vrcp.pop 64.0
    %v1962 = vmul.f32 %v1939, %v1961
    %v1963 = vmul.f32 %v1960, %v1961
    %v1964 = vld [vmem:[%s5] sm:$0xff]
    %v1965 = vld [vmem:[%s5 + $0x8] sm:$0xff]
    %v1966 = vld [vmem:[%s6] sm:$0x1]
    %v1968 = vlaneseq
    %v1969 = vshrl.u32 %v1968, 7
    %v1970 = vsub.s32 0, %v1969
    %v1971 = vrot.slane %v1966, %v1970
    %vm1975 = vcmask 1041409
    %v1976 = vsel %vm1975, %v1963, %v1962
    %v1977 = vsel %vm34, %v1976, 0
    %1979 = vmatprep.subr.mxu0 0.0
    %1980 = vmatpush1.msra.mxu0 0.0
    %1981 = vmatprep.subr.mxu0 0.0
    %1982 = vmatpush1.msra.mxu0 0.0
    %1983 = vmatprep.subr.mxu0 0.0
    %1984 = vmatpush1.msra.mxu0 0.0
    %1985 = vmatprep.subr.mxu0 0.0
    %1986 = vmatpush1.msra.mxu0 0.0
    %1987 = vmatprep.subr.mxu0 0.0
    %1988 = vmatpush1.msra.mxu0 0.0
    %1989 = vmatprep.subr.mxu0 0.0
    %1990 = vmatpush1.msra.mxu0 0.0
    %1991 = vmatprep.subr.mxu0 0.0
    %1992 = vmatpush1.msra.mxu0 0.0
    %1993 = vmatprep.subr.mxu0 0.0
    %1994 = vmatpush1.msra.mxu0 0.0
    %1995 = vmatprep.subr.mxu0 0.0
    %1996 = vmatpush1.msra.mxu0 0.0
    %1997 = vmatprep.subr.mxu0 0.0
    %1998 = vmatpush1.msra.mxu0 0.0
    %1999 = vmatprep.subr.mxu0 0.0
    %2000 = vmatpush1.msra.mxu0 0.0
    %2001 = vmatprep.subr.mxu0 0.0
    %2002 = vmatpush1.msra.mxu0 0.0
    %2003 = vmatprep.subr.mxu0 0.0
    %2004 = vmatpush1.msra.mxu0 0.0
    %2005 = vmatprep.subr.mxu0 0.0
    %2006 = vmatpush1.msra.mxu0 0.0
    %2007 = vmatprep.subr.mxu0 0.0
    %2008 = vmatpush1.msra.mxu0 %v1965
    %2009 = vmatprep.subr.mxu0 0.0
    %2010 = vmatpush1.msra.mxu0 %v1964
    %2011 = vmatprep.subr.mxu0 0.0
    %2012 = vmatpush2.msra.mxu0 0.0
    %2013 = vmatprep.subr.mxu0 0.0
    %2014 = vmatpush2.msra.mxu0 0.0
    %2015 = vmatprep.subr.mxu0 0.0
    %2016 = vmatpush2.msra.mxu0 0.0
    %2017 = vmatprep.subr.mxu0 0.0
    %2018 = vmatpush2.msra.mxu0 0.0
    %2019 = vmatprep.subr.mxu0 0.0
    %2020 = vmatpush2.msra.mxu0 0.0
    %2021 = vmatprep.subr.mxu0 0.0
    %2022 = vmatpush2.msra.mxu0 0.0
    %2023 = vmatprep.subr.mxu0 0.0
    %2024 = vmatpush2.msra.mxu0 0.0
    %2025 = vmatprep.subr.mxu0 0.0
    %2026 = vmatpush2.msra.mxu0 0.0
    %2027 = vmatprep.subr.mxu0 0.0
    %2028 = vmatpush2.msra.mxu0 0.0
    %2029 = vmatprep.subr.mxu0 0.0
    %2030 = vmatpush2.msra.mxu0 0.0
    %2031 = vmatprep.subr.mxu0 0.0
    %2032 = vmatpush2.msra.mxu0 0.0
    %2033 = vmatprep.subr.mxu0 0.0
    %2034 = vmatpush2.msra.mxu0 0.0
    %2035 = vmatprep.subr.mxu0 0.0
    %2036 = vmatpush2.msra.mxu0 0.0
    %2037 = vmatprep.subr.mxu0 0.0
    %2038 = vmatpush2.msra.mxu0 0.0
    %2039 = vmatprep.subr.mxu0 0.0
    %2040 = vmatpush2.msra.mxu0 0.0
    %2041 = vmatprep.subr.mxu0 0.0
    %2042 = vmatpush2.msra.mxu0 0.0
    %2043 = vmatprep.mubr.f32.mxu0 0.0
    %2044 = vmatmul.mubr.f32.gmra.mxu0 %v1977
    %v2045 = vpop.f32.mrf.mxu0
    %v2046 = vadd.f32 %v1971, %v2045
    %v2047 = vpop.f32.mrf.mxu0
    %2048 = vdwg.mxu0
    %v2049 = vmax.f32 %v2046, 0.0
    %v2050 = vld [vmem:[%s7] sm:$0xf]
    %v2051 = vld [vmem:[%s8] sm:$0x1]
    %v2053 = vlaneseq
    %v2054 = vshrl.u32 %v2053, 7
    %v2055 = vsub.s32 0, %v2054
    %v2056 = vrot.slane %v2051, %v2055
    %vm2058 = vcmask 31744
    %v2060 = vsel %vm2058, %v2049, 0
    %vm2062 = vcmask 1043456
    %v2064 = vsel %vm2062, %v2050, 0
    %2066 = vmatprep.subr.mxu0 0.0
    %2067 = vmatpush1.msra.mxu0 0.0
    %2068 = vmatprep.subr.mxu0 0.0
    %2069 = vmatpush1.msra.mxu0 0.0
    %2070 = vmatprep.subr.mxu0 0.0
    %2071 = vmatpush1.msra.mxu0 0.0
    %2072 = vmatprep.subr.mxu0 0.0
    %2073 = vmatpush1.msra.mxu0 0.0
    %2074 = vmatprep.subr.mxu0 0.0
    %2075 = vmatpush1.msra.mxu0 0.0
    %2076 = vmatprep.subr.mxu0 0.0
    %2077 = vmatpush1.msra.mxu0 0.0
    %2078 = vmatprep.subr.mxu0 0.0
    %2079 = vmatpush1.msra.mxu0 0.0
    %2080 = vmatprep.subr.mxu0 0.0
    %2081 = vmatpush1.msra.mxu0 0.0
    %2082 = vmatprep.subr.mxu0 0.0
    %2083 = vmatpush1.msra.mxu0 0.0
    %2084 = vmatprep.subr.mxu0 0.0
    %2085 = vmatpush1.msra.mxu0 0.0
    %2086 = vmatprep.subr.mxu0 0.0
    %2087 = vmatpush1.msra.mxu0 0.0
    %2088 = vmatprep.subr.mxu0 0.0
    %2089 = vmatpush1.msra.mxu0 0.0
    %2090 = vmatprep.subr.mxu0 0.0
    %2091 = vmatpush1.msra.mxu0 0.0
    %2092 = vmatprep.subr.mxu0 0.0
    %2093 = vmatpush1.msra.mxu0 0.0
    %2094 = vmatprep.subr.mxu0 0.0
    %2095 = vmatpush1.msra.mxu0 0.0
    %2096 = vmatprep.subr.mxu0 0.0
    %2097 = vmatpush1.msra.mxu0 %v2064
    %2098 = vmatprep.subr.mxu0 0.0
    %2099 = vmatpush2.msra.mxu0 0.0
    %2100 = vmatprep.subr.mxu0 0.0
    %2101 = vmatpush2.msra.mxu0 0.0
    %2102 = vmatprep.subr.mxu0 0.0
    %2103 = vmatpush2.msra.mxu0 0.0
    %2104 = vmatprep.subr.mxu0 0.0
    %2105 = vmatpush2.msra.mxu0 0.0
    %2106 = vmatprep.subr.mxu0 0.0
    %2107 = vmatpush2.msra.mxu0 0.0
    %2108 = vmatprep.subr.mxu0 0.0
    %2109 = vmatpush2.msra.mxu0 0.0
    %2110 = vmatprep.subr.mxu0 0.0
    %2111 = vmatpush2.msra.mxu0 0.0
    %2112 = vmatprep.subr.mxu0 0.0
    %2113 = vmatpush2.msra.mxu0 0.0
    %2114 = vmatprep.subr.mxu0 0.0
    %2115 = vmatpush2.msra.mxu0 0.0
    %2116 = vmatprep.subr.mxu0 0.0
    %2117 = vmatpush2.msra.mxu0 0.0
    %2118 = vmatprep.subr.mxu0 0.0
    %2119 = vmatpush2.msra.mxu0 0.0
    %2120 = vmatprep.subr.mxu0 0.0
    %2121 = vmatpush2.msra.mxu0 0.0
    %2122 = vmatprep.subr.mxu0 0.0
    %2123 = vmatpush2.msra.mxu0 0.0
    %2124 = vmatprep.subr.mxu0 0.0
    %2125 = vmatpush2.msra.mxu0 0.0
    %2126 = vmatprep.subr.mxu0 0.0
    %2127 = vmatpush2.msra.mxu0 0.0
    %2128 = vmatprep.subr.mxu0 0.0
    %2129 = vmatpush2.msra.mxu0 0.0
    %2130 = vmatprep.mubr.f32.mxu0 0.0
    %2131 = vmatmul.mubr.f32.gmra.mxu0 %v2060
    %v2132 = vpop.f32.mrf.mxu0
    %v2133 = vadd.f32 %v2056, %v2132
    %v2134 = vpop.f32.mrf.mxu0
    %2135 = vdwg.mxu0
    %v2136 = vxor.u32 %v2133, 2147483648
    %v2137 = vmul.f32 %v2136, 1.442695
    %v2138 = vpow.pop %v2137
    %v2139 = vadd.f32 %v2138, 1.0
    %v2140 = vrcp.pop %v2139
    %v2141 = vmul.f32 1.0, %v2140
    %v2144 = vunpack.c.l.s4 1966171168
    %v2145 = vunpack.c.0.s8 %v2144
    %v2146 = vlaneseq
    %v2147 = vshrl.u32 %v2146, 7
    %v2148 = vsub.s32 %v2145, %v2147
    %v2149 = vrot.slane %v2141, %v2148
    %v2150 = vcombine.high %v2149, %v2149
    %v2152 = vunpack.c.l.s4 1966171168
    %v2153 = vunpack.c.0.s8 %v2152
    %v2154 = vlaneseq
    %v2155 = vshrl.u32 %v2154, 7
    %v2156 = vsub.s32 %v2153, %v2155
    %v2157 = vrot.slane %v2149, %v2156
    %v2159 = vunpack.c.l.s4 1966171168
    %v2160 = vunpack.c.0.s8 %v2159
    %v2161 = vlaneseq
    %v2162 = vshrl.u32 %v2161, 7
    %v2163 = vsub.s32 %v2160, %v2162
    %v2164 = vrot.slane %v2150, %v2163
    %v2165 = vlaneseq
    %v2166 = vshrl.u32 %v2165, 7
    %v2167 = vsub.s32 0, %v2166
    %v2168 = vrot.slane %v2157, %v2167
    %v2169 = vlaneseq
    %v2170 = vshrl.u32 %v2169, 7
    %v2171 = vsub.s32 0, %v2170
    %v2172 = vrot.slane %v2164, %v2171
    %v2175 = vmul.f32 %v1857, %v2168
    %v2176 = vmul.f32 %v1860, %v2168
    %v2177 = vmul.f32 %v1865, %v2168
    %v2178 = vmul.f32 %v1868, %v2168
    %v2179 = vmul.f32 %v1873, %v2168
    %v2180 = vmul.f32 %v1876, %v2168
    %v2181 = vmul.f32 %v1881, %v2168
    %v2182 = vmul.f32 %v1884, %v2168
    %v2183 = vmul.f32 %v1889, %v2172
    %v2184 = vmul.f32 %v1892, %v2172
    %v2185 = vmul.f32 %v1897, %v2172
    %v2186 = vmul.f32 %v1900, %v2172
    %v2187 = vmul.f32 %v1905, %v2172
    %v2188 = vmul.f32 %v1908, %v2172
    %v2189 = vmul.f32 %v1913, %v2172
    %v2190 = vmul.f32 %v1916, %v2172
    %v2191 = vld [vmem:[%s0] sm:$0xff]
    %v2192 = vld [vmem:[%s0 + $0x8] sm:$0xff]
    %v2193 = vld [vmem:[%s0 + $0x10] sm:$0xff]
    %v2194 = vld [vmem:[%s0 + $0x18] sm:$0xff]
    %v2195 = vld [vmem:[%s0 + $0x20] sm:$0xff]
    %v2196 = vld [vmem:[%s0 + $0x28] sm:$0xff]
    %v2197 = vld [vmem:[%s0 + $0x30] sm:$0xff]
    %v2198 = vld [vmem:[%s0 + $0x38] sm:$0xff]
    %v2199 = vld [vmem:[%s0 + $0x40] sm:$0xff]
    %v2200 = vld [vmem:[%s0 + $0x48] sm:$0xff]
    %v2201 = vld [vmem:[%s0 + $0x50] sm:$0xff]
    %v2202 = vld [vmem:[%s0 + $0x58] sm:$0xff]
    %v2203 = vld [vmem:[%s0 + $0x60] sm:$0xff]
    %v2204 = vld [vmem:[%s0 + $0x68] sm:$0xff]
    %v2205 = vld [vmem:[%s0 + $0x70] sm:$0xff]
    %v2206 = vld [vmem:[%s0 + $0x78] sm:$0xff]
    %v2207 = vadd.f32 %v2175, %v2191
    %v2208 = vadd.f32 %v2176, %v2192
    %v2209 = vadd.f32 %v2177, %v2193
    %v2210 = vadd.f32 %v2178, %v2194
    %v2211 = vadd.f32 %v2179, %v2195
    %v2212 = vadd.f32 %v2180, %v2196
    %v2213 = vadd.f32 %v2181, %v2197
    %v2214 = vadd.f32 %v2182, %v2198
    %v2215 = vadd.f32 %v2183, %v2199
    %v2216 = vadd.f32 %v2184, %v2200
    %v2217 = vadd.f32 %v2185, %v2201
    %v2218 = vadd.f32 %v2186, %v2202
    %v2219 = vadd.f32 %v2187, %v2203
    %v2220 = vadd.f32 %v2188, %v2204
    %v2221 = vadd.f32 %v2189, %v2205
    %v2222 = vadd.f32 %v2190, %v2206
    %2223 = vst.msk [vmem:[#allocation3] sm:$0xff] %vm34, %v2207
    %2224 = vst.msk [vmem:[#allocation3 + $0x8] sm:$0xff] %vm34, %v2208
    %2225 = vst.msk [vmem:[#allocation3 + $0x10] sm:$0xff] %vm34, %v2209
    %2226 = vst.msk [vmem:[#allocation3 + $0x18] sm:$0xff] %vm34, %v2210
    %2227 = vst.msk [vmem:[#allocation3 + $0x20] sm:$0xff] %vm34, %v2211
    %2228 = vst.msk [vmem:[#allocation3 + $0x28] sm:$0xff] %vm34, %v2212
    %2229 = vst.msk [vmem:[#allocation3 + $0x30] sm:$0xff] %vm34, %v2213
    %2230 = vst.msk [vmem:[#allocation3 + $0x38] sm:$0xff] %vm34, %v2214
    %2231 = vst.msk [vmem:[#allocation3 + $0x40] sm:$0xff] %vm34, %v2215
    %2232 = vst.msk [vmem:[#allocation3 + $0x48] sm:$0xff] %vm34, %v2216
    %2233 = vst.msk [vmem:[#allocation3 + $0x50] sm:$0xff] %vm34, %v2217
    %2234 = vst.msk [vmem:[#allocation3 + $0x58] sm:$0xff] %vm34, %v2218
    %2235 = vst.msk [vmem:[#allocation3 + $0x60] sm:$0xff] %vm34, %v2219
    %2236 = vst.msk [vmem:[#allocation3 + $0x68] sm:$0xff] %vm34, %v2220
    %2237 = vst.msk [vmem:[#allocation3 + $0x70] sm:$0xff] %vm34, %v2221
    %2238 = vst.msk [vmem:[#allocation3 + $0x78] sm:$0xff] %vm34, %v2222
    // Predicated region
    $region38: #{tpu_custom_call.1} parent=1 // pred_check
      _
    $region39: #{tpu_custom_call.1} parent=1 // pred_check_branch
      %2240 = sbr.rel (0) target = $region41
    $region40: #{tpu_custom_call.1} parent=1 // pred_region
      %s2242 = ssub.s32 2048, 2048
      %2243 = vsyncadd [#allocation4], %s2242
      %s2244 = sshll.u32 [#allocation3], 4
      %s2245 = int_to_ptr.vmem [resolvable:$true] %s2244
      %2250 = dma.vmem_to_hbm [thread:$0]  %s2245, 2048, %s9, [#allocation4], 128, 128, 8
    $region41: #{tpu_custom_call.1} parent=1 // pred_fallthru
      _
    // Predicated region
    $region42: #{tpu_custom_call.1} parent=1 // pred_check
      _
    $region43: #{tpu_custom_call.1} parent=1 // pred_check_branch
      %2252 = sbr.rel (0) target = $region45
    $region44: #{tpu_custom_call.1} parent=1 // pred_region
      %2253 = dma.done [#allocation4], 2048
    $region45: #{tpu_custom_call.1} parent=1 // pred_fallthru
      _
    %2254 = vsyncpa [#allocation4], 1

// kernel: tpu_custom_call.1
$region0: #{tpu_custom_call.1}
  #allocation0 [shape = 'u32[]', space=smem, size = 0x4, offset = 0x4, fixed_abs, tag = 'smem constant byte address 0x4 - core index']
  #allocation1 [shape = 'u32[144,128]{1,0:T(1,128)}', space=vmem, size = 0x12000, scoped, tag = 'internal scratch']
  #allocation2 [shape = 'f32[2,10,10,16]{3,2,1,0:T(8,128)}', space=vmem, size = 0x28000, scoped, tag = 'scratch operand']
  %s0 = inlined_call_operand.vmem [shape: f32[2,8,8,16], index: 0, kind: input, shape index: {}]
  %s1 = inlined_call_operand.vmem [shape: bf16[144,16], index: 1, kind: input, shape index: {}]
  %s2 = inlined_call_operand.vmem [shape: f32[1,16], index: 2, kind: input, shape index: {}]
  %s3 = inlined_call_operand.vmem [shape: bf16[144,16], index: 3, kind: input, shape index: {}]
  %s4 = inlined_call_operand.vmem [shape: f32[1,16], index: 4, kind: input, shape index: {}]
  %s5 = inlined_call_operand.vmem [shape: f32[16,4], index: 5, kind: input, shape index: {}]
  %s6 = inlined_call_operand.vmem [shape: f32[1,4], index: 6, kind: input, shape index: {}]
  %s7 = inlined_call_operand.vmem [shape: f32[4,16], index: 7, kind: input, shape index: {}]
  %s8 = inlined_call_operand.vmem [shape: f32[1,16], index: 8, kind: input, shape index: {}]
  %s9 = inlined_call_operand.hbm [shape: f32[2,8,8,16], index: 9, kind: output, shape index: {}]
  %s10 = sld [smem:[#allocation0]]
  $region46: #{tpu_custom_call.1} parent=0
    _
  %s12 = ssub.s32 1, %s10
  %s13 = scalar_select 0, %s12, %s10
  $region1: #{tpu_custom_call.1} parent=0
    #allocation3 [shape = 'u8[65536]{0}', space=vmem, size = 0x10000, scoped, tag = 'output window, operand 0, single buffered']
    #allocation4 [shape = 's32[1]{0}', space=sflag, size = 0x4, scoped, tag = 'scoped memory for tpu_custom_call.1']
    %14 = vsyncpa [#allocation4], 0
    // Predicated region
    $region2: #{tpu_custom_call.1} parent=1 // pred_check
      _
    $region3: #{tpu_custom_call.1} parent=1 // pred_check_branch
      %16 = sbr.rel (0) target = $region5
    $region4: #{tpu_custom_call.1} parent=1 // pred_region
      _
    $region5: #{tpu_custom_call.1} parent=1 // pred_fallthru
      _
    // Predicated region
    $region6: #{tpu_custom_call.1} parent=1 // pred_check
      _
    $region7: #{tpu_custom_call.1} parent=1 // pred_check_branch
      %18 = sbr.rel (0) target = $region9
    $region8: #{tpu_custom_call.1} parent=1 // pred_region
      _
    $region9: #{tpu_custom_call.1} parent=1 // pred_fallthru
      _
    // Predicated region
    $region10: #{tpu_custom_call.1} parent=1 // pred_check
      _
    $region11: #{tpu_custom_call.1} parent=1 // pred_check_branch
      %20 = sbr.rel (0) target = $region13
    $region12: #{tpu_custom_call.1} parent=1 // pred_region
      _
    $region13: #{tpu_custom_call.1} parent=1 // pred_fallthru
      _
    // Predicated region
    $region14: #{tpu_custom_call.1} parent=1 // pred_check
      _
    $region15: #{tpu_custom_call.1} parent=1 // pred_check_branch
      %22 = sbr.rel (0) target = $region17
    $region16: #{tpu_custom_call.1} parent=1 // pred_region
      _
    $region17: #{tpu_custom_call.1} parent=1 // pred_fallthru
      _
    // Predicated region
    $region18: #{tpu_custom_call.1} parent=1 // pred_check
      _
    $region19: #{tpu_custom_call.1} parent=1 // pred_check_branch
      %24 = sbr.rel (0) target = $region21
    $region20: #{tpu_custom_call.1} parent=1 // pred_region
      _
    $region21: #{tpu_custom_call.1} parent=1 // pred_fallthru
      _
    // Predicated region
    $region22: #{tpu_custom_call.1} parent=1 // pred_check
      _
    $region23: #{tpu_custom_call.1} parent=1 // pred_check_branch
      %26 = sbr.rel (0) target = $region25
    $region24: #{tpu_custom_call.1} parent=1 // pred_region
      _
    $region25: #{tpu_custom_call.1} parent=1 // pred_fallthru
      _
    // Predicated region
    $region26: #{tpu_custom_call.1} parent=1 // pred_check
      _
    $region27: #{tpu_custom_call.1} parent=1 // pred_check_branch
      %28 = sbr.rel (0) target = $region29
    $region28: #{tpu_custom_call.1} parent=1 // pred_region
      _
    $region29: #{tpu_custom_call.1} parent=1 // pred_fallthru
      _
    // Predicated region
    $region30: #{tpu_custom_call.1} parent=1 // pred_check
      _
    $region31: #{tpu_custom_call.1} parent=1 // pred_check_branch
      %30 = sbr.rel (0) target = $region33
    $region32: #{tpu_custom_call.1} parent=1 // pred_region
      _
    $region33: #{tpu_custom_call.1} parent=1 // pred_fallthru
      _
    // Predicated region
    $region34: #{tpu_custom_call.1} parent=1 // pred_check
      _
    $region35: #{tpu_custom_call.1} parent=1 // pred_check_branch
      %32 = sbr.rel (0) target = $region37
    $region36: #{tpu_custom_call.1} parent=1 // pred_region
      _
    $region37: #{tpu_custom_call.1} parent=1 // pred_fallthru
      _
    %vm34 = vcmask 130048
    %35 = vst.msk [vmem:[#allocation2] sm:$0xff] %vm34, 0.0
    %vm36 = vcmask 123904
    %37 = vst.msk [vmem:[#allocation2 + $0x8] sm:$0x3] %vm36, 0.0
    %38 = vst.msk [vmem:[#allocation2 + $0xa0] sm:$0xff] %vm34, 0.0
    %39 = vst.msk [vmem:[#allocation2 + $0xa8] sm:$0x3] %vm36, 0.0
    %s40 = scalar_lea.vmem [#allocation2], 144
    %41 = vst.msk [vmem:[%s40] sm:$0xff] %vm34, 0.0
    %42 = vst.msk [vmem:[%s40 + $0x8] sm:$0x3] %vm36, 0.0
    %43 = vst.msk [vmem:[%s40 + $0xa0] sm:$0xff] %vm34, 0.0
    %44 = vst.msk [vmem:[%s40 + $0xa8] sm:$0x3] %vm36, 0.0
    %vm45 = vcmask 122880
    %46 = vst.msk [vmem:[#allocation2] sm:$0x1] %vm45, 0.0
    %47 = vst.msk [vmem:[#allocation2 + $0x10] sm:$0x1] %vm45, 0.0
    %48 = vst.msk [vmem:[#allocation2 + $0x20] sm:$0x1] %vm45, 0.0
    %49 = vst.msk [vmem:[#allocation2 + $0x30] sm:$0x1] %vm45, 0.0
    %50 = vst.msk [vmem:[#allocation2 + $0x40] sm:$0x1] %vm45, 0.0
    %51 = vst.msk [vmem:[#allocation2 + $0x50] sm:$0x1] %vm45, 0.0
    %52 = vst.msk [vmem:[#allocation2 + $0x60] sm:$0x1] %vm45, 0.0
    %53 = vst.msk [vmem:[#allocation2 + $0x70] sm:$0x1] %vm45, 0.0
    %54 = vst.msk [vmem:[#allocation2 + $0x80] sm:$0x1] %vm45, 0.0
    %55 = vst.msk [vmem:[#allocation2 + $0x90] sm:$0x1] %vm45, 0.0
    %56 = vst.msk [vmem:[#allocation2 + $0xa0] sm:$0x1] %vm45, 0.0
    %57 = vst.msk [vmem:[#allocation2 + $0xb0] sm:$0x1] %vm45, 0.0
    %58 = vst.msk [vmem:[#allocation2 + $0xc0] sm:$0x1] %vm45, 0.0
    %59 = vst.msk [vmem:[#allocation2 + $0xd0] sm:$0x1] %vm45, 0.0
    %60 = vst.msk [vmem:[#allocation2 + $0xe0] sm:$0x1] %vm45, 0.0
    %61 = vst.msk [vmem:[#allocation2 + $0xf0] sm:$0x1] %vm45, 0.0
    %62 = vst.msk [vmem:[#allocation2 + $0x100] sm:$0x1] %vm45, 0.0
    %63 = vst.msk [vmem:[#allocation2 + $0x110] sm:$0x1] %vm45, 0.0
    %64 = vst.msk [vmem:[#allocation2 + $0x120] sm:$0x1] %vm45, 0.0
    %65 = vst.msk [vmem:[#allocation2 + $0x130] sm:$0x1] %vm45, 0.0
    %66 = vst.msk [vmem:[#allocation2 + $0x9] sm:$0x1] %vm45, 0.0
    %67 = vst.msk [vmem:[#allocation2 + $0x19] sm:$0x1] %vm45, 0.0
    %68 = vst.msk [vmem:[#allocation2 + $0x29] sm:$0x1] %vm45, 0.0
    %69 = vst.msk [vmem:[#allocation2 + $0x39] sm:$0x1] %vm45, 0.0
    %70 = vst.msk [vmem:[#allocation2 + $0x49] sm:$0x1] %vm45, 0.0
    %71 = vst.msk [vmem:[#allocation2 + $0x59] sm:$0x1] %vm45, 0.0
    %72 = vst.msk [vmem:[#allocation2 + $0x69] sm:$0x1] %vm45, 0.0
    %73 = vst.msk [vmem:[#allocation2 + $0x79] sm:$0x1] %vm45, 0.0
    %74 = vst.msk [vmem:[#allocation2 + $0x89] sm:$0x1] %vm45, 0.0
    %75 = vst.msk [vmem:[#allocation2 + $0x99] sm:$0x1] %vm45, 0.0
    %76 = vst.msk [vmem:[#allocation2 + $0xa9] sm:$0x1] %vm45, 0.0
    %77 = vst.msk [vmem:[#allocation2 + $0xb9] sm:$0x1] %vm45, 0.0
    %78 = vst.msk [vmem:[#allocation2 + $0xc9] sm:$0x1] %vm45, 0.0
    %79 = vst.msk [vmem:[#allocation2 + $0xd9] sm:$0x1] %vm45, 0.0
    %80 = vst.msk [vmem:[#allocation2 + $0xe9] sm:$0x1] %vm45, 0.0
    %81 = vst.msk [vmem:[#allocation2 + $0xf9] sm:$0x1] %vm45, 0.0
    %82 = vst.msk [vmem:[#allocation2 + $0x109] sm:$0x1] %vm45, 0.0
    %83 = vst.msk [vmem:[#allocation2 + $0x119] sm:$0x1] %vm45, 0.0
    %84 = vst.msk [vmem:[#allocation2 + $0x129] sm:$0x1] %vm45, 0.0
    %85 = vst.msk [vmem:[#allocation2 + $0x139] sm:$0x1] %vm45, 0.0
    %v86 = vld [vmem:[%s0] sm:$0xff]
    %v87 = vld [vmem:[%s0 + $0x8] sm:$0xff]
    %v88 = vld [vmem:[%s0 + $0x10] sm:$0xff]
    %v89 = vld [vmem:[%s0 + $0x18] sm:$0xff]
    %v90 = vld [vmem:[%s0 + $0x20] sm:$0xff]
    %v91 = vld [vmem:[%s0 + $0x28] sm:$0xff]
    %v92 = vld [vmem:[%s0 + $0x30] sm:$0xff]
    %v93 = vld [vmem:[%s0 + $0x38] sm:$0xff]
    %v94 = vld [vmem:[%s0 + $0x40] sm:$0xff]
    %v95 = vld [vmem:[%s0 + $0x48] sm:$0xff]
    %v96 = vld [vmem:[%s0 + $0x50] sm:$0xff]
    %v97 = vld [vmem:[%s0 + $0x58] sm:$0xff]
    %v98 = vld [vmem:[%s0 + $0x60] sm:$0xff]
    %v99 = vld [vmem:[%s0 + $0x68] sm:$0xff]
    %v100 = vld [vmem:[%s0 + $0x70] sm:$0xff]
    %v101 = vld [vmem:[%s0 + $0x78] sm:$0xff]
    %s102 = scalar_lea.vmem [#allocation2], 16
    %103 = vst.msk [vmem:[%s102 + $0x1] sm:$0xff] %vm34, %v86
    %104 = vst.msk [vmem:[%s102 + $0x11] sm:$0xff] %vm34, %v87
    %105 = vst.msk [vmem:[%s102 + $0x21] sm:$0xff] %vm34, %v88
    %106 = vst.msk [vmem:[%s102 + $0x31] sm:$0xff] %vm34, %v89
    %107 = vst.msk [vmem:[%s102 + $0x41] sm:$0xff] %vm34, %v90
    %108 = vst.msk [vmem:[%s102 + $0x51] sm:$0xff] %vm34, %v91
    %109 = vst.msk [vmem:[%s102 + $0x61] sm:$0xff] %vm34, %v92
    %110 = vst.msk [vmem:[%s102 + $0x71] sm:$0xff] %vm34, %v93
    %111 = vst.msk [vmem:[%s102 + $0xa1] sm:$0xff] %vm34, %v94
    %112 = vst.msk [vmem:[%s102 + $0xb1] sm:$0xff] %vm34, %v95
    %113 = vst.msk [vmem:[%s102 + $0xc1] sm:$0xff] %vm34, %v96
    %114 = vst.msk [vmem:[%s102 + $0xd1] sm:$0xff] %vm34, %v97
    %115 = vst.msk [vmem:[%s102 + $0xe1] sm:$0xff] %vm34, %v98
    %116 = vst.msk [vmem:[%s102 + $0xf1] sm:$0xff] %vm34, %v99
    %117 = vst.msk [vmem:[%s102 + $0x101] sm:$0xff] %vm34, %v100
    %118 = vst.msk [vmem:[%s102 + $0x111] sm:$0xff] %vm34, %v101
    %v119 = vld [vmem:[#allocation2] sm:$0xff]
    %v120 = vld [vmem:[#allocation2 + $0x8] sm:$0x3]
    %v121 = vld [vmem:[#allocation2 + $0x10] sm:$0xff]
    %v122 = vld [vmem:[#allocation2 + $0x18] sm:$0x3]
    %v123 = vld [vmem:[#allocation2 + $0x20] sm:$0xff]
    %v124 = vld [vmem:[#allocation2 + $0x28] sm:$0x3]
    %v125 = vld [vmem:[#allocation2 + $0x30] sm:$0xff]
    %v126 = vld [vmem:[#allocation2 + $0x38] sm:$0x3]
    %v127 = vld [vmem:[#allocation2 + $0x40] sm:$0xff]
    %v128 = vld [vmem:[#allocation2 + $0x48] sm:$0x3]
    %v129 = vld [vmem:[#allocation2 + $0x50] sm:$0xff]
    %v130 = vld [vmem:[#allocation2 + $0x58] sm:$0x3]
    %v131 = vld [vmem:[#allocation2 + $0x60] sm:$0xff]
    %v132 = vld [vmem:[#allocation2 + $0x68] sm:$0x3]
    %v133 = vld [vmem:[#allocation2 + $0x70] sm:$0xff]
    %v134 = vld [vmem:[#allocation2 + $0x78] sm:$0x3]
    %v135 = vld [vmem:[#allocation2 + $0x80] sm:$0xff]
    %v136 = vld [vmem:[#allocation2 + $0x88] sm:$0x3]
    %v137 = vld [vmem:[#allocation2 + $0x90] sm:$0xff]
    %v138 = vld [vmem:[#allocation2 + $0x98] sm:$0x3]
    %v139 = vld [vmem:[#allocation2 + $0xa0] sm:$0xff]
    %v140 = vld [vmem:[#allocation2 + $0xa8] sm:$0x3]
    %v141 = vld [vmem:[#allocation2 + $0xb0] sm:$0xff]
    %v142 = vld [vmem:[#allocation2 + $0xb8] sm:$0x3]
    %v143 = vld [vmem:[#allocation2 + $0xc0] sm:$0xff]
    %v144 = vld [vmem:[#allocation2 + $0xc8] sm:$0x3]
    %v145 = vld [vmem:[#allocation2 + $0xd0] sm:$0xff]
    %v146 = vld [vmem:[#allocation2 + $0xd8] sm:$0x3]
    %v147 = vld [vmem:[#allocation2 + $0xe0] sm:$0xff]
    %v148 = vld [vmem:[#allocation2 + $0xe8] sm:$0x3]
    %v149 = vld [vmem:[#allocation2 + $0xf0] sm:$0xff]
    %v150 = vld [vmem:[#allocation2 + $0xf8] sm:$0x3]
    %v151 = vld [vmem:[#allocation2 + $0x100] sm:$0xff]
    %v152 = vld [vmem:[#allocation2 + $0x108] sm:$0x3]
    %v153 = vld [vmem:[#allocation2 + $0x110] sm:$0xff]
    %v154 = vld [vmem:[#allocation2 + $0x118] sm:$0x3]
    %v155 = vld [vmem:[#allocation2 + $0x120] sm:$0xff]
    %v156 = vld [vmem:[#allocation2 + $0x128] sm:$0x3]
    %v157 = vld [vmem:[#allocation2 + $0x130] sm:$0xff]
    %v158 = vld [vmem:[#allocation2 + $0x138] sm:$0x3]
    %v159 = vpack.c.bf16 %v121, %v119
    %v160 = vpack.c.bf16 %v125, %v123
    %v161 = vpack.c.bf16 %v129, %v127
    %v162 = vpack.c.bf16 %v133, %v131
    %v163 = vpack.c.bf16 %v141, %v139
    %v164 = vpack.c.bf16 %v145, %v143
    %v165 = vpack.c.bf16 %v149, %v147
    %v166 = vpack.c.bf16 %v153, %v151
    %v167 = vld [vmem:[%s1] sm:$0xf]
    %v168 = vld [vmem:[%s1 + $0x4] sm:$0xf]
    %vm201 = vcmask 1046528
    %v202 = vrot.slane %v119, 1
    %v203 = vrot.slane %v120, 1
    %v204 = vsel %vm201, %v202, %v203
    %v205 = vrot.slane %v121, 1
    %v206 = vrot.slane %v122, 1
    %v207 = vsel %vm201, %v205, %v206
    %v208 = vrot.slane %v123, 1
    %v209 = vrot.slane %v124, 1
    %v210 = vsel %vm201, %v208, %v209
    %v211 = vrot.slane %v125, 1
    %v212 = vrot.slane %v126, 1
    %v213 = vsel %vm201, %v211, %v212
    %v214 = vrot.slane %v127, 1
    %v215 = vrot.slane %v128, 1
    %v216 = vsel %vm201, %v214, %v215
    %v217 = vrot.slane %v129, 1
    %v218 = vrot.slane %v130, 1
    %v219 = vsel %vm201, %v217, %v218
    %v220 = vrot.slane %v131, 1
    %v221 = vrot.slane %v132, 1
    %v222 = vsel %vm201, %v220, %v221
    %v223 = vrot.slane %v133, 1
    %v224 = vrot.slane %v134, 1
    %v225 = vsel %vm201, %v223, %v224
    %v226 = vrot.slane %v139, 1
    %v227 = vrot.slane %v140, 1
    %v228 = vsel %vm201, %v226, %v227
    %v229 = vrot.slane %v141, 1
    %v230 = vrot.slane %v142, 1
    %v231 = vsel %vm201, %v229, %v230
    %v232 = vrot.slane %v143, 1
    %v233 = vrot.slane %v144, 1
    %v234 = vsel %vm201, %v232, %v233
    %v235 = vrot.slane %v145, 1
    %v236 = vrot.slane %v146, 1
    %v237 = vsel %vm201, %v235, %v236
    %v238 = vrot.slane %v147, 1
    %v239 = vrot.slane %v148, 1
    %v240 = vsel %vm201, %v238, %v239
    %v241 = vrot.slane %v149, 1
    %v242 = vrot.slane %v150, 1
    %v243 = vsel %vm201, %v241, %v242
    %v244 = vrot.slane %v151, 1
    %v245 = vrot.slane %v152, 1
    %v246 = vsel %vm201, %v244, %v245
    %v247 = vrot.slane %v153, 1
    %v248 = vrot.slane %v154, 1
    %v249 = vsel %vm201, %v247, %v248
    %v266 = vpack.c.bf16 %v207, %v204
    %v267 = vpack.c.bf16 %v213, %v210
    %v268 = vpack.c.bf16 %v219, %v216
    %v269 = vpack.c.bf16 %v225, %v222
    %v270 = vpack.c.bf16 %v231, %v228
    %v271 = vpack.c.bf16 %v237, %v234
    %v272 = vpack.c.bf16 %v243, %v240
    %v273 = vpack.c.bf16 %v249, %v246
    %v274 = vld [vmem:[%s1 + $0x8] sm:$0xf]
    %v275 = vld [vmem:[%s1 + $0xc] sm:$0xf]
    %v278 = vunpack.c.l.b16 %v274
    %v279 = vunpack.c.l.b16 %v275
    %v280 = vpack.c.b16 %v279, %v278
    %v283 = vsel %vm34, %v266, 0
    %v286 = vsel %vm34, %v267, 0
    %v289 = vsel %vm34, %v268, 0
    %v292 = vsel %vm34, %v269, 0
    %v295 = vsel %vm34, %v270, 0
    %v298 = vsel %vm34, %v271, 0
    %v301 = vsel %vm34, %v272, 0
    %v304 = vsel %vm34, %v273, 0
    %306 = vmatprep.subr.bf16.mxu0 0
    %307 = vmatpush1.bf16.msra.mxu0 0
    %308 = vmatprep.subr.bf16.mxu0 0
    %309 = vmatpush1.bf16.msra.mxu0 0
    %310 = vmatprep.subr.bf16.mxu0 0
    %311 = vmatpush1.bf16.msra.mxu0 0
    %312 = vmatprep.subr.bf16.mxu0 0
    %313 = vmatpush1.bf16.msra.mxu0 0
    %314 = vmatprep.subr.bf16.mxu0 0
    %315 = vmatpush1.bf16.msra.mxu0 0
    %316 = vmatprep.subr.bf16.mxu0 0
    %317 = vmatpush1.bf16.msra.mxu0 0
    %318 = vmatprep.subr.bf16.mxu0 0
    %319 = vmatpush1.bf16.msra.mxu0 0
    %320 = vmatprep.subr.bf16.mxu0 0
    %321 = vmatpush1.bf16.msra.mxu0 %v280
    %322 = vmatprep.subr.bf16.mxu0 0
    %323 = vmatpush2.bf16.msra.mxu0 0
    %324 = vmatprep.subr.bf16.mxu0 0
    %325 = vmatpush2.bf16.msra.mxu0 0
    %326 = vmatprep.subr.bf16.mxu0 0
    %327 = vmatpush2.bf16.msra.mxu0 0
    %328 = vmatprep.subr.bf16.mxu0 0
    %329 = vmatpush2.bf16.msra.mxu0 0
    %330 = vmatprep.subr.bf16.mxu0 0
    %331 = vmatpush2.bf16.msra.mxu0 0
    %332 = vmatprep.subr.bf16.mxu0 0
    %333 = vmatpush2.bf16.msra.mxu0 0
    %334 = vmatprep.subr.bf16.mxu0 0
    %335 = vmatpush2.bf16.msra.mxu0 0
    %336 = vmatprep.subr.bf16.mxu0 0
    %337 = vmatpush2.bf16.msra.mxu0 0
    %338 = vmatprep.mubr.bf16.mxu0 0
    %339 = vmatmul.mubr.bf16.gmra.mxu0 %v283
    %v340 = vpop.f32.mrf.mxu0
    %v341 = vadd.f32 0.0, %v340
    %v342 = vpop.f32.mrf.mxu0
    %v343 = vpop.f32.mrf.mxu0
    %v344 = vadd.f32 0.0, %v343
    %v345 = vpop.f32.mrf.mxu0
    %346 = vmatprep.mubr.bf16.mxu0 0
    %347 = vmatmul.mubr.bf16.gmra.mxu0 %v286
    %v348 = vpop.f32.mrf.mxu0
    %v349 = vadd.f32 0.0, %v348
    %v350 = vpop.f32.mrf.mxu0
    %v351 = vpop.f32.mrf.mxu0
    %v352 = vadd.f32 0.0, %v351
    %v353 = vpop.f32.mrf.mxu0
    %354 = vmatprep.mubr.bf16.mxu0 0
    %355 = vmatmul.mubr.bf16.gmra.mxu0 %v289
    %v356 = vpop.f32.mrf.mxu0
    %v357 = vadd.f32 0.0, %v356
    %v358 = vpop.f32.mrf.mxu0
    %v359 = vpop.f32.mrf.mxu0
    %v360 = vadd.f32 0.0, %v359
    %v361 = vpop.f32.mrf.mxu0
    %362 = vmatprep.mubr.bf16.mxu0 0
    %363 = vmatmul.mubr.bf16.gmra.mxu0 %v292
    %v364 = vpop.f32.mrf.mxu0
    %v365 = vadd.f32 0.0, %v364
    %v366 = vpop.f32.mrf.mxu0
    %v367 = vpop.f32.mrf.mxu0
    %v368 = vadd.f32 0.0, %v367
    %v369 = vpop.f32.mrf.mxu0
    %370 = vmatprep.mubr.bf16.mxu0 0
    %371 = vmatmul.mubr.bf16.gmra.mxu0 %v295
    %v372 = vpop.f32.mrf.mxu0
    %v373 = vadd.f32 0.0, %v372
    %v374 = vpop.f32.mrf.mxu0
    %v375 = vpop.f32.mrf.mxu0
    %v376 = vadd.f32 0.0, %v375
    %v377 = vpop.f32.mrf.mxu0
    %378 = vmatprep.mubr.bf16.mxu0 0
    %379 = vmatmul.mubr.bf16.gmra.mxu0 %v298
    %v380 = vpop.f32.mrf.mxu0
    %v381 = vadd.f32 0.0, %v380
    %v382 = vpop.f32.mrf.mxu0
    %v383 = vpop.f32.mrf.mxu0
    %v384 = vadd.f32 0.0, %v383
    %v385 = vpop.f32.mrf.mxu0
    %386 = vmatprep.mubr.bf16.mxu0 0
    %387 = vmatmul.mubr.bf16.gmra.mxu0 %v301
    %v388 = vpop.f32.mrf.mxu0
    %v389 = vadd.f32 0.0, %v388
    %v390 = vpop.f32.mrf.mxu0
    %v391 = vpop.f32.mrf.mxu0
    %v392 = vadd.f32 0.0, %v391
    %v393 = vpop.f32.mrf.mxu0
    %394 = vmatprep.mubr.bf16.mxu0 0
    %395 = vmatmul.mubr.bf16.gmra.mxu0 %v304
    %v396 = vpop.f32.mrf.mxu0
    %v397 = vadd.f32 0.0, %v396
    %v398 = vpop.f32.mrf.mxu0
    %v399 = vpop.f32.mrf.mxu0
    %v400 = vadd.f32 0.0, %v399
    %v401 = vpop.f32.mrf.mxu0
    %402 = vdwg.mxu0
    %v405 = vunpack.c.l.b16 %v167
    %v406 = vunpack.c.l.b16 %v168
    %v407 = vpack.c.b16 %v406, %v405
    %v410 = vsel %vm34, %v159, 0
    %v413 = vsel %vm34, %v160, 0
    %v416 = vsel %vm34, %v161, 0
    %v419 = vsel %vm34, %v162, 0
    %v422 = vsel %vm34, %v163, 0
    %v425 = vsel %vm34, %v164, 0
    %v428 = vsel %vm34, %v165, 0
    %v431 = vsel %vm34, %v166, 0
    %433 = vmatprep.subr.bf16.mxu0 0
    %434 = vmatpush1.bf16.msra.mxu0 0
    %435 = vmatprep.subr.bf16.mxu0 0
    %436 = vmatpush1.bf16.msra.mxu0 0
    %437 = vmatprep.subr.bf16.mxu0 0
    %438 = vmatpush1.bf16.msra.mxu0 0
    %439 = vmatprep.subr.bf16.mxu0 0
    %440 = vmatpush1.bf16.msra.mxu0 0
    %441 = vmatprep.subr.bf16.mxu0 0
    %442 = vmatpush1.bf16.msra.mxu0 0
    %443 = vmatprep.subr.bf16.mxu0 0
    %444 = vmatpush1.bf16.msra.mxu0 0
    %445 = vmatprep.subr.bf16.mxu0 0
    %446 = vmatpush1.bf16.msra.mxu0 0
    %447 = vmatprep.subr.bf16.mxu0 0
    %448 = vmatpush1.bf16.msra.mxu0 %v407
    %449 = vmatprep.subr.bf16.mxu0 0
    %450 = vmatpush2.bf16.msra.mxu0 0
    %451 = vmatprep.subr.bf16.mxu0 0
    %452 = vmatpush2.bf16.msra.mxu0 0
    %453 = vmatprep.subr.bf16.mxu0 0
    %454 = vmatpush2.bf16.msra.mxu0 0
    %455 = vmatprep.subr.bf16.mxu0 0
    %456 = vmatpush2.bf16.msra.mxu0 0
    %457 = vmatprep.subr.bf16.mxu0 0
    %458 = vmatpush2.bf16.msra.mxu0 0
    %459 = vmatprep.subr.bf16.mxu0 0
    %460 = vmatpush2.bf16.msra.mxu0 0
    %461 = vmatprep.subr.bf16.mxu0 0
    %462 = vmatpush2.bf16.msra.mxu0 0
    %463 = vmatprep.subr.bf16.mxu0 0
    %464 = vmatpush2.bf16.msra.mxu0 0
    %465 = vmatprep.mubr.bf16.mxu0 0
    %466 = vmatmul.mubr.bf16.gmra.mxu0 %v410
    %v467 = vpop.f32.mrf.mxu0
    %v468 = vadd.f32 %v341, %v467
    %v469 = vpop.f32.mrf.mxu0
    %v470 = vpop.f32.mrf.mxu0
    %v471 = vadd.f32 %v344, %v470
    %v472 = vpop.f32.mrf.mxu0
    %473 = vmatprep.mubr.bf16.mxu0 0
    %474 = vmatmul.mubr.bf16.gmra.mxu0 %v413
    %v475 = vpop.f32.mrf.mxu0
    %v476 = vadd.f32 %v349, %v475
    %v477 = vpop.f32.mrf.mxu0
    %v478 = vpop.f32.mrf.mxu0
    %v479 = vadd.f32 %v352, %v478
    %v480 = vpop.f32.mrf.mxu0
    %481 = vmatprep.mubr.bf16.mxu0 0
    %482 = vmatmul.mubr.bf16.gmra.mxu0 %v416
    %v483 = vpop.f32.mrf.mxu0
    %v484 = vadd.f32 %v357, %v483
    %v485 = vpop.f32.mrf.mxu0
    %v486 = vpop.f32.mrf.mxu0
    %v487 = vadd.f32 %v360, %v486
    %v488 = vpop.f32.mrf.mxu0
    %489 = vmatprep.mubr.bf16.mxu0 0
    %490 = vmatmul.mubr.bf16.gmra.mxu0 %v419
    %v491 = vpop.f32.mrf.mxu0
    %v492 = vadd.f32 %v365, %v491
    %v493 = vpop.f32.mrf.mxu0
    %v494 = vpop.f32.mrf.mxu0
    %v495 = vadd.f32 %v368, %v494
    %v496 = vpop.f32.mrf.mxu0
    %497 = vmatprep.mubr.bf16.mxu0 0
    %498 = vmatmul.mubr.bf16.gmra.mxu0 %v422
    %v499 = vpop.f32.mrf.mxu0
    %v500 = vadd.f32 %v373, %v499
    %v501 = vpop.f32.mrf.mxu0
    %v502 = vpop.f32.mrf.mxu0
    %v503 = vadd.f32 %v376, %v502
    %v504 = vpop.f32.mrf.mxu0
    %505 = vmatprep.mubr.bf16.mxu0 0
    %506 = vmatmul.mubr.bf16.gmra.mxu0 %v425
    %v507 = vpop.f32.mrf.mxu0
    %v508 = vadd.f32 %v381, %v507
    %v509 = vpop.f32.mrf.mxu0
    %v510 = vpop.f32.mrf.mxu0
    %v511 = vadd.f32 %v384, %v510
    %v512 = vpop.f32.mrf.mxu0
    %513 = vmatprep.mubr.bf16.mxu0 0
    %514 = vmatmul.mubr.bf16.gmra.mxu0 %v428
    %v515 = vpop.f32.mrf.mxu0
    %v516 = vadd.f32 %v389, %v515
    %v517 = vpop.f32.mrf.mxu0
    %v518 = vpop.f32.mrf.mxu0
    %v519 = vadd.f32 %v392, %v518
    %v520 = vpop.f32.mrf.mxu0
    %521 = vmatprep.mubr.bf16.mxu0 0
    %522 = vmatmul.mubr.bf16.gmra.mxu0 %v431
    %v523 = vpop.f32.mrf.mxu0
    %v524 = vadd.f32 %v397, %v523
    %v525 = vpop.f32.mrf.mxu0
    %v526 = vpop.f32.mrf.mxu0
    %v527 = vadd.f32 %v400, %v526
    %v528 = vpop.f32.mrf.mxu0
    %529 = vdwg.mxu0
    %vm530 = vcmask 1045504
    %v531 = vrot.slane %v119, 2
    %v532 = vrot.slane %v120, 2
    %v533 = vsel %vm530, %v531, %v532
    %v534 = vrot.slane %v121, 2
    %v535 = vrot.slane %v122, 2
    %v536 = vsel %vm530, %v534, %v535
    %v537 = vrot.slane %v123, 2
    %v538 = vrot.slane %v124, 2
    %v539 = vsel %vm530, %v537, %v538
    %v540 = vrot.slane %v125, 2
    %v541 = vrot.slane %v126, 2
    %v542 = vsel %vm530, %v540, %v541
    %v543 = vrot.slane %v127, 2
    %v544 = vrot.slane %v128, 2
    %v545 = vsel %vm530, %v543, %v544
    %v546 = vrot.slane %v129, 2
    %v547 = vrot.slane %v130, 2
    %v548 = vsel %vm530, %v546, %v547
    %v549 = vrot.slane %v131, 2
    %v550 = vrot.slane %v132, 2
    %v551 = vsel %vm530, %v549, %v550
    %v552 = vrot.slane %v133, 2
    %v553 = vrot.slane %v134, 2
    %v554 = vsel %vm530, %v552, %v553
    %v555 = vrot.slane %v139, 2
    %v556 = vrot.slane %v140, 2
    %v557 = vsel %vm530, %v555, %v556
    %v558 = vrot.slane %v141, 2
    %v559 = vrot.slane %v142, 2
    %v560 = vsel %vm530, %v558, %v559
    %v561 = vrot.slane %v143, 2
    %v562 = vrot.slane %v144, 2
    %v563 = vsel %vm530, %v561, %v562
    %v564 = vrot.slane %v145, 2
    %v565 = vrot.slane %v146, 2
    %v566 = vsel %vm530, %v564, %v565
    %v567 = vrot.slane %v147, 2
    %v568 = vrot.slane %v148, 2
    %v569 = vsel %vm530, %v567, %v568
    %v570 = vrot.slane %v149, 2
    %v571 = vrot.slane %v150, 2
    %v572 = vsel %vm530, %v570, %v571
    %v573 = vrot.slane %v151, 2
    %v574 = vrot.slane %v152, 2
    %v575 = vsel %vm530, %v573, %v574
    %v576 = vrot.slane %v153, 2
    %v577 = vrot.slane %v154, 2
    %v578 = vsel %vm530, %v576, %v577
    %v595 = vpack.c.bf16 %v536, %v533
    %v596 = vpack.c.bf16 %v542, %v539
    %v597 = vpack.c.bf16 %v548, %v545
    %v598 = vpack.c.bf16 %v554, %v551
    %v599 = vpack.c.bf16 %v560, %v557
    %v600 = vpack.c.bf16 %v566, %v563
    %v601 = vpack.c.bf16 %v572, %v569
    %v602 = vpack.c.bf16 %v578, %v575
    %v603 = vld [vmem:[%s1 + $0x10] sm:$0xf]
    %v604 = vld [vmem:[%s1 + $0x14] sm:$0xf]
    %v607 = vunpack.c.l.b16 %v603
    %v608 = vunpack.c.l.b16 %v604
    %v609 = vpack.c.b16 %v608, %v607
    %v612 = vsel %vm34, %v595, 0
    %v615 = vsel %vm34, %v596, 0
    %v618 = vsel %vm34, %v597, 0
    %v621 = vsel %vm34, %v598, 0
    %v624 = vsel %vm34, %v599, 0
    %v627 = vsel %vm34, %v600, 0
    %v630 = vsel %vm34, %v601, 0
    %v633 = vsel %vm34, %v602, 0
    %635 = vmatprep.subr.bf16.mxu0 0
    %636 = vmatpush1.bf16.msra.mxu0 0
    %637 = vmatprep.subr.bf16.mxu0 0
    %638 = vmatpush1.bf16.msra.mxu0 0
    %639 = vmatprep.subr.bf16.mxu0 0
    %640 = vmatpush1.bf16.msra.mxu0 0
    %641 = vmatprep.subr.bf16.mxu0 0
    %642 = vmatpush1.bf16.msra.mxu0 0
    %643 = vmatprep.subr.bf16.mxu0 0
    %644 = vmatpush1.bf16.msra.mxu0 0
    %645 = vmatprep.subr.bf16.mxu0 0
    %646 = vmatpush1.bf16.msra.mxu0 0
    %647 = vmatprep.subr.bf16.mxu0 0
    %648 = vmatpush1.bf16.msra.mxu0 0
    %649 = vmatprep.subr.bf16.mxu0 0
    %650 = vmatpush1.bf16.msra.mxu0 %v609
    %651 = vmatprep.subr.bf16.mxu0 0
    %652 = vmatpush2.bf16.msra.mxu0 0
    %653 = vmatprep.subr.bf16.mxu0 0
    %654 = vmatpush2.bf16.msra.mxu0 0
    %655 = vmatprep.subr.bf16.mxu0 0
    %656 = vmatpush2.bf16.msra.mxu0 0
    %657 = vmatprep.subr.bf16.mxu0 0
    %658 = vmatpush2.bf16.msra.mxu0 0
    %659 = vmatprep.subr.bf16.mxu0 0
    %660 = vmatpush2.bf16.msra.mxu0 0
    %661 = vmatprep.subr.bf16.mxu0 0
    %662 = vmatpush2.bf16.msra.mxu0 0
    %663 = vmatprep.subr.bf16.mxu0 0
    %664 = vmatpush2.bf16.msra.mxu0 0
    %665 = vmatprep.subr.bf16.mxu0 0
    %666 = vmatpush2.bf16.msra.mxu0 0
    %667 = vmatprep.mubr.bf16.mxu0 0
    %668 = vmatmul.mubr.bf16.gmra.mxu0 %v612
    %v669 = vpop.f32.mrf.mxu0
    %v670 = vadd.f32 0.0, %v669
    %v671 = vpop.f32.mrf.mxu0
    %v672 = vpop.f32.mrf.mxu0
    %v673 = vadd.f32 0.0, %v672
    %v674 = vpop.f32.mrf.mxu0
    %675 = vmatprep.mubr.bf16.mxu0 0
    %676 = vmatmul.mubr.bf16.gmra.mxu0 %v615
    %v677 = vpop.f32.mrf.mxu0
    %v678 = vadd.f32 0.0, %v677
    %v679 = vpop.f32.mrf.mxu0
    %v680 = vpop.f32.mrf.mxu0
    %v681 = vadd.f32 0.0, %v680
    %v682 = vpop.f32.mrf.mxu0
    %683 = vmatprep.mubr.bf16.mxu0 0
    %684 = vmatmul.mubr.bf16.gmra.mxu0 %v618
    %v685 = vpop.f32.mrf.mxu0
    %v686 = vadd.f32 0.0, %v685
    %v687 = vpop.f32.mrf.mxu0
    %v688 = vpop.f32.mrf.mxu0
    %v689 = vadd.f32 0.0, %v688
    %v690 = vpop.f32.mrf.mxu0
    %691 = vmatprep.mubr.bf16.mxu0 0
    %692 = vmatmul.mubr.bf16.gmra.mxu0 %v621
    %v693 = vpop.f32.mrf.mxu0
    %v694 = vadd.f32 0.0, %v693
    %v695 = vpop.f32.mrf.mxu0
    %v696 = vpop.f32.mrf.mxu0
    %v697 = vadd.f32 0.0, %v696
    %v698 = vpop.f32.mrf.mxu0
    %699 = vmatprep.mubr.bf16.mxu0 0
    %700 = vmatmul.mubr.bf16.gmra.mxu0 %v624
    %v701 = vpop.f32.mrf.mxu0
    %v702 = vadd.f32 0.0, %v701
    %v703 = vpop.f32.mrf.mxu0
    %v704 = vpop.f32.mrf.mxu0
    %v705 = vadd.f32 0.0, %v704
    %v706 = vpop.f32.mrf.mxu0
    %707 = vmatprep.mubr.bf16.mxu0 0
    %708 = vmatmul.mubr.bf16.gmra.mxu0 %v627
    %v709 = vpop.f32.mrf.mxu0
    %v710 = vadd.f32 0.0, %v709
    %v711 = vpop.f32.mrf.mxu0
    %v712 = vpop.f32.mrf.mxu0
    %v713 = vadd.f32 0.0, %v712
    %v714 = vpop.f32.mrf.mxu0
    %715 = vmatprep.mubr.bf16.mxu0 0
    %716 = vmatmul.mubr.bf16.gmra.mxu0 %v630
    %v717 = vpop.f32.mrf.mxu0
    %v718 = vadd.f32 0.0, %v717
    %v719 = vpop.f32.mrf.mxu0
    %v720 = vpop.f32.mrf.mxu0
    %v721 = vadd.f32 0.0, %v720
    %v722 = vpop.f32.mrf.mxu0
    %723 = vmatprep.mubr.bf16.mxu0 0
    %724 = vmatmul.mubr.bf16.gmra.mxu0 %v633
    %v725 = vpop.f32.mrf.mxu0
    %v726 = vadd.f32 0.0, %v725
    %v727 = vpop.f32.mrf.mxu0
    %v728 = vpop.f32.mrf.mxu0
    %v729 = vadd.f32 0.0, %v728
    %v730 = vpop.f32.mrf.mxu0
    %731 = vdwg.mxu0
    %v732 = vadd.f32 %v468, %v670
    %v733 = vadd.f32 %v471, %v673
    %v734 = vadd.f32 %v476, %v678
    %v735 = vadd.f32 %v479, %v681
    %v736 = vadd.f32 %v484, %v686
    %v737 = vadd.f32 %v487, %v689
    %v738 = vadd.f32 %v492, %v694
    %v739 = vadd.f32 %v495, %v697
    %v740 = vadd.f32 %v500, %v702
    %v741 = vadd.f32 %v503, %v705
    %v742 = vadd.f32 %v508, %v710
    %v743 = vadd.f32 %v511, %v713
    %v744 = vadd.f32 %v516, %v718
    %v745 = vadd.f32 %v519, %v721
    %v746 = vadd.f32 %v524, %v726
    %v747 = vadd.f32 %v527, %v729
    %v748 = vpack.c.bf16 %v123, %v121
    %v749 = vpack.c.bf16 %v127, %v125
    %v750 = vpack.c.bf16 %v131, %v129
    %v751 = vpack.c.bf16 %v135, %v133
    %v752 = vpack.c.bf16 %v143, %v141
    %v753 = vpack.c.bf16 %v147, %v145
    %v754 = vpack.c.bf16 %v151, %v149
    %v755 = vpack.c.bf16 %v155, %v153
    %v756 = vld [vmem:[%s1 + $0x18] sm:$0xf]
    %v757 = vld [vmem:[%s1 + $0x1c] sm:$0xf]
    %v760 = vunpack.c.l.b16 %v756
    %v761 = vunpack.c.l.b16 %v757
    %v762 = vpack.c.b16 %v761, %v760
    %v765 = vsel %vm34, %v748, 0
    %v768 = vsel %vm34, %v749, 0
    %v771 = vsel %vm34, %v750, 0
    %v774 = vsel %vm34, %v751, 0
    %v777 = vsel %vm34, %v752, 0
    %v780 = vsel %vm34, %v753, 0
    %v783 = vsel %vm34, %v754, 0
    %v786 = vsel %vm34, %v755, 0
    %788 = vmatprep.subr.bf16.mxu0 0
    %789 = vmatpush1.bf16.msra.mxu0 0
    %790 = vmatprep.subr.bf16.mxu0 0
    %791 = vmatpush1.bf16.msra.mxu0 0
    %792 = vmatprep.subr.bf16.mxu0 0
    %793 = vmatpush1.bf16.msra.mxu0 0
    %794 = vmatprep.subr.bf16.mxu0 0
    %795 = vmatpush1.bf16.msra.mxu0 0
    %796 = vmatprep.subr.bf16.mxu0 0
    %797 = vmatpush1.bf16.msra.mxu0 0
    %798 = vmatprep.subr.bf16.mxu0 0
    %799 = vmatpush1.bf16.msra.mxu0 0
    %800 = vmatprep.subr.bf16.mxu0 0
    %801 = vmatpush1.bf16.msra.mxu0 0
    %802 = vmatprep.subr.bf16.mxu0 0
    %803 = vmatpush1.bf16.msra.mxu0 %v762
    %804 = vmatprep.subr.bf16.mxu0 0
    %805 = vmatpush2.bf16.msra.mxu0 0
    %806 = vmatprep.subr.bf16.mxu0 0
    %807 = vmatpush2.bf16.msra.mxu0 0
    %808 = vmatprep.subr.bf16.mxu0 0
    %809 = vmatpush2.bf16.msra.mxu0 0
    %810 = vmatprep.subr.bf16.mxu0 0
    %811 = vmatpush2.bf16.msra.mxu0 0
    %812 = vmatprep.subr.bf16.mxu0 0
    %813 = vmatpush2.bf16.msra.mxu0 0
    %814 = vmatprep.subr.bf16.mxu0 0
    %815 = vmatpush2.bf16.msra.mxu0 0
    %816 = vmatprep.subr.bf16.mxu0 0
    %817 = vmatpush2.bf16.msra.mxu0 0
    %818 = vmatprep.subr.bf16.mxu0 0
    %819 = vmatpush2.bf16.msra.mxu0 0
    %820 = vmatprep.mubr.bf16.mxu0 0
    %821 = vmatmul.mubr.bf16.gmra.mxu0 %v765
    %v822 = vpop.f32.mrf.mxu0
    %v823 = vadd.f32 0.0, %v822
    %v824 = vpop.f32.mrf.mxu0
    %v825 = vpop.f32.mrf.mxu0
    %v826 = vadd.f32 0.0, %v825
    %v827 = vpop.f32.mrf.mxu0
    %828 = vmatprep.mubr.bf16.mxu0 0
    %829 = vmatmul.mubr.bf16.gmra.mxu0 %v768
    %v830 = vpop.f32.mrf.mxu0
    %v831 = vadd.f32 0.0, %v830
    %v832 = vpop.f32.mrf.mxu0
    %v833 = vpop.f32.mrf.mxu0
    %v834 = vadd.f32 0.0, %v833
    %v835 = vpop.f32.mrf.mxu0
    %836 = vmatprep.mubr.bf16.mxu0 0
    %837 = vmatmul.mubr.bf16.gmra.mxu0 %v771
    %v838 = vpop.f32.mrf.mxu0
    %v839 = vadd.f32 0.0, %v838
    %v840 = vpop.f32.mrf.mxu0
    %v841 = vpop.f32.mrf.mxu0
    %v842 = vadd.f32 0.0, %v841
    %v843 = vpop.f32.mrf.mxu0
    %844 = vmatprep.mubr.bf16.mxu0 0
    %845 = vmatmul.mubr.bf16.gmra.mxu0 %v774
    %v846 = vpop.f32.mrf.mxu0
    %v847 = vadd.f32 0.0, %v846
    %v848 = vpop.f32.mrf.mxu0
    %v849 = vpop.f32.mrf.mxu0
    %v850 = vadd.f32 0.0, %v849
    %v851 = vpop.f32.mrf.mxu0
    %852 = vmatprep.mubr.bf16.mxu0 0
    %853 = vmatmul.mubr.bf16.gmra.mxu0 %v777
    %v854 = vpop.f32.mrf.mxu0
    %v855 = vadd.f32 0.0, %v854
    %v856 = vpop.f32.mrf.mxu0
    %v857 = vpop.f32.mrf.mxu0
    %v858 = vadd.f32 0.0, %v857
    %v859 = vpop.f32.mrf.mxu0
    %860 = vmatprep.mubr.bf16.mxu0 0
    %861 = vmatmul.mubr.bf16.gmra.mxu0 %v780
    %v862 = vpop.f32.mrf.mxu0
    %v863 = vadd.f32 0.0, %v862
    %v864 = vpop.f32.mrf.mxu0
    %v865 = vpop.f32.mrf.mxu0
    %v866 = vadd.f32 0.0, %v865
    %v867 = vpop.f32.mrf.mxu0
    %868 = vmatprep.mubr.bf16.mxu0 0
    %869 = vmatmul.mubr.bf16.gmra.mxu0 %v783
    %v870 = vpop.f32.mrf.mxu0
    %v871 = vadd.f32 0.0, %v870
    %v872 = vpop.f32.mrf.mxu0
    %v873 = vpop.f32.mrf.mxu0
    %v874 = vadd.f32 0.0, %v873
    %v875 = vpop.f32.mrf.mxu0
    %876 = vmatprep.mubr.bf16.mxu0 0
    %877 = vmatmul.mubr.bf16.gmra.mxu0 %v786
    %v878 = vpop.f32.mrf.mxu0
    %v879 = vadd.f32 0.0, %v878
    %v880 = vpop.f32.mrf.mxu0
    %v881 = vpop.f32.mrf.mxu0
    %v882 = vadd.f32 0.0, %v881
    %v883 = vpop.f32.mrf.mxu0
    %884 = vdwg.mxu0
    %v885 = vadd.f32 %v732, %v823
    %v886 = vadd.f32 %v733, %v826
    %v887 = vadd.f32 %v734, %v831
    %v888 = vadd.f32 %v735, %v834
    %v889 = vadd.f32 %v736, %v839
    %v890 = vadd.f32 %v737, %v842
    %v891 = vadd.f32 %v738, %v847
    %v892 = vadd.f32 %v739, %v850
    %v893 = vadd.f32 %v740, %v855
    %v894 = vadd.f32 %v741, %v858
    %v895 = vadd.f32 %v742, %v863
    %v896 = vadd.f32 %v743, %v866
    %v897 = vadd.f32 %v744, %v871
    %v898 = vadd.f32 %v745, %v874
    %v899 = vadd.f32 %v746, %v879
    %v900 = vadd.f32 %v747, %v882
    %v905 = vrot.slane %v135, 1
    %v906 = vrot.slane %v136, 1
    %v907 = vsel %vm201, %v905, %v906
    %v908 = vrot.slane %v155, 1
    %v909 = vrot.slane %v156, 1
    %v910 = vsel %vm201, %v908, %v909
    %v913 = vpack.c.bf16 %v210, %v207
    %v914 = vpack.c.bf16 %v216, %v213
    %v915 = vpack.c.bf16 %v222, %v219
    %v916 = vpack.c.bf16 %v907, %v225
    %v917 = vpack.c.bf16 %v234, %v231
    %v918 = vpack.c.bf16 %v240, %v237
    %v919 = vpack.c.bf16 %v246, %v243
    %v920 = vpack.c.bf16 %v910, %v249
    %v921 = vld [vmem:[%s1 + $0x20] sm:$0xf]
    %v922 = vld [vmem:[%s1 + $0x24] sm:$0xf]
    %v925 = vunpack.c.l.b16 %v921
    %v926 = vunpack.c.l.b16 %v922
    %v927 = vpack.c.b16 %v926, %v925
    %v930 = vsel %vm34, %v913, 0
    %v933 = vsel %vm34, %v914, 0
    %v936 = vsel %vm34, %v915, 0
    %v939 = vsel %vm34, %v916, 0
    %v942 = vsel %vm34, %v917, 0
    %v945 = vsel %vm34, %v918, 0
    %v948 = vsel %vm34, %v919, 0
    %v951 = vsel %vm34, %v920, 0
    %953 = vmatprep.subr.bf16.mxu0 0
    %954 = vmatpush1.bf16.msra.mxu0 0
    %955 = vmatprep.subr.bf16.mxu0 0
    %956 = vmatpush1.bf16.msra.mxu0 0
    %957 = vmatprep.subr.bf16.mxu0 0
    %958 = vmatpush1.bf16.msra.mxu0 0
    %959 = vmatprep.subr.bf16.mxu0 0
    %960 = vmatpush1.bf16.msra.mxu0 0
    %961 = vmatprep.subr.bf16.mxu0 0
    %962 = vmatpush1.bf16.msra.mxu0 0
    %963 = vmatprep.subr.bf16.mxu0 0
    %964 = vmatpush1.bf16.msra.mxu0 0
    %965 = vmatprep.subr.bf16.mxu0 0
    %966 = vmatpush1.bf16.msra.mxu0 0
    %967 = vmatprep.subr.bf16.mxu0 0
    %968 = vmatpush1.bf16.msra.mxu0 %v927
    %969 = vmatprep.subr.bf16.mxu0 0
    %970 = vmatpush2.bf16.msra.mxu0 0
    %971 = vmatprep.subr.bf16.mxu0 0
    %972 = vmatpush2.bf16.msra.mxu0 0
    %973 = vmatprep.subr.bf16.mxu0 0
    %974 = vmatpush2.bf16.msra.mxu0 0
    %975 = vmatprep.subr.bf16.mxu0 0
    %976 = vmatpush2.bf16.msra.mxu0 0
    %977 = vmatprep.subr.bf16.mxu0 0
    %978 = vmatpush2.bf16.msra.mxu0 0
    %979 = vmatprep.subr.bf16.mxu0 0
    %980 = vmatpush2.bf16.msra.mxu0 0
    %981 = vmatprep.subr.bf16.mxu0 0
    %982 = vmatpush2.bf16.msra.mxu0 0
    %983 = vmatprep.subr.bf16.mxu0 0
    %984 = vmatpush2.bf16.msra.mxu0 0
    %985 = vmatprep.mubr.bf16.mxu0 0
    %986 = vmatmul.mubr.bf16.gmra.mxu0 %v930
    %v987 = vpop.f32.mrf.mxu0
    %v988 = vadd.f32 0.0, %v987
    %v989 = vpop.f32.mrf.mxu0
    %v990 = vpop.f32.mrf.mxu0
    %v991 = vadd.f32 0.0, %v990
    %v992 = vpop.f32.mrf.mxu0
    %993 = vmatprep.mubr.bf16.mxu0 0
    %994 = vmatmul.mubr.bf16.gmra.mxu0 %v933
    %v995 = vpop.f32.mrf.mxu0
    %v996 = vadd.f32 0.0, %v995
    %v997 = vpop.f32.mrf.mxu0
    %v998 = vpop.f32.mrf.mxu0
    %v999 = vadd.f32 0.0, %v998
    %v1000 = vpop.f32.mrf.mxu0
    %1001 = vmatprep.mubr.bf16.mxu0 0
    %1002 = vmatmul.mubr.bf16.gmra.mxu0 %v936
    %v1003 = vpop.f32.mrf.mxu0
    %v1004 = vadd.f32 0.0, %v1003
    %v1005 = vpop.f32.mrf.mxu0
    %v1006 = vpop.f32.mrf.mxu0
    %v1007 = vadd.f32 0.0, %v1006
    %v1008 = vpop.f32.mrf.mxu0
    %1009 = vmatprep.mubr.bf16.mxu0 0
    %1010 = vmatmul.mubr.bf16.gmra.mxu0 %v939
    %v1011 = vpop.f32.mrf.mxu0
    %v1012 = vadd.f32 0.0, %v1011
    %v1013 = vpop.f32.mrf.mxu0
    %v1014 = vpop.f32.mrf.mxu0
    %v1015 = vadd.f32 0.0, %v1014
    %v1016 = vpop.f32.mrf.mxu0
    %1017 = vmatprep.mubr.bf16.mxu0 0
    %1018 = vmatmul.mubr.bf16.gmra.mxu0 %v942
    %v1019 = vpop.f32.mrf.mxu0
    %v1020 = vadd.f32 0.0, %v1019
    %v1021 = vpop.f32.mrf.mxu0
    %v1022 = vpop.f32.mrf.mxu0
    %v1023 = vadd.f32 0.0, %v1022
    %v1024 = vpop.f32.mrf.mxu0
    %1025 = vmatprep.mubr.bf16.mxu0 0
    %1026 = vmatmul.mubr.bf16.gmra.mxu0 %v945
    %v1027 = vpop.f32.mrf.mxu0
    %v1028 = vadd.f32 0.0, %v1027
    %v1029 = vpop.f32.mrf.mxu0
    %v1030 = vpop.f32.mrf.mxu0
    %v1031 = vadd.f32 0.0, %v1030
    %v1032 = vpop.f32.mrf.mxu0
    %1033 = vmatprep.mubr.bf16.mxu0 0
    %1034 = vmatmul.mubr.bf16.gmra.mxu0 %v948
    %v1035 = vpop.f32.mrf.mxu0
    %v1036 = vadd.f32 0.0, %v1035
    %v1037 = vpop.f32.mrf.mxu0
    %v1038 = vpop.f32.mrf.mxu0
    %v1039 = vadd.f32 0.0, %v1038
    %v1040 = vpop.f32.mrf.mxu0
    %1041 = vmatprep.mubr.bf16.mxu0 0
    %1042 = vmatmul.mubr.bf16.gmra.mxu0 %v951
    %v1043 = vpop.f32.mrf.mxu0
    %v1044 = vadd.f32 0.0, %v1043
    %v1045 = vpop.f32.mrf.mxu0
    %v1046 = vpop.f32.mrf.mxu0
    %v1047 = vadd.f32 0.0, %v1046
    %v1048 = vpop.f32.mrf.mxu0
    %1049 = vdwg.mxu0
    %v1050 = vadd.f32 %v885, %v988
    %v1051 = vadd.f32 %v886, %v991
    %v1052 = vadd.f32 %v887, %v996
    %v1053 = vadd.f32 %v888, %v999
    %v1054 = vadd.f32 %v889, %v1004
    %v1055 = vadd.f32 %v890, %v1007
    %v1056 = vadd.f32 %v891, %v1012
    %v1057 = vadd.f32 %v892, %v1015
    %v1058 = vadd.f32 %v893, %v1020
    %v1059 = vadd.f32 %v894, %v1023
    %v1060 = vadd.f32 %v895, %v1028
    %v1061 = vadd.f32 %v896, %v1031
    %v1062 = vadd.f32 %v897, %v1036
    %v1063 = vadd.f32 %v898, %v1039
    %v1064 = vadd.f32 %v899, %v1044
    %v1065 = vadd.f32 %v900, %v1047
    %v1066 = vrot.slane %v135, 2
    %v1067 = vrot.slane %v136, 2
    %v1068 = vsel %vm530, %v1066, %v1067
    %v1069 = vrot.slane %v155, 2
    %v1070 = vrot.slane %v156, 2
    %v1071 = vsel %vm530, %v1069, %v1070
    %v1074 = vpack.c.bf16 %v539, %v536
    %v1075 = vpack.c.bf16 %v545, %v542
    %v1076 = vpack.c.bf16 %v551, %v548
    %v1077 = vpack.c.bf16 %v1068, %v554
    %v1078 = vpack.c.bf16 %v563, %v560
    %v1079 = vpack.c.bf16 %v569, %v566
    %v1080 = vpack.c.bf16 %v575, %v572
    %v1081 = vpack.c.bf16 %v1071, %v578
    %v1082 = vld [vmem:[%s1 + $0x28] sm:$0xf]
    %v1083 = vld [vmem:[%s1 + $0x2c] sm:$0xf]
    %v1086 = vunpack.c.l.b16 %v1082
    %v1087 = vunpack.c.l.b16 %v1083
    %v1088 = vpack.c.b16 %v1087, %v1086
    %v1091 = vsel %vm34, %v1074, 0
    %v1094 = vsel %vm34, %v1075, 0
    %v1097 = vsel %vm34, %v1076, 0
    %v1100 = vsel %vm34, %v1077, 0
    %v1103 = vsel %vm34, %v1078, 0
    %v1106 = vsel %vm34, %v1079, 0
    %v1109 = vsel %vm34, %v1080, 0
    %v1112 = vsel %vm34, %v1081, 0
    %1114 = vmatprep.subr.bf16.mxu0 0
    %1115 = vmatpush1.bf16.msra.mxu0 0
    %1116 = vmatprep.subr.bf16.mxu0 0
    %1117 = vmatpush1.bf16.msra.mxu0 0
    %1118 = vmatprep.subr.bf16.mxu0 0
    %1119 = vmatpush1.bf16.msra.mxu0 0
    %1120 = vmatprep.subr.bf16.mxu0 0
    %1121 = vmatpush1.bf16.msra.mxu0 0
    %1122 = vmatprep.subr.bf16.mxu0 0
    %1123 = vmatpush1.bf16.msra.mxu0 0
    %1124 = vmatprep.subr.bf16.mxu0 0
    %1125 = vmatpush1.bf16.msra.mxu0 0
    %1126 = vmatprep.subr.bf16.mxu0 0
    %1127 = vmatpush1.bf16.msra.mxu0 0
    %1128 = vmatprep.subr.bf16.mxu0 0
    %1129 = vmatpush1.bf16.msra.mxu0 %v1088
    %1130 = vmatprep.subr.bf16.mxu0 0
    %1131 = vmatpush2.bf16.msra.mxu0 0
    %1132 = vmatprep.subr.bf16.mxu0 0
    %1133 = vmatpush2.bf16.msra.mxu0 0
    %1134 = vmatprep.subr.bf16.mxu0 0
    %1135 = vmatpush2.bf16.msra.mxu0 0
    %1136 = vmatprep.subr.bf16.mxu0 0
    %1137 = vmatpush2.bf16.msra.mxu0 0
    %1138 = vmatprep.subr.bf16.mxu0 0
    %1139 = vmatpush2.bf16.msra.mxu0 0
    %1140 = vmatprep.subr.bf16.mxu0 0
    %1141 = vmatpush2.bf16.msra.mxu0 0
    %1142 = vmatprep.subr.bf16.mxu0 0
    %1143 = vmatpush2.bf16.msra.mxu0 0
    %1144 = vmatprep.subr.bf16.mxu0 0
    %1145 = vmatpush2.bf16.msra.mxu0 0
    %1146 = vmatprep.mubr.bf16.mxu0 0
    %1147 = vmatmul.mubr.bf16.gmra.mxu0 %v1091
    %v1148 = vpop.f32.mrf.mxu0
    %v1149 = vadd.f32 0.0, %v1148
    %v1150 = vpop.f32.mrf.mxu0
    %v1151 = vpop.f32.mrf.mxu0
    %v1152 = vadd.f32 0.0, %v1151
    %v1153 = vpop.f32.mrf.mxu0
    %1154 = vmatprep.mubr.bf16.mxu0 0
    %1155 = vmatmul.mubr.bf16.gmra.mxu0 %v1094
    %v1156 = vpop.f32.mrf.mxu0
    %v1157 = vadd.f32 0.0, %v1156
    %v1158 = vpop.f32.mrf.mxu0
    %v1159 = vpop.f32.mrf.mxu0
    %v1160 = vadd.f32 0.0, %v1159
    %v1161 = vpop.f32.mrf.mxu0
    %1162 = vmatprep.mubr.bf16.mxu0 0
    %1163 = vmatmul.mubr.bf16.gmra.mxu0 %v1097
    %v1164 = vpop.f32.mrf.mxu0
    %v1165 = vadd.f32 0.0, %v1164
    %v1166 = vpop.f32.mrf.mxu0
    %v1167 = vpop.f32.mrf.mxu0
    %v1168 = vadd.f32 0.0, %v1167
    %v1169 = vpop.f32.mrf.mxu0
    %1170 = vmatprep.mubr.bf16.mxu0 0
    %1171 = vmatmul.mubr.bf16.gmra.mxu0 %v1100
    %v1172 = vpop.f32.mrf.mxu0
    %v1173 = vadd.f32 0.0, %v1172
    %v1174 = vpop.f32.mrf.mxu0
    %v1175 = vpop.f32.mrf.mxu0
    %v1176 = vadd.f32 0.0, %v1175
    %v1177 = vpop.f32.mrf.mxu0
    %1178 = vmatprep.mubr.bf16.mxu0 0
    %1179 = vmatmul.mubr.bf16.gmra.mxu0 %v1103
    %v1180 = vpop.f32.mrf.mxu0
    %v1181 = vadd.f32 0.0, %v1180
    %v1182 = vpop.f32.mrf.mxu0
    %v1183 = vpop.f32.mrf.mxu0
    %v1184 = vadd.f32 0.0, %v1183
    %v1185 = vpop.f32.mrf.mxu0
    %1186 = vmatprep.mubr.bf16.mxu0 0
    %1187 = vmatmul.mubr.bf16.gmra.mxu0 %v1106
    %v1188 = vpop.f32.mrf.mxu0
    %v1189 = vadd.f32 0.0, %v1188
    %v1190 = vpop.f32.mrf.mxu0
    %v1191 = vpop.f32.mrf.mxu0
    %v1192 = vadd.f32 0.0, %v1191
    %v1193 = vpop.f32.mrf.mxu0
    %1194 = vmatprep.mubr.bf16.mxu0 0
    %1195 = vmatmul.mubr.bf16.gmra.mxu0 %v1109
    %v1196 = vpop.f32.mrf.mxu0
    %v1197 = vadd.f32 0.0, %v1196
    %v1198 = vpop.f32.mrf.mxu0
    %v1199 = vpop.f32.mrf.mxu0
    %v1200 = vadd.f32 0.0, %v1199
    %v1201 = vpop.f32.mrf.mxu0
    %1202 = vmatprep.mubr.bf16.mxu0 0
    %1203 = vmatmul.mubr.bf16.gmra.mxu0 %v1112
    %v1204 = vpop.f32.mrf.mxu0
    %v1205 = vadd.f32 0.0, %v1204
    %v1206 = vpop.f32.mrf.mxu0
    %v1207 = vpop.f32.mrf.mxu0
    %v1208 = vadd.f32 0.0, %v1207
    %v1209 = vpop.f32.mrf.mxu0
    %1210 = vdwg.mxu0
    %v1211 = vadd.f32 %v1050, %v1149
    %v1212 = vadd.f32 %v1051, %v1152
    %v1213 = vadd.f32 %v1052, %v1157
    %v1214 = vadd.f32 %v1053, %v1160
    %v1215 = vadd.f32 %v1054, %v1165
    %v1216 = vadd.f32 %v1055, %v1168
    %v1217 = vadd.f32 %v1056, %v1173
    %v1218 = vadd.f32 %v1057, %v1176
    %v1219 = vadd.f32 %v1058, %v1181
    %v1220 = vadd.f32 %v1059, %v1184
    %v1221 = vadd.f32 %v1060, %v1189
    %v1222 = vadd.f32 %v1061, %v1192
    %v1223 = vadd.f32 %v1062, %v1197
    %v1224 = vadd.f32 %v1063, %v1200
    %v1225 = vadd.f32 %v1064, %v1205
    %v1226 = vadd.f32 %v1065, %v1208
    %v1227 = vpack.c.bf16 %v137, %v135
    %v1228 = vpack.c.bf16 %v157, %v155
    %v1229 = vld [vmem:[%s1 + $0x30] sm:$0xf]
    %v1230 = vld [vmem:[%s1 + $0x34] sm:$0xf]
    %v1233 = vunpack.c.l.b16 %v1229
    %v1234 = vunpack.c.l.b16 %v1230
    %v1235 = vpack.c.b16 %v1234, %v1233
    %v1238 = vsel %vm34, %v1227, 0
    %v1241 = vsel %vm34, %v1228, 0
    %1243 = vmatprep.subr.bf16.mxu0 0
    %1244 = vmatpush1.bf16.msra.mxu0 0
    %1245 = vmatprep.subr.bf16.mxu0 0
    %1246 = vmatpush1.bf16.msra.mxu0 0
    %1247 = vmatprep.subr.bf16.mxu0 0
    %1248 = vmatpush1.bf16.msra.mxu0 0
    %1249 = vmatprep.subr.bf16.mxu0 0
    %1250 = vmatpush1.bf16.msra.mxu0 0
    %1251 = vmatprep.subr.bf16.mxu0 0
    %1252 = vmatpush1.bf16.msra.mxu0 0
    %1253 = vmatprep.subr.bf16.mxu0 0
    %1254 = vmatpush1.bf16.msra.mxu0 0
    %1255 = vmatprep.subr.bf16.mxu0 0
    %1256 = vmatpush1.bf16.msra.mxu0 0
    %1257 = vmatprep.subr.bf16.mxu0 0
    %1258 = vmatpush1.bf16.msra.mxu0 %v1235
    %1259 = vmatprep.subr.bf16.mxu0 0
    %1260 = vmatpush2.bf16.msra.mxu0 0
    %1261 = vmatprep.subr.bf16.mxu0 0
    %1262 = vmatpush2.bf16.msra.mxu0 0
    %1263 = vmatprep.subr.bf16.mxu0 0
    %1264 = vmatpush2.bf16.msra.mxu0 0
    %1265 = vmatprep.subr.bf16.mxu0 0
    %1266 = vmatpush2.bf16.msra.mxu0 0
    %1267 = vmatprep.subr.bf16.mxu0 0
    %1268 = vmatpush2.bf16.msra.mxu0 0
    %1269 = vmatprep.subr.bf16.mxu0 0
    %1270 = vmatpush2.bf16.msra.mxu0 0
    %1271 = vmatprep.subr.bf16.mxu0 0
    %1272 = vmatpush2.bf16.msra.mxu0 0
    %1273 = vmatprep.subr.bf16.mxu0 0
    %1274 = vmatpush2.bf16.msra.mxu0 0
    %1275 = vmatprep.mubr.bf16.mxu0 0
    %1276 = vmatmul.mubr.bf16.gmra.mxu0 %v413
    %v1277 = vpop.f32.mrf.mxu0
    %v1278 = vadd.f32 0.0, %v1277
    %v1279 = vpop.f32.mrf.mxu0
    %v1280 = vpop.f32.mrf.mxu0
    %v1281 = vadd.f32 0.0, %v1280
    %v1282 = vpop.f32.mrf.mxu0
    %1283 = vmatprep.mubr.bf16.mxu0 0
    %1284 = vmatmul.mubr.bf16.gmra.mxu0 %v416
    %v1285 = vpop.f32.mrf.mxu0
    %v1286 = vadd.f32 0.0, %v1285
    %v1287 = vpop.f32.mrf.mxu0
    %v1288 = vpop.f32.mrf.mxu0
    %v1289 = vadd.f32 0.0, %v1288
    %v1290 = vpop.f32.mrf.mxu0
    %1291 = vmatprep.mubr.bf16.mxu0 0
    %1292 = vmatmul.mubr.bf16.gmra.mxu0 %v419
    %v1293 = vpop.f32.mrf.mxu0
    %v1294 = vadd.f32 0.0, %v1293
    %v1295 = vpop.f32.mrf.mxu0
    %v1296 = vpop.f32.mrf.mxu0
    %v1297 = vadd.f32 0.0, %v1296
    %v1298 = vpop.f32.mrf.mxu0
    %1299 = vmatprep.mubr.bf16.mxu0 0
    %1300 = vmatmul.mubr.bf16.gmra.mxu0 %v1238
    %v1301 = vpop.f32.mrf.mxu0
    %v1302 = vadd.f32 0.0, %v1301
    %v1303 = vpop.f32.mrf.mxu0
    %v1304 = vpop.f32.mrf.mxu0
    %v1305 = vadd.f32 0.0, %v1304
    %v1306 = vpop.f32.mrf.mxu0
    %1307 = vmatprep.mubr.bf16.mxu0 0
    %1308 = vmatmul.mubr.bf16.gmra.mxu0 %v425
    %v1309 = vpop.f32.mrf.mxu0
    %v1310 = vadd.f32 0.0, %v1309
    %v1311 = vpop.f32.mrf.mxu0
    %v1312 = vpop.f32.mrf.mxu0
    %v1313 = vadd.f32 0.0, %v1312
    %v1314 = vpop.f32.mrf.mxu0
    %1315 = vmatprep.mubr.bf16.mxu0 0
    %1316 = vmatmul.mubr.bf16.gmra.mxu0 %v428
    %v1317 = vpop.f32.mrf.mxu0
    %v1318 = vadd.f32 0.0, %v1317
    %v1319 = vpop.f32.mrf.mxu0
    %v1320 = vpop.f32.mrf.mxu0
    %v1321 = vadd.f32 0.0, %v1320
    %v1322 = vpop.f32.mrf.mxu0
    %1323 = vmatprep.mubr.bf16.mxu0 0
    %1324 = vmatmul.mubr.bf16.gmra.mxu0 %v431
    %v1325 = vpop.f32.mrf.mxu0
    %v1326 = vadd.f32 0.0, %v1325
    %v1327 = vpop.f32.mrf.mxu0
    %v1328 = vpop.f32.mrf.mxu0
    %v1329 = vadd.f32 0.0, %v1328
    %v1330 = vpop.f32.mrf.mxu0
    %1331 = vmatprep.mubr.bf16.mxu0 0
    %1332 = vmatmul.mubr.bf16.gmra.mxu0 %v1241
    %v1333 = vpop.f32.mrf.mxu0
    %v1334 = vadd.f32 0.0, %v1333
    %v1335 = vpop.f32.mrf.mxu0
    %v1336 = vpop.f32.mrf.mxu0
    %v1337 = vadd.f32 0.0, %v1336
    %v1338 = vpop.f32.mrf.mxu0
    %1339 = vdwg.mxu0
    %v1340 = vadd.f32 %v1211, %v1278
    %v1341 = vadd.f32 %v1212, %v1281
    %v1342 = vadd.f32 %v1213, %v1286
    %v1343 = vadd.f32 %v1214, %v1289
    %v1344 = vadd.f32 %v1215, %v1294
    %v1345 = vadd.f32 %v1216, %v1297
    %v1346 = vadd.f32 %v1217, %v1302
    %v1347 = vadd.f32 %v1218, %v1305
    %v1348 = vadd.f32 %v1219, %v1310
    %v1349 = vadd.f32 %v1220, %v1313
    %v1350 = vadd.f32 %v1221, %v1318
    %v1351 = vadd.f32 %v1222, %v1321
    %v1352 = vadd.f32 %v1223, %v1326
    %v1353 = vadd.f32 %v1224, %v1329
    %v1354 = vadd.f32 %v1225, %v1334
    %v1355 = vadd.f32 %v1226, %v1337
    %v1360 = vrot.slane %v137, 1
    %v1361 = vrot.slane %v138, 1
    %v1362 = vsel %vm201, %v1360, %v1361
    %v1363 = vrot.slane %v157, 1
    %v1364 = vrot.slane %v158, 1
    %v1365 = vsel %vm201, %v1363, %v1364
    %v1368 = vpack.c.bf16 %v1362, %v907
    %v1369 = vpack.c.bf16 %v1365, %v910
    %v1370 = vld [vmem:[%s1 + $0x38] sm:$0xf]
    %v1371 = vld [vmem:[%s1 + $0x3c] sm:$0xf]
    %v1374 = vunpack.c.l.b16 %v1370
    %v1375 = vunpack.c.l.b16 %v1371
    %v1376 = vpack.c.b16 %v1375, %v1374
    %v1379 = vsel %vm34, %v1368, 0
    %v1382 = vsel %vm34, %v1369, 0
    %1384 = vmatprep.subr.bf16.mxu0 0
    %1385 = vmatpush1.bf16.msra.mxu0 0
    %1386 = vmatprep.subr.bf16.mxu0 0
    %1387 = vmatpush1.bf16.msra.mxu0 0
    %1388 = vmatprep.subr.bf16.mxu0 0
    %1389 = vmatpush1.bf16.msra.mxu0 0
    %1390 = vmatprep.subr.bf16.mxu0 0
    %1391 = vmatpush1.bf16.msra.mxu0 0
    %1392 = vmatprep.subr.bf16.mxu0 0
    %1393 = vmatpush1.bf16.msra.mxu0 0
    %1394 = vmatprep.subr.bf16.mxu0 0
    %1395 = vmatpush1.bf16.msra.mxu0 0
    %1396 = vmatprep.subr.bf16.mxu0 0
    %1397 = vmatpush1.bf16.msra.mxu0 0
    %1398 = vmatprep.subr.bf16.mxu0 0
    %1399 = vmatpush1.bf16.msra.mxu0 %v1376
    %1400 = vmatprep.subr.bf16.mxu0 0
    %1401 = vmatpush2.bf16.msra.mxu0 0
    %1402 = vmatprep.subr.bf16.mxu0 0
    %1403 = vmatpush2.bf16.msra.mxu0 0
    %1404 = vmatprep.subr.bf16.mxu0 0
    %1405 = vmatpush2.bf16.msra.mxu0 0
    %1406 = vmatprep.subr.bf16.mxu0 0
    %1407 = vmatpush2.bf16.msra.mxu0 0
    %1408 = vmatprep.subr.bf16.mxu0 0
    %1409 = vmatpush2.bf16.msra.mxu0 0
    %1410 = vmatprep.subr.bf16.mxu0 0
    %1411 = vmatpush2.bf16.msra.mxu0 0
    %1412 = vmatprep.subr.bf16.mxu0 0
    %1413 = vmatpush2.bf16.msra.mxu0 0
    %1414 = vmatprep.subr.bf16.mxu0 0
    %1415 = vmatpush2.bf16.msra.mxu0 0
    %1416 = vmatprep.mubr.bf16.mxu0 0
    %1417 = vmatmul.mubr.bf16.gmra.mxu0 %v286
    %v1418 = vpop.f32.mrf.mxu0
    %v1419 = vadd.f32 0.0, %v1418
    %v1420 = vpop.f32.mrf.mxu0
    %v1421 = vpop.f32.mrf.mxu0
    %v1422 = vadd.f32 0.0, %v1421
    %v1423 = vpop.f32.mrf.mxu0
    %1424 = vmatprep.mubr.bf16.mxu0 0
    %1425 = vmatmul.mubr.bf16.gmra.mxu0 %v289
    %v1426 = vpop.f32.mrf.mxu0
    %v1427 = vadd.f32 0.0, %v1426
    %v1428 = vpop.f32.mrf.mxu0
    %v1429 = vpop.f32.mrf.mxu0
    %v1430 = vadd.f32 0.0, %v1429
    %v1431 = vpop.f32.mrf.mxu0
    %1432 = vmatprep.mubr.bf16.mxu0 0
    %1433 = vmatmul.mubr.bf16.gmra.mxu0 %v292
    %v1434 = vpop.f32.mrf.mxu0
    %v1435 = vadd.f32 0.0, %v1434
    %v1436 = vpop.f32.mrf.mxu0
    %v1437 = vpop.f32.mrf.mxu0
    %v1438 = vadd.f32 0.0, %v1437
    %v1439 = vpop.f32.mrf.mxu0
    %1440 = vmatprep.mubr.bf16.mxu0 0
    %1441 = vmatmul.mubr.bf16.gmra.mxu0 %v1379
    %v1442 = vpop.f32.mrf.mxu0
    %v1443 = vadd.f32 0.0, %v1442
    %v1444 = vpop.f32.mrf.mxu0
    %v1445 = vpop.f32.mrf.mxu0
    %v1446 = vadd.f32 0.0, %v1445
    %v1447 = vpop.f32.mrf.mxu0
    %1448 = vmatprep.mubr.bf16.mxu0 0
    %1449 = vmatmul.mubr.bf16.gmra.mxu0 %v298
    %v1450 = vpop.f32.mrf.mxu0
    %v1451 = vadd.f32 0.0, %v1450
    %v1452 = vpop.f32.mrf.mxu0
    %v1453 = vpop.f32.mrf.mxu0
    %v1454 = vadd.f32 0.0, %v1453
    %v1455 = vpop.f32.mrf.mxu0
    %1456 = vmatprep.mubr.bf16.mxu0 0
    %1457 = vmatmul.mubr.bf16.gmra.mxu0 %v301
    %v1458 = vpop.f32.mrf.mxu0
    %v1459 = vadd.f32 0.0, %v1458
    %v1460 = vpop.f32.mrf.mxu0
    %v1461 = vpop.f32.mrf.mxu0
    %v1462 = vadd.f32 0.0, %v1461
    %v1463 = vpop.f32.mrf.mxu0
    %1464 = vmatprep.mubr.bf16.mxu0 0
    %1465 = vmatmul.mubr.bf16.gmra.mxu0 %v304
    %v1466 = vpop.f32.mrf.mxu0
    %v1467 = vadd.f32 0.0, %v1466
    %v1468 = vpop.f32.mrf.mxu0
    %v1469 = vpop.f32.mrf.mxu0
    %v1470 = vadd.f32 0.0, %v1469
    %v1471 = vpop.f32.mrf.mxu0
    %1472 = vmatprep.mubr.bf16.mxu0 0
    %1473 = vmatmul.mubr.bf16.gmra.mxu0 %v1382
    %v1474 = vpop.f32.mrf.mxu0
    %v1475 = vadd.f32 0.0, %v1474
    %v1476 = vpop.f32.mrf.mxu0
    %v1477 = vpop.f32.mrf.mxu0
    %v1478 = vadd.f32 0.0, %v1477
    %v1479 = vpop.f32.mrf.mxu0
    %1480 = vdwg.mxu0
    %v1481 = vadd.f32 %v1340, %v1419
    %v1482 = vadd.f32 %v1341, %v1422
    %v1483 = vadd.f32 %v1342, %v1427
    %v1484 = vadd.f32 %v1343, %v1430
    %v1485 = vadd.f32 %v1344, %v1435
    %v1486 = vadd.f32 %v1345, %v1438
    %v1487 = vadd.f32 %v1346, %v1443
    %v1488 = vadd.f32 %v1347, %v1446
    %v1489 = vadd.f32 %v1348, %v1451
    %v1490 = vadd.f32 %v1349, %v1454
    %v1491 = vadd.f32 %v1350, %v1459
    %v1492 = vadd.f32 %v1351, %v1462
    %v1493 = vadd.f32 %v1352, %v1467
    %v1494 = vadd.f32 %v1353, %v1470
    %v1495 = vadd.f32 %v1354, %v1475
    %v1496 = vadd.f32 %v1355, %v1478
    %v1497 = vrot.slane %v137, 2
    %v1498 = vrot.slane %v138, 2
    %v1499 = vsel %vm530, %v1497, %v1498
    %v1500 = vrot.slane %v157, 2
    %v1501 = vrot.slane %v158, 2
    %v1502 = vsel %vm530, %v1500, %v1501
    %v1505 = vpack.c.bf16 %v1499, %v1068
    %v1506 = vpack.c.bf16 %v1502, %v1071
    %v1507 = vld [vmem:[%s1 + $0x40] sm:$0xf]
    %v1508 = vld [vmem:[%s1 + $0x44] sm:$0xf]
    %v1511 = vunpack.c.l.b16 %v1507
    %v1512 = vunpack.c.l.b16 %v1508
    %v1513 = vpack.c.b16 %v1512, %v1511
    %v1516 = vsel %vm34, %v1505, 0
    %v1519 = vsel %vm34, %v1506, 0
    %1521 = vmatprep.subr.bf16.mxu0 0
    %1522 = vmatpush1.bf16.msra.mxu0 0
    %1523 = vmatprep.subr.bf16.mxu0 0
    %1524 = vmatpush1.bf16.msra.mxu0 0
    %1525 = vmatprep.subr.bf16.mxu0 0
    %1526 = vmatpush1.bf16.msra.mxu0 0
    %1527 = vmatprep.subr.bf16.mxu0 0
    %1528 = vmatpush1.bf16.msra.mxu0 0
    %1529 = vmatprep.subr.bf16.mxu0 0
    %1530 = vmatpush1.bf16.msra.mxu0 0
    %1531 = vmatprep.subr.bf16.mxu0 0
    %1532 = vmatpush1.bf16.msra.mxu0 0
    %1533 = vmatprep.subr.bf16.mxu0 0
    %1534 = vmatpush1.bf16.msra.mxu0 0
    %1535 = vmatprep.subr.bf16.mxu0 0
    %1536 = vmatpush1.bf16.msra.mxu0 %v1513
    %1537 = vmatprep.subr.bf16.mxu0 0
    %1538 = vmatpush2.bf16.msra.mxu0 0
    %1539 = vmatprep.subr.bf16.mxu0 0
    %1540 = vmatpush2.bf16.msra.mxu0 0
    %1541 = vmatprep.subr.bf16.mxu0 0
    %1542 = vmatpush2.bf16.msra.mxu0 0
    %1543 = vmatprep.subr.bf16.mxu0 0
    %1544 = vmatpush2.bf16.msra.mxu0 0
    %1545 = vmatprep.subr.bf16.mxu0 0
    %1546 = vmatpush2.bf16.msra.mxu0 0
    %1547 = vmatprep.subr.bf16.mxu0 0
    %1548 = vmatpush2.bf16.msra.mxu0 0
    %1549 = vmatprep.subr.bf16.mxu0 0
    %1550 = vmatpush2.bf16.msra.mxu0 0
    %1551 = vmatprep.subr.bf16.mxu0 0
    %1552 = vmatpush2.bf16.msra.mxu0 0
    %1553 = vmatprep.mubr.bf16.mxu0 0
    %1554 = vmatmul.mubr.bf16.gmra.mxu0 %v615
    %v1555 = vpop.f32.mrf.mxu0
    %v1556 = vadd.f32 0.0, %v1555
    %v1557 = vpop.f32.mrf.mxu0
    %v1558 = vpop.f32.mrf.mxu0
    %v1559 = vadd.f32 0.0, %v1558
    %v1560 = vpop.f32.mrf.mxu0
    %1561 = vmatprep.mubr.bf16.mxu0 0
    %1562 = vmatmul.mubr.bf16.gmra.mxu0 %v618
    %v1563 = vpop.f32.mrf.mxu0
    %v1564 = vadd.f32 0.0, %v1563
    %v1565 = vpop.f32.mrf.mxu0
    %v1566 = vpop.f32.mrf.mxu0
    %v1567 = vadd.f32 0.0, %v1566
    %v1568 = vpop.f32.mrf.mxu0
    %1569 = vmatprep.mubr.bf16.mxu0 0
    %1570 = vmatmul.mubr.bf16.gmra.mxu0 %v621
    %v1571 = vpop.f32.mrf.mxu0
    %v1572 = vadd.f32 0.0, %v1571
    %v1573 = vpop.f32.mrf.mxu0
    %v1574 = vpop.f32.mrf.mxu0
    %v1575 = vadd.f32 0.0, %v1574
    %v1576 = vpop.f32.mrf.mxu0
    %1577 = vmatprep.mubr.bf16.mxu0 0
    %1578 = vmatmul.mubr.bf16.gmra.mxu0 %v1516
    %v1579 = vpop.f32.mrf.mxu0
    %v1580 = vadd.f32 0.0, %v1579
    %v1581 = vpop.f32.mrf.mxu0
    %v1582 = vpop.f32.mrf.mxu0
    %v1583 = vadd.f32 0.0, %v1582
    %v1584 = vpop.f32.mrf.mxu0
    %1585 = vmatprep.mubr.bf16.mxu0 0
    %1586 = vmatmul.mubr.bf16.gmra.mxu0 %v627
    %v1587 = vpop.f32.mrf.mxu0
    %v1588 = vadd.f32 0.0, %v1587
    %v1589 = vpop.f32.mrf.mxu0
    %v1590 = vpop.f32.mrf.mxu0
    %v1591 = vadd.f32 0.0, %v1590
    %v1592 = vpop.f32.mrf.mxu0
    %1593 = vmatprep.mubr.bf16.mxu0 0
    %1594 = vmatmul.mubr.bf16.gmra.mxu0 %v630
    %v1595 = vpop.f32.mrf.mxu0
    %v1596 = vadd.f32 0.0, %v1595
    %v1597 = vpop.f32.mrf.mxu0
    %v1598 = vpop.f32.mrf.mxu0
    %v1599 = vadd.f32 0.0, %v1598
    %v1600 = vpop.f32.mrf.mxu0
    %1601 = vmatprep.mubr.bf16.mxu0 0
    %1602 = vmatmul.mubr.bf16.gmra.mxu0 %v633
    %v1603 = vpop.f32.mrf.mxu0
    %v1604 = vadd.f32 0.0, %v1603
    %v1605 = vpop.f32.mrf.mxu0
    %v1606 = vpop.f32.mrf.mxu0
    %v1607 = vadd.f32 0.0, %v1606
    %v1608 = vpop.f32.mrf.mxu0
    %1609 = vmatprep.mubr.bf16.mxu0 0
    %1610 = vmatmul.mubr.bf16.gmra.mxu0 %v1519
    %v1611 = vpop.f32.mrf.mxu0
    %v1612 = vadd.f32 0.0, %v1611
    %v1613 = vpop.f32.mrf.mxu0
    %v1614 = vpop.f32.mrf.mxu0
    %v1615 = vadd.f32 0.0, %v1614
    %v1616 = vpop.f32.mrf.mxu0
    %1617 = vdwg.mxu0
    %v1618 = vadd.f32 %v1481, %v1556
    %v1619 = vadd.f32 %v1482, %v1559
    %v1620 = vadd.f32 %v1483, %v1564
    %v1621 = vadd.f32 %v1484, %v1567
    %v1622 = vadd.f32 %v1485, %v1572
    %v1623 = vadd.f32 %v1486, %v1575
    %v1624 = vadd.f32 %v1487, %v1580
    %v1625 = vadd.f32 %v1488, %v1583
    %v1626 = vadd.f32 %v1489, %v1588
    %v1627 = vadd.f32 %v1490, %v1591
    %v1628 = vadd.f32 %v1491, %v1596
    %v1629 = vadd.f32 %v1492, %v1599
    %v1630 = vadd.f32 %v1493, %v1604
    %v1631 = vadd.f32 %v1494, %v1607
    %v1632 = vadd.f32 %v1495, %v1612
    %v1633 = vadd.f32 %v1496, %v1615
    %v1634 = vld [vmem:[%s2] sm:$0x1]
    %v1636 = vlaneseq
    %v1637 = vshrl.u32 %v1636, 7
    %v1638 = vsub.s32 0, %v1637
    %v1639 = vrot.slane %v1634, %v1638
    %v1641 = vadd.f32 %v1618, %v1639
    %v1642 = vadd.f32 %v1619, %v1639
    %v1643 = vadd.f32 %v1620, %v1639
    %v1644 = vadd.f32 %v1621, %v1639
    %v1645 = vadd.f32 %v1622, %v1639
    %v1646 = vadd.f32 %v1623, %v1639
    %v1647 = vadd.f32 %v1624, %v1639
    %v1648 = vadd.f32 %v1625, %v1639
    %v1649 = vadd.f32 %v1626, %v1639
    %v1650 = vadd.f32 %v1627, %v1639
    %v1651 = vadd.f32 %v1628, %v1639
    %v1652 = vadd.f32 %v1629, %v1639
    %v1653 = vadd.f32 %v1630, %v1639
    %v1654 = vadd.f32 %v1631, %v1639
    %v1655 = vadd.f32 %v1632, %v1639
    %v1656 = vadd.f32 %v1633, %v1639
    %v1657 = vmax.f32 %v1641, 0.0
    %v1658 = vmax.f32 %v1642, 0.0
    %v1659 = vmax.f32 %v1643, 0.0
    %v1660 = vmax.f32 %v1644, 0.0
    %v1661 = vmax.f32 %v1645, 0.0
    %v1662 = vmax.f32 %v1646, 0.0
    %v1663 = vmax.f32 %v1647, 0.0
    %v1664 = vmax.f32 %v1648, 0.0
    %v1665 = vmax.f32 %v1649, 0.0
    %v1666 = vmax.f32 %v1650, 0.0
    %v1667 = vmax.f32 %v1651, 0.0
    %v1668 = vmax.f32 %v1652, 0.0
    %v1669 = vmax.f32 %v1653, 0.0
    %v1670 = vmax.f32 %v1654, 0.0
    %v1671 = vmax.f32 %v1655, 0.0
    %v1672 = vmax.f32 %v1656, 0.0
    %1673 = vst.msk [vmem:[%s102 + $0x1] sm:$0xff] %vm34, %v1657
    %1674 = vst.msk [vmem:[%s102 + $0x11] sm:$0xff] %vm34, %v1658
    %1675 = vst.msk [vmem:[%s102 + $0x21] sm:$0xff] %vm34, %v1659
    %1676 = vst.msk [vmem:[%s102 + $0x31] sm:$0xff] %vm34, %v1660
    %1677 = vst.msk [vmem:[%s102 + $0x41] sm:$0xff] %vm34, %v1661
    %1678 = vst.msk [vmem:[%s102 + $0x51] sm:$0xff] %vm34, %v1662
    %1679 = vst.msk [vmem:[%s102 + $0x61] sm:$0xff] %vm34, %v1663
    %1680 = vst.msk [vmem:[%s102 + $0x71] sm:$0xff] %vm34, %v1664
    %1681 = vst.msk [vmem:[%s102 + $0xa1] sm:$0xff] %vm34, %v1665
    %1682 = vst.msk [vmem:[%s102 + $0xb1] sm:$0xff] %vm34, %v1666
    %1683 = vst.msk [vmem:[%s102 + $0xc1] sm:$0xff] %vm34, %v1667
    %1684 = vst.msk [vmem:[%s102 + $0xd1] sm:$0xff] %vm34, %v1668
    %1685 = vst.msk [vmem:[%s102 + $0xe1] sm:$0xff] %vm34, %v1669
    %1686 = vst.msk [vmem:[%s102 + $0xf1] sm:$0xff] %vm34, %v1670
    %1687 = vst.msk [vmem:[%s102 + $0x101] sm:$0xff] %vm34, %v1671
    %1688 = vst.msk [vmem:[%s102 + $0x111] sm:$0xff] %vm34, %v1672
    %v1689 = vld [vmem:[#allocation2] sm:$0xff]
    %v1690 = vld [vmem:[#allocation2 + $0x8] sm:$0x3]
    %v1691 = vld [vmem:[#allocation2 + $0x10] sm:$0xff]
    %v1692 = vld [vmem:[#allocation2 + $0x18] sm:$0x3]
    %v1693 = vld [vmem:[#allocation2 + $0x20] sm:$0xff]
    %v1694 = vld [vmem:[#allocation2 + $0x28] sm:$0x3]
    %v1695 = vld [vmem:[#allocation2 + $0x30] sm:$0xff]
    %v1696 = vld [vmem:[#allocation2 + $0x38] sm:$0x3]
    %v1697 = vld [vmem:[#allocation2 + $0x40] sm:$0xff]
    %v1698 = vld [vmem:[#allocation2 + $0x48] sm:$0x3]
    %v1699 = vld [vmem:[#allocation2 + $0x50] sm:$0xff]
    %v1700 = vld [vmem:[#allocation2 + $0x58] sm:$0x3]
    %v1701 = vld [vmem:[#allocation2 + $0x60] sm:$0xff]
    %v1702 = vld [vmem:[#allocation2 + $0x68] sm:$0x3]
    %v1703 = vld [vmem:[#allocation2 + $0x70] sm:$0xff]
    %v1704 = vld [vmem:[#allocation2 + $0x78] sm:$0x3]
    %v1705 = vld [vmem:[#allocation2 + $0x80] sm:$0xff]
    %v1706 = vld [vmem:[#allocation2 + $0x88] sm:$0x3]
    %v1707 = vld [vmem:[#allocation2 + $0x90] sm:$0xff]
    %v1708 = vld [vmem:[#allocation2 + $0x98] sm:$0x3]
    %v1709 = vld [vmem:[#allocation2 + $0xa0] sm:$0xff]
    %v1710 = vld [vmem:[#allocation2 + $0xa8] sm:$0x3]
    %v1711 = vld [vmem:[#allocation2 + $0xb0] sm:$0xff]
    %v1712 = vld [vmem:[#allocation2 + $0xb8] sm:$0x3]
    %v1713 = vld [vmem:[#allocation2 + $0xc0] sm:$0xff]
    %v1714 = vld [vmem:[#allocation2 + $0xc8] sm:$0x3]
    %v1715 = vld [vmem:[#allocation2 + $0xd0] sm:$0xff]
    %v1716 = vld [vmem:[#allocation2 + $0xd8] sm:$0x3]
    %v1717 = vld [vmem:[#allocation2 + $0xe0] sm:$0xff]
    %v1718 = vld [vmem:[#allocation2 + $0xe8] sm:$0x3]
    %v1719 = vld [vmem:[#allocation2 + $0xf0] sm:$0xff]
    %v1720 = vld [vmem:[#allocation2 + $0xf8] sm:$0x3]
    %v1721 = vld [vmem:[#allocation2 + $0x100] sm:$0xff]
    %v1722 = vld [vmem:[#allocation2 + $0x108] sm:$0x3]
    %v1723 = vld [vmem:[#allocation2 + $0x110] sm:$0xff]
    %v1724 = vld [vmem:[#allocation2 + $0x118] sm:$0x3]
    %v1725 = vld [vmem:[#allocation2 + $0x120] sm:$0xff]
    %v1726 = vld [vmem:[#allocation2 + $0x128] sm:$0x3]
    %v1727 = vld [vmem:[#allocation2 + $0x130] sm:$0xff]
    %v1728 = vld [vmem:[#allocation2 + $0x138] sm:$0x3]
    %v1729 = vpack.c.bf16 %v1691, %v1689
    %v1730 = vpack.c.bf16 %v1695, %v1693
    %v1731 = vpack.c.bf16 %v1699, %v1697
    %v1732 = vpack.c.bf16 %v1703, %v1701
    %v1733 = vpack.c.bf16 %v1711, %v1709
    %v1734 = vpack.c.bf16 %v1715, %v1713
    %v1735 = vpack.c.bf16 %v1719, %v1717
    %v1736 = vpack.c.bf16 %v1723, %v1721
    %v1737 = vld [vmem:[%s3] sm:$0xf]
    %v1738 = vld [vmem:[%s3 + $0x4] sm:$0xf]
    %v1771 = vrot.slane %v1689, 1
    %v1772 = vrot.slane %v1690, 1
    %v1773 = vsel %vm201, %v1771, %v1772
    %v1774 = vrot.slane %v1691, 1
    %v1775 = vrot.slane %v1692, 1
    %v1776 = vsel %vm201, %v1774, %v1775
    %v1777 = vrot.slane %v1693, 1
    %v1778 = vrot.slane %v1694, 1
    %v1779 = vsel %vm201, %v1777, %v1778
    %v1780 = vrot.slane %v1695, 1
    %v1781 = vrot.slane %v1696, 1
    %v1782 = vsel %vm201, %v1780, %v1781
    %v1783 = vrot.slane %v1697, 1
    %v1784 = vrot.slane %v1698, 1
    %v1785 = vsel %vm201, %v1783, %v1784
    %v1786 = vrot.slane %v1699, 1
    %v1787 = vrot.slane %v1700, 1
    %v1788 = vsel %vm201, %v1786, %v1787
    %v1789 = vrot.slane %v1701, 1
    %v1790 = vrot.slane %v1702, 1
    %v1791 = vsel %vm201, %v1789, %v1790
    %v1792 = vrot.slane %v1703, 1
    %v1793 = vrot.slane %v1704, 1
    %v1794 = vsel %vm201, %v1792, %v1793
    %v1795 = vrot.slane %v1709, 1
    %v1796 = vrot.slane %v1710, 1
    %v1797 = vsel %vm201, %v1795, %v1796
    %v1798 = vrot.slane %v1711, 1
    %v1799 = vrot.slane %v1712, 1
    %v1800 = vsel %vm201, %v1798, %v1799
    %v1801 = vrot.slane %v1713, 1
    %v1802 = vrot.slane %v1714, 1
    %v1803 = vsel %vm201, %v1801, %v1802
    %v1804 = vrot.slane %v1715, 1
    %v1805 = vrot.slane %v1716, 1
    %v1806 = vsel %vm201, %v1804, %v1805
    %v1807 = vrot.slane %v1717, 1
    %v1808 = vrot.slane %v1718, 1
    %v1809 = vsel %vm201, %v1807, %v1808
    %v1810 = vrot.slane %v1719, 1
    %v1811 = vrot.slane %v1720, 1
    %v1812 = vsel %vm201, %v1810, %v1811
    %v1813 = vrot.slane %v1721, 1
    %v1814 = vrot.slane %v1722, 1
    %v1815 = vsel %vm201, %v1813, %v1814
    %v1816 = vrot.slane %v1723, 1
    %v1817 = vrot.slane %v1724, 1
    %v1818 = vsel %vm201, %v1816, %v1817
    %v1835 = vpack.c.bf16 %v1776, %v1773
    %v1836 = vpack.c.bf16 %v1782, %v1779
    %v1837 = vpack.c.bf16 %v1788, %v1785
    %v1838 = vpack.c.bf16 %v1794, %v1791
    %v1839 = vpack.c.bf16 %v1800, %v1797
    %v1840 = vpack.c.bf16 %v1806, %v1803
    %v1841 = vpack.c.bf16 %v1812, %v1809
    %v1842 = vpack.c.bf16 %v1818, %v1815
    %v1843 = vld [vmem:[%s3 + $0x8] sm:$0xf]
    %v1844 = vld [vmem:[%s3 + $0xc] sm:$0xf]
    %v1847 = vunpack.c.l.b16 %v1843
    %v1848 = vunpack.c.l.b16 %v1844
    %v1849 = vpack.c.b16 %v1848, %v1847
    %v1852 = vsel %vm34, %v1835, 0
    %v1855 = vsel %vm34, %v1836, 0
    %v1858 = vsel %vm34, %v1837, 0
    %v1861 = vsel %vm34, %v1838, 0
    %v1864 = vsel %vm34, %v1839, 0
    %v1867 = vsel %vm34, %v1840, 0
    %v1870 = vsel %vm34, %v1841, 0
    %v1873 = vsel %vm34, %v1842, 0
    %1875 = vmatprep.subr.bf16.mxu0 0
    %1876 = vmatpush1.bf16.msra.mxu0 0
    %1877 = vmatprep.subr.bf16.mxu0 0
    %1878 = vmatpush1.bf16.msra.mxu0 0
    %1879 = vmatprep.subr.bf16.mxu0 0
    %1880 = vmatpush1.bf16.msra.mxu0 0
    %1881 = vmatprep.subr.bf16.mxu0 0
    %1882 = vmatpush1.bf16.msra.mxu0 0
    %1883 = vmatprep.subr.bf16.mxu0 0
    %1884 = vmatpush1.bf16.msra.mxu0 0
    %1885 = vmatprep.subr.bf16.mxu0 0
    %1886 = vmatpush1.bf16.msra.mxu0 0
    %1887 = vmatprep.subr.bf16.mxu0 0
    %1888 = vmatpush1.bf16.msra.mxu0 0
    %1889 = vmatprep.subr.bf16.mxu0 0
    %1890 = vmatpush1.bf16.msra.mxu0 %v1849
    %1891 = vmatprep.subr.bf16.mxu0 0
    %1892 = vmatpush2.bf16.msra.mxu0 0
    %1893 = vmatprep.subr.bf16.mxu0 0
    %1894 = vmatpush2.bf16.msra.mxu0 0
    %1895 = vmatprep.subr.bf16.mxu0 0
    %1896 = vmatpush2.bf16.msra.mxu0 0
    %1897 = vmatprep.subr.bf16.mxu0 0
    %1898 = vmatpush2.bf16.msra.mxu0 0
    %1899 = vmatprep.subr.bf16.mxu0 0
    %1900 = vmatpush2.bf16.msra.mxu0 0
    %1901 = vmatprep.subr.bf16.mxu0 0
    %1902 = vmatpush2.bf16.msra.mxu0 0
    %1903 = vmatprep.subr.bf16.mxu0 0
    %1904 = vmatpush2.bf16.msra.mxu0 0
    %1905 = vmatprep.subr.bf16.mxu0 0
    %1906 = vmatpush2.bf16.msra.mxu0 0
    %1907 = vmatprep.mubr.bf16.mxu0 0
    %1908 = vmatmul.mubr.bf16.gmra.mxu0 %v1852
    %v1909 = vpop.f32.mrf.mxu0
    %v1910 = vadd.f32 0.0, %v1909
    %v1911 = vpop.f32.mrf.mxu0
    %v1912 = vpop.f32.mrf.mxu0
    %v1913 = vadd.f32 0.0, %v1912
    %v1914 = vpop.f32.mrf.mxu0
    %1915 = vmatprep.mubr.bf16.mxu0 0
    %1916 = vmatmul.mubr.bf16.gmra.mxu0 %v1855
    %v1917 = vpop.f32.mrf.mxu0
    %v1918 = vadd.f32 0.0, %v1917
    %v1919 = vpop.f32.mrf.mxu0
    %v1920 = vpop.f32.mrf.mxu0
    %v1921 = vadd.f32 0.0, %v1920
    %v1922 = vpop.f32.mrf.mxu0
    %1923 = vmatprep.mubr.bf16.mxu0 0
    %1924 = vmatmul.mubr.bf16.gmra.mxu0 %v1858
    %v1925 = vpop.f32.mrf.mxu0
    %v1926 = vadd.f32 0.0, %v1925
    %v1927 = vpop.f32.mrf.mxu0
    %v1928 = vpop.f32.mrf.mxu0
    %v1929 = vadd.f32 0.0, %v1928
    %v1930 = vpop.f32.mrf.mxu0
    %1931 = vmatprep.mubr.bf16.mxu0 0
    %1932 = vmatmul.mubr.bf16.gmra.mxu0 %v1861
    %v1933 = vpop.f32.mrf.mxu0
    %v1934 = vadd.f32 0.0, %v1933
    %v1935 = vpop.f32.mrf.mxu0
    %v1936 = vpop.f32.mrf.mxu0
    %v1937 = vadd.f32 0.0, %v1936
    %v1938 = vpop.f32.mrf.mxu0
    %1939 = vmatprep.mubr.bf16.mxu0 0
    %1940 = vmatmul.mubr.bf16.gmra.mxu0 %v1864
    %v1941 = vpop.f32.mrf.mxu0
    %v1942 = vadd.f32 0.0, %v1941
    %v1943 = vpop.f32.mrf.mxu0
    %v1944 = vpop.f32.mrf.mxu0
    %v1945 = vadd.f32 0.0, %v1944
    %v1946 = vpop.f32.mrf.mxu0
    %1947 = vmatprep.mubr.bf16.mxu0 0
    %1948 = vmatmul.mubr.bf16.gmra.mxu0 %v1867
    %v1949 = vpop.f32.mrf.mxu0
    %v1950 = vadd.f32 0.0, %v1949
    %v1951 = vpop.f32.mrf.mxu0
    %v1952 = vpop.f32.mrf.mxu0
    %v1953 = vadd.f32 0.0, %v1952
    %v1954 = vpop.f32.mrf.mxu0
    %1955 = vmatprep.mubr.bf16.mxu0 0
    %1956 = vmatmul.mubr.bf16.gmra.mxu0 %v1870
    %v1957 = vpop.f32.mrf.mxu0
    %v1958 = vadd.f32 0.0, %v1957
    %v1959 = vpop.f32.mrf.mxu0
    %v1960 = vpop.f32.mrf.mxu0
    %v1961 = vadd.f32 0.0, %v1960
    %v1962 = vpop.f32.mrf.mxu0
    %1963 = vmatprep.mubr.bf16.mxu0 0
    %1964 = vmatmul.mubr.bf16.gmra.mxu0 %v1873
    %v1965 = vpop.f32.mrf.mxu0
    %v1966 = vadd.f32 0.0, %v1965
    %v1967 = vpop.f32.mrf.mxu0
    %v1968 = vpop.f32.mrf.mxu0
    %v1969 = vadd.f32 0.0, %v1968
    %v1970 = vpop.f32.mrf.mxu0
    %1971 = vdwg.mxu0
    %v1974 = vunpack.c.l.b16 %v1737
    %v1975 = vunpack.c.l.b16 %v1738
    %v1976 = vpack.c.b16 %v1975, %v1974
    %v1979 = vsel %vm34, %v1729, 0
    %v1982 = vsel %vm34, %v1730, 0
    %v1985 = vsel %vm34, %v1731, 0
    %v1988 = vsel %vm34, %v1732, 0
    %v1991 = vsel %vm34, %v1733, 0
    %v1994 = vsel %vm34, %v1734, 0
    %v1997 = vsel %vm34, %v1735, 0
    %v2000 = vsel %vm34, %v1736, 0
    %2002 = vmatprep.subr.bf16.mxu0 0
    %2003 = vmatpush1.bf16.msra.mxu0 0
    %2004 = vmatprep.subr.bf16.mxu0 0
    %2005 = vmatpush1.bf16.msra.mxu0 0
    %2006 = vmatprep.subr.bf16.mxu0 0
    %2007 = vmatpush1.bf16.msra.mxu0 0
    %2008 = vmatprep.subr.bf16.mxu0 0
    %2009 = vmatpush1.bf16.msra.mxu0 0
    %2010 = vmatprep.subr.bf16.mxu0 0
    %2011 = vmatpush1.bf16.msra.mxu0 0
    %2012 = vmatprep.subr.bf16.mxu0 0
    %2013 = vmatpush1.bf16.msra.mxu0 0
    %2014 = vmatprep.subr.bf16.mxu0 0
    %2015 = vmatpush1.bf16.msra.mxu0 0
    %2016 = vmatprep.subr.bf16.mxu0 0
    %2017 = vmatpush1.bf16.msra.mxu0 %v1976
    %2018 = vmatprep.subr.bf16.mxu0 0
    %2019 = vmatpush2.bf16.msra.mxu0 0
    %2020 = vmatprep.subr.bf16.mxu0 0
    %2021 = vmatpush2.bf16.msra.mxu0 0
    %2022 = vmatprep.subr.bf16.mxu0 0
    %2023 = vmatpush2.bf16.msra.mxu0 0
    %2024 = vmatprep.subr.bf16.mxu0 0
    %2025 = vmatpush2.bf16.msra.mxu0 0
    %2026 = vmatprep.subr.bf16.mxu0 0
    %2027 = vmatpush2.bf16.msra.mxu0 0
    %2028 = vmatprep.subr.bf16.mxu0 0
    %2029 = vmatpush2.bf16.msra.mxu0 0
    %2030 = vmatprep.subr.bf16.mxu0 0
    %2031 = vmatpush2.bf16.msra.mxu0 0
    %2032 = vmatprep.subr.bf16.mxu0 0
    %2033 = vmatpush2.bf16.msra.mxu0 0
    %2034 = vmatprep.mubr.bf16.mxu0 0
    %2035 = vmatmul.mubr.bf16.gmra.mxu0 %v1979
    %v2036 = vpop.f32.mrf.mxu0
    %v2037 = vadd.f32 %v1910, %v2036
    %v2038 = vpop.f32.mrf.mxu0
    %v2039 = vpop.f32.mrf.mxu0
    %v2040 = vadd.f32 %v1913, %v2039
    %v2041 = vpop.f32.mrf.mxu0
    %2042 = vmatprep.mubr.bf16.mxu0 0
    %2043 = vmatmul.mubr.bf16.gmra.mxu0 %v1982
    %v2044 = vpop.f32.mrf.mxu0
    %v2045 = vadd.f32 %v1918, %v2044
    %v2046 = vpop.f32.mrf.mxu0
    %v2047 = vpop.f32.mrf.mxu0
    %v2048 = vadd.f32 %v1921, %v2047
    %v2049 = vpop.f32.mrf.mxu0
    %2050 = vmatprep.mubr.bf16.mxu0 0
    %2051 = vmatmul.mubr.bf16.gmra.mxu0 %v1985
    %v2052 = vpop.f32.mrf.mxu0
    %v2053 = vadd.f32 %v1926, %v2052
    %v2054 = vpop.f32.mrf.mxu0
    %v2055 = vpop.f32.mrf.mxu0
    %v2056 = vadd.f32 %v1929, %v2055
    %v2057 = vpop.f32.mrf.mxu0
    %2058 = vmatprep.mubr.bf16.mxu0 0
    %2059 = vmatmul.mubr.bf16.gmra.mxu0 %v1988
    %v2060 = vpop.f32.mrf.mxu0
    %v2061 = vadd.f32 %v1934, %v2060
    %v2062 = vpop.f32.mrf.mxu0
    %v2063 = vpop.f32.mrf.mxu0
    %v2064 = vadd.f32 %v1937, %v2063
    %v2065 = vpop.f32.mrf.mxu0
    %2066 = vmatprep.mubr.bf16.mxu0 0
    %2067 = vmatmul.mubr.bf16.gmra.mxu0 %v1991
    %v2068 = vpop.f32.mrf.mxu0
    %v2069 = vadd.f32 %v1942, %v2068
    %v2070 = vpop.f32.mrf.mxu0
    %v2071 = vpop.f32.mrf.mxu0
    %v2072 = vadd.f32 %v1945, %v2071
    %v2073 = vpop.f32.mrf.mxu0
    %2074 = vmatprep.mubr.bf16.mxu0 0
    %2075 = vmatmul.mubr.bf16.gmra.mxu0 %v1994
    %v2076 = vpop.f32.mrf.mxu0
    %v2077 = vadd.f32 %v1950, %v2076
    %v2078 = vpop.f32.mrf.mxu0
    %v2079 = vpop.f32.mrf.mxu0
    %v2080 = vadd.f32 %v1953, %v2079
    %v2081 = vpop.f32.mrf.mxu0
    %2082 = vmatprep.mubr.bf16.mxu0 0
    %2083 = vmatmul.mubr.bf16.gmra.mxu0 %v1997
    %v2084 = vpop.f32.mrf.mxu0
    %v2085 = vadd.f32 %v1958, %v2084
    %v2086 = vpop.f32.mrf.mxu0
    %v2087 = vpop.f32.mrf.mxu0
    %v2088 = vadd.f32 %v1961, %v2087
    %v2089 = vpop.f32.mrf.mxu0
    %2090 = vmatprep.mubr.bf16.mxu0 0
    %2091 = vmatmul.mubr.bf16.gmra.mxu0 %v2000
    %v2092 = vpop.f32.mrf.mxu0
    %v2093 = vadd.f32 %v1966, %v2092
    %v2094 = vpop.f32.mrf.mxu0
    %v2095 = vpop.f32.mrf.mxu0
    %v2096 = vadd.f32 %v1969, %v2095
    %v2097 = vpop.f32.mrf.mxu0
    %2098 = vdwg.mxu0
    %v2099 = vrot.slane %v1689, 2
    %v2100 = vrot.slane %v1690, 2
    %v2101 = vsel %vm530, %v2099, %v2100
    %v2102 = vrot.slane %v1691, 2
    %v2103 = vrot.slane %v1692, 2
    %v2104 = vsel %vm530, %v2102, %v2103
    %v2105 = vrot.slane %v1693, 2
    %v2106 = vrot.slane %v1694, 2
    %v2107 = vsel %vm530, %v2105, %v2106
    %v2108 = vrot.slane %v1695, 2
    %v2109 = vrot.slane %v1696, 2
    %v2110 = vsel %vm530, %v2108, %v2109
    %v2111 = vrot.slane %v1697, 2
    %v2112 = vrot.slane %v1698, 2
    %v2113 = vsel %vm530, %v2111, %v2112
    %v2114 = vrot.slane %v1699, 2
    %v2115 = vrot.slane %v1700, 2
    %v2116 = vsel %vm530, %v2114, %v2115
    %v2117 = vrot.slane %v1701, 2
    %v2118 = vrot.slane %v1702, 2
    %v2119 = vsel %vm530, %v2117, %v2118
    %v2120 = vrot.slane %v1703, 2
    %v2121 = vrot.slane %v1704, 2
    %v2122 = vsel %vm530, %v2120, %v2121
    %v2123 = vrot.slane %v1709, 2
    %v2124 = vrot.slane %v1710, 2
    %v2125 = vsel %vm530, %v2123, %v2124
    %v2126 = vrot.slane %v1711, 2
    %v2127 = vrot.slane %v1712, 2
    %v2128 = vsel %vm530, %v2126, %v2127
    %v2129 = vrot.slane %v1713, 2
    %v2130 = vrot.slane %v1714, 2
    %v2131 = vsel %vm530, %v2129, %v2130
    %v2132 = vrot.slane %v1715, 2
    %v2133 = vrot.slane %v1716, 2
    %v2134 = vsel %vm530, %v2132, %v2133
    %v2135 = vrot.slane %v1717, 2
    %v2136 = vrot.slane %v1718, 2
    %v2137 = vsel %vm530, %v2135, %v2136
    %v2138 = vrot.slane %v1719, 2
    %v2139 = vrot.slane %v1720, 2
    %v2140 = vsel %vm530, %v2138, %v2139
    %v2141 = vrot.slane %v1721, 2
    %v2142 = vrot.slane %v1722, 2
    %v2143 = vsel %vm530, %v2141, %v2142
    %v2144 = vrot.slane %v1723, 2
    %v2145 = vrot.slane %v1724, 2
    %v2146 = vsel %vm530, %v2144, %v2145
    %v2163 = vpack.c.bf16 %v2104, %v2101
    %v2164 = vpack.c.bf16 %v2110, %v2107
    %v2165 = vpack.c.bf16 %v2116, %v2113
    %v2166 = vpack.c.bf16 %v2122, %v2119
    %v2167 = vpack.c.bf16 %v2128, %v2125
    %v2168 = vpack.c.bf16 %v2134, %v2131
    %v2169 = vpack.c.bf16 %v2140, %v2137
    %v2170 = vpack.c.bf16 %v2146, %v2143
    %v2171 = vld [vmem:[%s3 + $0x10] sm:$0xf]
    %v2172 = vld [vmem:[%s3 + $0x14] sm:$0xf]
    %v2175 = vunpack.c.l.b16 %v2171
    %v2176 = vunpack.c.l.b16 %v2172
    %v2177 = vpack.c.b16 %v2176, %v2175
    %v2180 = vsel %vm34, %v2163, 0
    %v2183 = vsel %vm34, %v2164, 0
    %v2186 = vsel %vm34, %v2165, 0
    %v2189 = vsel %vm34, %v2166, 0
    %v2192 = vsel %vm34, %v2167, 0
    %v2195 = vsel %vm34, %v2168, 0
    %v2198 = vsel %vm34, %v2169, 0
    %v2201 = vsel %vm34, %v2170, 0
    %2203 = vmatprep.subr.bf16.mxu0 0
    %2204 = vmatpush1.bf16.msra.mxu0 0
    %2205 = vmatprep.subr.bf16.mxu0 0
    %2206 = vmatpush1.bf16.msra.mxu0 0
    %2207 = vmatprep.subr.bf16.mxu0 0
    %2208 = vmatpush1.bf16.msra.mxu0 0
    %2209 = vmatprep.subr.bf16.mxu0 0
    %2210 = vmatpush1.bf16.msra.mxu0 0
    %2211 = vmatprep.subr.bf16.mxu0 0
    %2212 = vmatpush1.bf16.msra.mxu0 0
    %2213 = vmatprep.subr.bf16.mxu0 0
    %2214 = vmatpush1.bf16.msra.mxu0 0
    %2215 = vmatprep.subr.bf16.mxu0 0
    %2216 = vmatpush1.bf16.msra.mxu0 0
    %2217 = vmatprep.subr.bf16.mxu0 0
    %2218 = vmatpush1.bf16.msra.mxu0 %v2177
    %2219 = vmatprep.subr.bf16.mxu0 0
    %2220 = vmatpush2.bf16.msra.mxu0 0
    %2221 = vmatprep.subr.bf16.mxu0 0
    %2222 = vmatpush2.bf16.msra.mxu0 0
    %2223 = vmatprep.subr.bf16.mxu0 0
    %2224 = vmatpush2.bf16.msra.mxu0 0
    %2225 = vmatprep.subr.bf16.mxu0 0
    %2226 = vmatpush2.bf16.msra.mxu0 0
    %2227 = vmatprep.subr.bf16.mxu0 0
    %2228 = vmatpush2.bf16.msra.mxu0 0
    %2229 = vmatprep.subr.bf16.mxu0 0
    %2230 = vmatpush2.bf16.msra.mxu0 0
    %2231 = vmatprep.subr.bf16.mxu0 0
    %2232 = vmatpush2.bf16.msra.mxu0 0
    %2233 = vmatprep.subr.bf16.mxu0 0
    %2234 = vmatpush2.bf16.msra.mxu0 0
    %2235 = vmatprep.mubr.bf16.mxu0 0
    %2236 = vmatmul.mubr.bf16.gmra.mxu0 %v2180
    %v2237 = vpop.f32.mrf.mxu0
    %v2238 = vadd.f32 0.0, %v2237
    %v2239 = vpop.f32.mrf.mxu0
    %v2240 = vpop.f32.mrf.mxu0
    %v2241 = vadd.f32 0.0, %v2240
    %v2242 = vpop.f32.mrf.mxu0
    %2243 = vmatprep.mubr.bf16.mxu0 0
    %2244 = vmatmul.mubr.bf16.gmra.mxu0 %v2183
    %v2245 = vpop.f32.mrf.mxu0
    %v2246 = vadd.f32 0.0, %v2245
    %v2247 = vpop.f32.mrf.mxu0
    %v2248 = vpop.f32.mrf.mxu0
    %v2249 = vadd.f32 0.0, %v2248
    %v2250 = vpop.f32.mrf.mxu0
    %2251 = vmatprep.mubr.bf16.mxu0 0
    %2252 = vmatmul.mubr.bf16.gmra.mxu0 %v2186
    %v2253 = vpop.f32.mrf.mxu0
    %v2254 = vadd.f32 0.0, %v2253
    %v2255 = vpop.f32.mrf.mxu0
    %v2256 = vpop.f32.mrf.mxu0
    %v2257 = vadd.f32 0.0, %v2256
    %v2258 = vpop.f32.mrf.mxu0
    %2259 = vmatprep.mubr.bf16.mxu0 0
    %2260 = vmatmul.mubr.bf16.gmra.mxu0 %v2189
    %v2261 = vpop.f32.mrf.mxu0
    %v2262 = vadd.f32 0.0, %v2261
    %v2263 = vpop.f32.mrf.mxu0
    %v2264 = vpop.f32.mrf.mxu0
    %v2265 = vadd.f32 0.0, %v2264
    %v2266 = vpop.f32.mrf.mxu0
    %2267 = vmatprep.mubr.bf16.mxu0 0
    %2268 = vmatmul.mubr.bf16.gmra.mxu0 %v2192
    %v2269 = vpop.f32.mrf.mxu0
    %v2270 = vadd.f32 0.0, %v2269
    %v2271 = vpop.f32.mrf.mxu0
    %v2272 = vpop.f32.mrf.mxu0
    %v2273 = vadd.f32 0.0, %v2272
    %v2274 = vpop.f32.mrf.mxu0
    %2275 = vmatprep.mubr.bf16.mxu0 0
    %2276 = vmatmul.mubr.bf16.gmra.mxu0 %v2195
    %v2277 = vpop.f32.mrf.mxu0
    %v2278 = vadd.f32 0.0, %v2277
    %v2279 = vpop.f32.mrf.mxu0
    %v2280 = vpop.f32.mrf.mxu0
    %v2281 = vadd.f32 0.0, %v2280
    %v2282 = vpop.f32.mrf.mxu0
    %2283 = vmatprep.mubr.bf16.mxu0 0
    %2284 = vmatmul.mubr.bf16.gmra.mxu0 %v2198
    %v2285 = vpop.f32.mrf.mxu0
    %v2286 = vadd.f32 0.0, %v2285
    %v2287 = vpop.f32.mrf.mxu0
    %v2288 = vpop.f32.mrf.mxu0
    %v2289 = vadd.f32 0.0, %v2288
    %v2290 = vpop.f32.mrf.mxu0
    %2291 = vmatprep.mubr.bf16.mxu0 0
    %2292 = vmatmul.mubr.bf16.gmra.mxu0 %v2201
    %v2293 = vpop.f32.mrf.mxu0
    %v2294 = vadd.f32 0.0, %v2293
    %v2295 = vpop.f32.mrf.mxu0
    %v2296 = vpop.f32.mrf.mxu0
    %v2297 = vadd.f32 0.0, %v2296
    %v2298 = vpop.f32.mrf.mxu0
    %2299 = vdwg.mxu0
    %v2300 = vadd.f32 %v2037, %v2238
    %v2301 = vadd.f32 %v2040, %v2241
    %v2302 = vadd.f32 %v2045, %v2246
    %v2303 = vadd.f32 %v2048, %v2249
    %v2304 = vadd.f32 %v2053, %v2254
    %v2305 = vadd.f32 %v2056, %v2257
    %v2306 = vadd.f32 %v2061, %v2262
    %v2307 = vadd.f32 %v2064, %v2265
    %v2308 = vadd.f32 %v2069, %v2270
    %v2309 = vadd.f32 %v2072, %v2273
    %v2310 = vadd.f32 %v2077, %v2278
    %v2311 = vadd.f32 %v2080, %v2281
    %v2312 = vadd.f32 %v2085, %v2286
    %v2313 = vadd.f32 %v2088, %v2289
    %v2314 = vadd.f32 %v2093, %v2294
    %v2315 = vadd.f32 %v2096, %v2297
    %v2316 = vpack.c.bf16 %v1693, %v1691
    %v2317 = vpack.c.bf16 %v1697, %v1695
    %v2318 = vpack.c.bf16 %v1701, %v1699
    %v2319 = vpack.c.bf16 %v1705, %v1703
    %v2320 = vpack.c.bf16 %v1713, %v1711
    %v2321 = vpack.c.bf16 %v1717, %v1715
    %v2322 = vpack.c.bf16 %v1721, %v1719
    %v2323 = vpack.c.bf16 %v1725, %v1723
    %v2324 = vld [vmem:[%s3 + $0x18] sm:$0xf]
    %v2325 = vld [vmem:[%s3 + $0x1c] sm:$0xf]
    %v2328 = vunpack.c.l.b16 %v2324
    %v2329 = vunpack.c.l.b16 %v2325
    %v2330 = vpack.c.b16 %v2329, %v2328
    %v2333 = vsel %vm34, %v2316, 0
    %v2336 = vsel %vm34, %v2317, 0
    %v2339 = vsel %vm34, %v2318, 0
    %v2342 = vsel %vm34, %v2319, 0
    %v2345 = vsel %vm34, %v2320, 0
    %v2348 = vsel %vm34, %v2321, 0
    %v2351 = vsel %vm34, %v2322, 0
    %v2354 = vsel %vm34, %v2323, 0
    %2356 = vmatprep.subr.bf16.mxu0 0
    %2357 = vmatpush1.bf16.msra.mxu0 0
    %2358 = vmatprep.subr.bf16.mxu0 0
    %2359 = vmatpush1.bf16.msra.mxu0 0
    %2360 = vmatprep.subr.bf16.mxu0 0
    %2361 = vmatpush1.bf16.msra.mxu0 0
    %2362 = vmatprep.subr.bf16.mxu0 0
    %2363 = vmatpush1.bf16.msra.mxu0 0
    %2364 = vmatprep.subr.bf16.mxu0 0
    %2365 = vmatpush1.bf16.msra.mxu0 0
    %2366 = vmatprep.subr.bf16.mxu0 0
    %2367 = vmatpush1.bf16.msra.mxu0 0
    %2368 = vmatprep.subr.bf16.mxu0 0
    %2369 = vmatpush1.bf16.msra.mxu0 0
    %2370 = vmatprep.subr.bf16.mxu0 0
    %2371 = vmatpush1.bf16.msra.mxu0 %v2330
    %2372 = vmatprep.subr.bf16.mxu0 0
    %2373 = vmatpush2.bf16.msra.mxu0 0
    %2374 = vmatprep.subr.bf16.mxu0 0
    %2375 = vmatpush2.bf16.msra.mxu0 0
    %2376 = vmatprep.subr.bf16.mxu0 0
    %2377 = vmatpush2.bf16.msra.mxu0 0
    %2378 = vmatprep.subr.bf16.mxu0 0
    %2379 = vmatpush2.bf16.msra.mxu0 0
    %2380 = vmatprep.subr.bf16.mxu0 0
    %2381 = vmatpush2.bf16.msra.mxu0 0
    %2382 = vmatprep.subr.bf16.mxu0 0
    %2383 = vmatpush2.bf16.msra.mxu0 0
    %2384 = vmatprep.subr.bf16.mxu0 0
    %2385 = vmatpush2.bf16.msra.mxu0 0
    %2386 = vmatprep.subr.bf16.mxu0 0
    %2387 = vmatpush2.bf16.msra.mxu0 0
    %2388 = vmatprep.mubr.bf16.mxu0 0
    %2389 = vmatmul.mubr.bf16.gmra.mxu0 %v2333
    %v2390 = vpop.f32.mrf.mxu0
    %v2391 = vadd.f32 0.0, %v2390
    %v2392 = vpop.f32.mrf.mxu0
    %v2393 = vpop.f32.mrf.mxu0
    %v2394 = vadd.f32 0.0, %v2393
    %v2395 = vpop.f32.mrf.mxu0
    %2396 = vmatprep.mubr.bf16.mxu0 0
    %2397 = vmatmul.mubr.bf16.gmra.mxu0 %v2336
    %v2398 = vpop.f32.mrf.mxu0
    %v2399 = vadd.f32 0.0, %v2398
    %v2400 = vpop.f32.mrf.mxu0
    %v2401 = vpop.f32.mrf.mxu0
    %v2402 = vadd.f32 0.0, %v2401
    %v2403 = vpop.f32.mrf.mxu0
    %2404 = vmatprep.mubr.bf16.mxu0 0
    %2405 = vmatmul.mubr.bf16.gmra.mxu0 %v2339
    %v2406 = vpop.f32.mrf.mxu0
    %v2407 = vadd.f32 0.0, %v2406
    %v2408 = vpop.f32.mrf.mxu0
    %v2409 = vpop.f32.mrf.mxu0
    %v2410 = vadd.f32 0.0, %v2409
    %v2411 = vpop.f32.mrf.mxu0
    %2412 = vmatprep.mubr.bf16.mxu0 0
    %2413 = vmatmul.mubr.bf16.gmra.mxu0 %v2342
    %v2414 = vpop.f32.mrf.mxu0
    %v2415 = vadd.f32 0.0, %v2414
    %v2416 = vpop.f32.mrf.mxu0
    %v2417 = vpop.f32.mrf.mxu0
    %v2418 = vadd.f32 0.0, %v2417
    %v2419 = vpop.f32.mrf.mxu0
    %2420 = vmatprep.mubr.bf16.mxu0 0
    %2421 = vmatmul.mubr.bf16.gmra.mxu0 %v2345
    %v2422 = vpop.f32.mrf.mxu0
    %v2423 = vadd.f32 0.0, %v2422
    %v2424 = vpop.f32.mrf.mxu0
    %v2425 = vpop.f32.mrf.mxu0
    %v2426 = vadd.f32 0.0, %v2425
    %v2427 = vpop.f32.mrf.mxu0
    %2428 = vmatprep.mubr.bf16.mxu0 0
    %2429 = vmatmul.mubr.bf16.gmra.mxu0 %v2348
    %v2430 = vpop.f32.mrf.mxu0
    %v2431 = vadd.f32 0.0, %v2430
    %v2432 = vpop.f32.mrf.mxu0
    %v2433 = vpop.f32.mrf.mxu0
    %v2434 = vadd.f32 0.0, %v2433
    %v2435 = vpop.f32.mrf.mxu0
    %2436 = vmatprep.mubr.bf16.mxu0 0
    %2437 = vmatmul.mubr.bf16.gmra.mxu0 %v2351
    %v2438 = vpop.f32.mrf.mxu0
    %v2439 = vadd.f32 0.0, %v2438
    %v2440 = vpop.f32.mrf.mxu0
    %v2441 = vpop.f32.mrf.mxu0
    %v2442 = vadd.f32 0.0, %v2441
    %v2443 = vpop.f32.mrf.mxu0
    %2444 = vmatprep.mubr.bf16.mxu0 0
    %2445 = vmatmul.mubr.bf16.gmra.mxu0 %v2354
    %v2446 = vpop.f32.mrf.mxu0
    %v2447 = vadd.f32 0.0, %v2446
    %v2448 = vpop.f32.mrf.mxu0
    %v2449 = vpop.f32.mrf.mxu0
    %v2450 = vadd.f32 0.0, %v2449
    %v2451 = vpop.f32.mrf.mxu0
    %2452 = vdwg.mxu0
    %v2453 = vadd.f32 %v2300, %v2391
    %v2454 = vadd.f32 %v2301, %v2394
    %v2455 = vadd.f32 %v2302, %v2399
    %v2456 = vadd.f32 %v2303, %v2402
    %v2457 = vadd.f32 %v2304, %v2407
    %v2458 = vadd.f32 %v2305, %v2410
    %v2459 = vadd.f32 %v2306, %v2415
    %v2460 = vadd.f32 %v2307, %v2418
    %v2461 = vadd.f32 %v2308, %v2423
    %v2462 = vadd.f32 %v2309, %v2426
    %v2463 = vadd.f32 %v2310, %v2431
    %v2464 = vadd.f32 %v2311, %v2434
    %v2465 = vadd.f32 %v2312, %v2439
    %v2466 = vadd.f32 %v2313, %v2442
    %v2467 = vadd.f32 %v2314, %v2447
    %v2468 = vadd.f32 %v2315, %v2450
    %v2473 = vrot.slane %v1705, 1
    %v2474 = vrot.slane %v1706, 1
    %v2475 = vsel %vm201, %v2473, %v2474
    %v2476 = vrot.slane %v1725, 1
    %v2477 = vrot.slane %v1726, 1
    %v2478 = vsel %vm201, %v2476, %v2477
    %v2481 = vpack.c.bf16 %v1779, %v1776
    %v2482 = vpack.c.bf16 %v1785, %v1782
    %v2483 = vpack.c.bf16 %v1791, %v1788
    %v2484 = vpack.c.bf16 %v2475, %v1794
    %v2485 = vpack.c.bf16 %v1803, %v1800
    %v2486 = vpack.c.bf16 %v1809, %v1806
    %v2487 = vpack.c.bf16 %v1815, %v1812
    %v2488 = vpack.c.bf16 %v2478, %v1818
    %v2489 = vld [vmem:[%s3 + $0x20] sm:$0xf]
    %v2490 = vld [vmem:[%s3 + $0x24] sm:$0xf]
    %v2493 = vunpack.c.l.b16 %v2489
    %v2494 = vunpack.c.l.b16 %v2490
    %v2495 = vpack.c.b16 %v2494, %v2493
    %v2498 = vsel %vm34, %v2481, 0
    %v2501 = vsel %vm34, %v2482, 0
    %v2504 = vsel %vm34, %v2483, 0
    %v2507 = vsel %vm34, %v2484, 0
    %v2510 = vsel %vm34, %v2485, 0
    %v2513 = vsel %vm34, %v2486, 0
    %v2516 = vsel %vm34, %v2487, 0
    %v2519 = vsel %vm34, %v2488, 0
    %2521 = vmatprep.subr.bf16.mxu0 0
    %2522 = vmatpush1.bf16.msra.mxu0 0
    %2523 = vmatprep.subr.bf16.mxu0 0
    %2524 = vmatpush1.bf16.msra.mxu0 0
    %2525 = vmatprep.subr.bf16.mxu0 0
    %2526 = vmatpush1.bf16.msra.mxu0 0
    %2527 = vmatprep.subr.bf16.mxu0 0
    %2528 = vmatpush1.bf16.msra.mxu0 0
    %2529 = vmatprep.subr.bf16.mxu0 0
    %2530 = vmatpush1.bf16.msra.mxu0 0
    %2531 = vmatprep.subr.bf16.mxu0 0
    %2532 = vmatpush1.bf16.msra.mxu0 0
    %2533 = vmatprep.subr.bf16.mxu0 0
    %2534 = vmatpush1.bf16.msra.mxu0 0
    %2535 = vmatprep.subr.bf16.mxu0 0
    %2536 = vmatpush1.bf16.msra.mxu0 %v2495
    %2537 = vmatprep.subr.bf16.mxu0 0
    %2538 = vmatpush2.bf16.msra.mxu0 0
    %2539 = vmatprep.subr.bf16.mxu0 0
    %2540 = vmatpush2.bf16.msra.mxu0 0
    %2541 = vmatprep.subr.bf16.mxu0 0
    %2542 = vmatpush2.bf16.msra.mxu0 0
    %2543 = vmatprep.subr.bf16.mxu0 0
    %2544 = vmatpush2.bf16.msra.mxu0 0
    %2545 = vmatprep.subr.bf16.mxu0 0
    %2546 = vmatpush2.bf16.msra.mxu0 0
    %2547 = vmatprep.subr.bf16.mxu0 0
    %2548 = vmatpush2.bf16.msra.mxu0 0
    %2549 = vmatprep.subr.bf16.mxu0 0
    %2550 = vmatpush2.bf16.msra.mxu0 0
    %2551 = vmatprep.subr.bf16.mxu0 0
    %2552 = vmatpush2.bf16.msra.mxu0 0
    %2553 = vmatprep.mubr.bf16.mxu0 0
    %2554 = vmatmul.mubr.bf16.gmra.mxu0 %v2498
    %v2555 = vpop.f32.mrf.mxu0
    %v2556 = vadd.f32 0.0, %v2555
    %v2557 = vpop.f32.mrf.mxu0
    %v2558 = vpop.f32.mrf.mxu0
    %v2559 = vadd.f32 0.0, %v2558
    %v2560 = vpop.f32.mrf.mxu0
    %2561 = vmatprep.mubr.bf16.mxu0 0
    %2562 = vmatmul.mubr.bf16.gmra.mxu0 %v2501
    %v2563 = vpop.f32.mrf.mxu0
    %v2564 = vadd.f32 0.0, %v2563
    %v2565 = vpop.f32.mrf.mxu0
    %v2566 = vpop.f32.mrf.mxu0
    %v2567 = vadd.f32 0.0, %v2566
    %v2568 = vpop.f32.mrf.mxu0
    %2569 = vmatprep.mubr.bf16.mxu0 0
    %2570 = vmatmul.mubr.bf16.gmra.mxu0 %v2504
    %v2571 = vpop.f32.mrf.mxu0
    %v2572 = vadd.f32 0.0, %v2571
    %v2573 = vpop.f32.mrf.mxu0
    %v2574 = vpop.f32.mrf.mxu0
    %v2575 = vadd.f32 0.0, %v2574
    %v2576 = vpop.f32.mrf.mxu0
    %2577 = vmatprep.mubr.bf16.mxu0 0
    %2578 = vmatmul.mubr.bf16.gmra.mxu0 %v2507
    %v2579 = vpop.f32.mrf.mxu0
    %v2580 = vadd.f32 0.0, %v2579
    %v2581 = vpop.f32.mrf.mxu0
    %v2582 = vpop.f32.mrf.mxu0
    %v2583 = vadd.f32 0.0, %v2582
    %v2584 = vpop.f32.mrf.mxu0
    %2585 = vmatprep.mubr.bf16.mxu0 0
    %2586 = vmatmul.mubr.bf16.gmra.mxu0 %v2510
    %v2587 = vpop.f32.mrf.mxu0
    %v2588 = vadd.f32 0.0, %v2587
    %v2589 = vpop.f32.mrf.mxu0
    %v2590 = vpop.f32.mrf.mxu0
    %v2591 = vadd.f32 0.0, %v2590
    %v2592 = vpop.f32.mrf.mxu0
    %2593 = vmatprep.mubr.bf16.mxu0 0
    %2594 = vmatmul.mubr.bf16.gmra.mxu0 %v2513
    %v2595 = vpop.f32.mrf.mxu0
    %v2596 = vadd.f32 0.0, %v2595
    %v2597 = vpop.f32.mrf.mxu0
    %v2598 = vpop.f32.mrf.mxu0
    %v2599 = vadd.f32 0.0, %v2598
    %v2600 = vpop.f32.mrf.mxu0
    %2601 = vmatprep.mubr.bf16.mxu0 0
    %2602 = vmatmul.mubr.bf16.gmra.mxu0 %v2516
    %v2603 = vpop.f32.mrf.mxu0
    %v2604 = vadd.f32 0.0, %v2603
    %v2605 = vpop.f32.mrf.mxu0
    %v2606 = vpop.f32.mrf.mxu0
    %v2607 = vadd.f32 0.0, %v2606
    %v2608 = vpop.f32.mrf.mxu0
    %2609 = vmatprep.mubr.bf16.mxu0 0
    %2610 = vmatmul.mubr.bf16.gmra.mxu0 %v2519
    %v2611 = vpop.f32.mrf.mxu0
    %v2612 = vadd.f32 0.0, %v2611
    %v2613 = vpop.f32.mrf.mxu0
    %v2614 = vpop.f32.mrf.mxu0
    %v2615 = vadd.f32 0.0, %v2614
    %v2616 = vpop.f32.mrf.mxu0
    %2617 = vdwg.mxu0
    %v2618 = vadd.f32 %v2453, %v2556
    %v2619 = vadd.f32 %v2454, %v2559
    %v2620 = vadd.f32 %v2455, %v2564
    %v2621 = vadd.f32 %v2456, %v2567
    %v2622 = vadd.f32 %v2457, %v2572
    %v2623 = vadd.f32 %v2458, %v2575
    %v2624 = vadd.f32 %v2459, %v2580
    %v2625 = vadd.f32 %v2460, %v2583
    %v2626 = vadd.f32 %v2461, %v2588
    %v2627 = vadd.f32 %v2462, %v2591
    %v2628 = vadd.f32 %v2463, %v2596
    %v2629 = vadd.f32 %v2464, %v2599
    %v2630 = vadd.f32 %v2465, %v2604
    %v2631 = vadd.f32 %v2466, %v2607
    %v2632 = vadd.f32 %v2467, %v2612
    %v2633 = vadd.f32 %v2468, %v2615
    %v2634 = vrot.slane %v1705, 2
    %v2635 = vrot.slane %v1706, 2
    %v2636 = vsel %vm530, %v2634, %v2635
    %v2637 = vrot.slane %v1725, 2
    %v2638 = vrot.slane %v1726, 2
    %v2639 = vsel %vm530, %v2637, %v2638
    %v2642 = vpack.c.bf16 %v2107, %v2104
    %v2643 = vpack.c.bf16 %v2113, %v2110
    %v2644 = vpack.c.bf16 %v2119, %v2116
    %v2645 = vpack.c.bf16 %v2636, %v2122
    %v2646 = vpack.c.bf16 %v2131, %v2128
    %v2647 = vpack.c.bf16 %v2137, %v2134
    %v2648 = vpack.c.bf16 %v2143, %v2140
    %v2649 = vpack.c.bf16 %v2639, %v2146
    %v2650 = vld [vmem:[%s3 + $0x28] sm:$0xf]
    %v2651 = vld [vmem:[%s3 + $0x2c] sm:$0xf]
    %v2654 = vunpack.c.l.b16 %v2650
    %v2655 = vunpack.c.l.b16 %v2651
    %v2656 = vpack.c.b16 %v2655, %v2654
    %v2659 = vsel %vm34, %v2642, 0
    %v2662 = vsel %vm34, %v2643, 0
    %v2665 = vsel %vm34, %v2644, 0
    %v2668 = vsel %vm34, %v2645, 0
    %v2671 = vsel %vm34, %v2646, 0
    %v2674 = vsel %vm34, %v2647, 0
    %v2677 = vsel %vm34, %v2648, 0
    %v2680 = vsel %vm34, %v2649, 0
    %2682 = vmatprep.subr.bf16.mxu0 0
    %2683 = vmatpush1.bf16.msra.mxu0 0
    %2684 = vmatprep.subr.bf16.mxu0 0
    %2685 = vmatpush1.bf16.msra.mxu0 0
    %2686 = vmatprep.subr.bf16.mxu0 0
    %2687 = vmatpush1.bf16.msra.mxu0 0
    %2688 = vmatprep.subr.bf16.mxu0 0
    %2689 = vmatpush1.bf16.msra.mxu0 0
    %2690 = vmatprep.subr.bf16.mxu0 0
    %2691 = vmatpush1.bf16.msra.mxu0 0
    %2692 = vmatprep.subr.bf16.mxu0 0
    %2693 = vmatpush1.bf16.msra.mxu0 0
    %2694 = vmatprep.subr.bf16.mxu0 0
    %2695 = vmatpush1.bf16.msra.mxu0 0
    %2696 = vmatprep.subr.bf16.mxu0 0
    %2697 = vmatpush1.bf16.msra.mxu0 %v2656
    %2698 = vmatprep.subr.bf16.mxu0 0
    %2699 = vmatpush2.bf16.msra.mxu0 0
    %2700 = vmatprep.subr.bf16.mxu0 0
    %2701 = vmatpush2.bf16.msra.mxu0 0
    %2702 = vmatprep.subr.bf16.mxu0 0
    %2703 = vmatpush2.bf16.msra.mxu0 0
    %2704 = vmatprep.subr.bf16.mxu0 0
    %2705 = vmatpush2.bf16.msra.mxu0 0
    %2706 = vmatprep.subr.bf16.mxu0 0
    %2707 = vmatpush2.bf16.msra.mxu0 0
    %2708 = vmatprep.subr.bf16.mxu0 0
    %2709 = vmatpush2.bf16.msra.mxu0 0
    %2710 = vmatprep.subr.bf16.mxu0 0
    %2711 = vmatpush2.bf16.msra.mxu0 0
    %2712 = vmatprep.subr.bf16.mxu0 0
    %2713 = vmatpush2.bf16.msra.mxu0 0
    %2714 = vmatprep.mubr.bf16.mxu0 0
    %2715 = vmatmul.mubr.bf16.gmra.mxu0 %v2659
    %v2716 = vpop.f32.mrf.mxu0
    %v2717 = vadd.f32 0.0, %v2716
    %v2718 = vpop.f32.mrf.mxu0
    %v2719 = vpop.f32.mrf.mxu0
    %v2720 = vadd.f32 0.0, %v2719
    %v2721 = vpop.f32.mrf.mxu0
    %2722 = vmatprep.mubr.bf16.mxu0 0
    %2723 = vmatmul.mubr.bf16.gmra.mxu0 %v2662
    %v2724 = vpop.f32.mrf.mxu0
    %v2725 = vadd.f32 0.0, %v2724
    %v2726 = vpop.f32.mrf.mxu0
    %v2727 = vpop.f32.mrf.mxu0
    %v2728 = vadd.f32 0.0, %v2727
    %v2729 = vpop.f32.mrf.mxu0
    %2730 = vmatprep.mubr.bf16.mxu0 0
    %2731 = vmatmul.mubr.bf16.gmra.mxu0 %v2665
    %v2732 = vpop.f32.mrf.mxu0
    %v2733 = vadd.f32 0.0, %v2732
    %v2734 = vpop.f32.mrf.mxu0
    %v2735 = vpop.f32.mrf.mxu0
    %v2736 = vadd.f32 0.0, %v2735
    %v2737 = vpop.f32.mrf.mxu0
    %2738 = vmatprep.mubr.bf16.mxu0 0
    %2739 = vmatmul.mubr.bf16.gmra.mxu0 %v2668
    %v2740 = vpop.f32.mrf.mxu0
    %v2741 = vadd.f32 0.0, %v2740
    %v2742 = vpop.f32.mrf.mxu0
    %v2743 = vpop.f32.mrf.mxu0
    %v2744 = vadd.f32 0.0, %v2743
    %v2745 = vpop.f32.mrf.mxu0
    %2746 = vmatprep.mubr.bf16.mxu0 0
    %2747 = vmatmul.mubr.bf16.gmra.mxu0 %v2671
    %v2748 = vpop.f32.mrf.mxu0
    %v2749 = vadd.f32 0.0, %v2748
    %v2750 = vpop.f32.mrf.mxu0
    %v2751 = vpop.f32.mrf.mxu0
    %v2752 = vadd.f32 0.0, %v2751
    %v2753 = vpop.f32.mrf.mxu0
    %2754 = vmatprep.mubr.bf16.mxu0 0
    %2755 = vmatmul.mubr.bf16.gmra.mxu0 %v2674
    %v2756 = vpop.f32.mrf.mxu0
    %v2757 = vadd.f32 0.0, %v2756
    %v2758 = vpop.f32.mrf.mxu0
    %v2759 = vpop.f32.mrf.mxu0
    %v2760 = vadd.f32 0.0, %v2759
    %v2761 = vpop.f32.mrf.mxu0
    %2762 = vmatprep.mubr.bf16.mxu0 0
    %2763 = vmatmul.mubr.bf16.gmra.mxu0 %v2677
    %v2764 = vpop.f32.mrf.mxu0
    %v2765 = vadd.f32 0.0, %v2764
    %v2766 = vpop.f32.mrf.mxu0
    %v2767 = vpop.f32.mrf.mxu0
    %v2768 = vadd.f32 0.0, %v2767
    %v2769 = vpop.f32.mrf.mxu0
    %2770 = vmatprep.mubr.bf16.mxu0 0
    %2771 = vmatmul.mubr.bf16.gmra.mxu0 %v2680
    %v2772 = vpop.f32.mrf.mxu0
    %v2773 = vadd.f32 0.0, %v2772
    %v2774 = vpop.f32.mrf.mxu0
    %v2775 = vpop.f32.mrf.mxu0
    %v2776 = vadd.f32 0.0, %v2775
    %v2777 = vpop.f32.mrf.mxu0
    %2778 = vdwg.mxu0
    %v2779 = vadd.f32 %v2618, %v2717
    %v2780 = vadd.f32 %v2619, %v2720
    %v2781 = vadd.f32 %v2620, %v2725
    %v2782 = vadd.f32 %v2621, %v2728
    %v2783 = vadd.f32 %v2622, %v2733
    %v2784 = vadd.f32 %v2623, %v2736
    %v2785 = vadd.f32 %v2624, %v2741
    %v2786 = vadd.f32 %v2625, %v2744
    %v2787 = vadd.f32 %v2626, %v2749
    %v2788 = vadd.f32 %v2627, %v2752
    %v2789 = vadd.f32 %v2628, %v2757
    %v2790 = vadd.f32 %v2629, %v2760
    %v2791 = vadd.f32 %v2630, %v2765
    %v2792 = vadd.f32 %v2631, %v2768
    %v2793 = vadd.f32 %v2632, %v2773
    %v2794 = vadd.f32 %v2633, %v2776
    %v2795 = vpack.c.bf16 %v1707, %v1705
    %v2796 = vpack.c.bf16 %v1727, %v1725
    %v2797 = vld [vmem:[%s3 + $0x30] sm:$0xf]
    %v2798 = vld [vmem:[%s3 + $0x34] sm:$0xf]
    %v2801 = vunpack.c.l.b16 %v2797
    %v2802 = vunpack.c.l.b16 %v2798
    %v2803 = vpack.c.b16 %v2802, %v2801
    %v2806 = vsel %vm34, %v2795, 0
    %v2809 = vsel %vm34, %v2796, 0
    %2811 = vmatprep.subr.bf16.mxu0 0
    %2812 = vmatpush1.bf16.msra.mxu0 0
    %2813 = vmatprep.subr.bf16.mxu0 0
    %2814 = vmatpush1.bf16.msra.mxu0 0
    %2815 = vmatprep.subr.bf16.mxu0 0
    %2816 = vmatpush1.bf16.msra.mxu0 0
    %2817 = vmatprep.subr.bf16.mxu0 0
    %2818 = vmatpush1.bf16.msra.mxu0 0
    %2819 = vmatprep.subr.bf16.mxu0 0
    %2820 = vmatpush1.bf16.msra.mxu0 0
    %2821 = vmatprep.subr.bf16.mxu0 0
    %2822 = vmatpush1.bf16.msra.mxu0 0
    %2823 = vmatprep.subr.bf16.mxu0 0
    %2824 = vmatpush1.bf16.msra.mxu0 0
    %2825 = vmatprep.subr.bf16.mxu0 0
    %2826 = vmatpush1.bf16.msra.mxu0 %v2803
    %2827 = vmatprep.subr.bf16.mxu0 0
    %2828 = vmatpush2.bf16.msra.mxu0 0
    %2829 = vmatprep.subr.bf16.mxu0 0
    %2830 = vmatpush2.bf16.msra.mxu0 0
    %2831 = vmatprep.subr.bf16.mxu0 0
    %2832 = vmatpush2.bf16.msra.mxu0 0
    %2833 = vmatprep.subr.bf16.mxu0 0
    %2834 = vmatpush2.bf16.msra.mxu0 0
    %2835 = vmatprep.subr.bf16.mxu0 0
    %2836 = vmatpush2.bf16.msra.mxu0 0
    %2837 = vmatprep.subr.bf16.mxu0 0
    %2838 = vmatpush2.bf16.msra.mxu0 0
    %2839 = vmatprep.subr.bf16.mxu0 0
    %2840 = vmatpush2.bf16.msra.mxu0 0
    %2841 = vmatprep.subr.bf16.mxu0 0
    %2842 = vmatpush2.bf16.msra.mxu0 0
    %2843 = vmatprep.mubr.bf16.mxu0 0
    %2844 = vmatmul.mubr.bf16.gmra.mxu0 %v1982
    %v2845 = vpop.f32.mrf.mxu0
    %v2846 = vadd.f32 0.0, %v2845
    %v2847 = vpop.f32.mrf.mxu0
    %v2848 = vpop.f32.mrf.mxu0
    %v2849 = vadd.f32 0.0, %v2848
    %v2850 = vpop.f32.mrf.mxu0
    %2851 = vmatprep.mubr.bf16.mxu0 0
    %2852 = vmatmul.mubr.bf16.gmra.mxu0 %v1985
    %v2853 = vpop.f32.mrf.mxu0
    %v2854 = vadd.f32 0.0, %v2853
    %v2855 = vpop.f32.mrf.mxu0
    %v2856 = vpop.f32.mrf.mxu0
    %v2857 = vadd.f32 0.0, %v2856
    %v2858 = vpop.f32.mrf.mxu0
    %2859 = vmatprep.mubr.bf16.mxu0 0
    %2860 = vmatmul.mubr.bf16.gmra.mxu0 %v1988
    %v2861 = vpop.f32.mrf.mxu0
    %v2862 = vadd.f32 0.0, %v2861
    %v2863 = vpop.f32.mrf.mxu0
    %v2864 = vpop.f32.mrf.mxu0
    %v2865 = vadd.f32 0.0, %v2864
    %v2866 = vpop.f32.mrf.mxu0
    %2867 = vmatprep.mubr.bf16.mxu0 0
    %2868 = vmatmul.mubr.bf16.gmra.mxu0 %v2806
    %v2869 = vpop.f32.mrf.mxu0
    %v2870 = vadd.f32 0.0, %v2869
    %v2871 = vpop.f32.mrf.mxu0
    %v2872 = vpop.f32.mrf.mxu0
    %v2873 = vadd.f32 0.0, %v2872
    %v2874 = vpop.f32.mrf.mxu0
    %2875 = vmatprep.mubr.bf16.mxu0 0
    %2876 = vmatmul.mubr.bf16.gmra.mxu0 %v1994
    %v2877 = vpop.f32.mrf.mxu0
    %v2878 = vadd.f32 0.0, %v2877
    %v2879 = vpop.f32.mrf.mxu0
    %v2880 = vpop.f32.mrf.mxu0
    %v2881 = vadd.f32 0.0, %v2880
    %v2882 = vpop.f32.mrf.mxu0
    %2883 = vmatprep.mubr.bf16.mxu0 0
    %2884 = vmatmul.mubr.bf16.gmra.mxu0 %v1997
    %v2885 = vpop.f32.mrf.mxu0
    %v2886 = vadd.f32 0.0, %v2885
    %v2887 = vpop.f32.mrf.mxu0
    %v2888 = vpop.f32.mrf.mxu0
    %v2889 = vadd.f32 0.0, %v2888
    %v2890 = vpop.f32.mrf.mxu0
    %2891 = vmatprep.mubr.bf16.mxu0 0
    %2892 = vmatmul.mubr.bf16.gmra.mxu0 %v2000
    %v2893 = vpop.f32.mrf.mxu0
    %v2894 = vadd.f32 0.0, %v2893
    %v2895 = vpop.f32.mrf.mxu0
    %v2896 = vpop.f32.mrf.mxu0
    %v2897 = vadd.f32 0.0, %v2896
    %v2898 = vpop.f32.mrf.mxu0
    %2899 = vmatprep.mubr.bf16.mxu0 0
    %2900 = vmatmul.mubr.bf16.gmra.mxu0 %v2809
    %v2901 = vpop.f32.mrf.mxu0
    %v2902 = vadd.f32 0.0, %v2901
    %v2903 = vpop.f32.mrf.mxu0
    %v2904 = vpop.f32.mrf.mxu0
    %v2905 = vadd.f32 0.0, %v2904
    %v2906 = vpop.f32.mrf.mxu0
    %2907 = vdwg.mxu0
    %v2908 = vadd.f32 %v2779, %v2846
    %v2909 = vadd.f32 %v2780, %v2849
    %v2910 = vadd.f32 %v2781, %v2854
    %v2911 = vadd.f32 %v2782, %v2857
    %v2912 = vadd.f32 %v2783, %v2862
    %v2913 = vadd.f32 %v2784, %v2865
    %v2914 = vadd.f32 %v2785, %v2870
    %v2915 = vadd.f32 %v2786, %v2873
    %v2916 = vadd.f32 %v2787, %v2878
    %v2917 = vadd.f32 %v2788, %v2881
    %v2918 = vadd.f32 %v2789, %v2886
    %v2919 = vadd.f32 %v2790, %v2889
    %v2920 = vadd.f32 %v2791, %v2894
    %v2921 = vadd.f32 %v2792, %v2897
    %v2922 = vadd.f32 %v2793, %v2902
    %v2923 = vadd.f32 %v2794, %v2905
    %v2928 = vrot.slane %v1707, 1
    %v2929 = vrot.slane %v1708, 1
    %v2930 = vsel %vm201, %v2928, %v2929
    %v2931 = vrot.slane %v1727, 1
    %v2932 = vrot.slane %v1728, 1
    %v2933 = vsel %vm201, %v2931, %v2932
    %v2936 = vpack.c.bf16 %v2930, %v2475
    %v2937 = vpack.c.bf16 %v2933, %v2478
    %v2938 = vld [vmem:[%s3 + $0x38] sm:$0xf]
    %v2939 = vld [vmem:[%s3 + $0x3c] sm:$0xf]
    %v2942 = vunpack.c.l.b16 %v2938
    %v2943 = vunpack.c.l.b16 %v2939
    %v2944 = vpack.c.b16 %v2943, %v2942
    %v2947 = vsel %vm34, %v2936, 0
    %v2950 = vsel %vm34, %v2937, 0
    %2952 = vmatprep.subr.bf16.mxu0 0
    %2953 = vmatpush1.bf16.msra.mxu0 0
    %2954 = vmatprep.subr.bf16.mxu0 0
    %2955 = vmatpush1.bf16.msra.mxu0 0
    %2956 = vmatprep.subr.bf16.mxu0 0
    %2957 = vmatpush1.bf16.msra.mxu0 0
    %2958 = vmatprep.subr.bf16.mxu0 0
    %2959 = vmatpush1.bf16.msra.mxu0 0
    %2960 = vmatprep.subr.bf16.mxu0 0
    %2961 = vmatpush1.bf16.msra.mxu0 0
    %2962 = vmatprep.subr.bf16.mxu0 0
    %2963 = vmatpush1.bf16.msra.mxu0 0
    %2964 = vmatprep.subr.bf16.mxu0 0
    %2965 = vmatpush1.bf16.msra.mxu0 0
    %2966 = vmatprep.subr.bf16.mxu0 0
    %2967 = vmatpush1.bf16.msra.mxu0 %v2944
    %2968 = vmatprep.subr.bf16.mxu0 0
    %2969 = vmatpush2.bf16.msra.mxu0 0
    %2970 = vmatprep.subr.bf16.mxu0 0
    %2971 = vmatpush2.bf16.msra.mxu0 0
    %2972 = vmatprep.subr.bf16.mxu0 0
    %2973 = vmatpush2.bf16.msra.mxu0 0
    %2974 = vmatprep.subr.bf16.mxu0 0
    %2975 = vmatpush2.bf16.msra.mxu0 0
    %2976 = vmatprep.subr.bf16.mxu0 0
    %2977 = vmatpush2.bf16.msra.mxu0 0
    %2978 = vmatprep.subr.bf16.mxu0 0
    %2979 = vmatpush2.bf16.msra.mxu0 0
    %2980 = vmatprep.subr.bf16.mxu0 0
    %2981 = vmatpush2.bf16.msra.mxu0 0
    %2982 = vmatprep.subr.bf16.mxu0 0
    %2983 = vmatpush2.bf16.msra.mxu0 0
    %2984 = vmatprep.mubr.bf16.mxu0 0
    %2985 = vmatmul.mubr.bf16.gmra.mxu0 %v1855
    %v2986 = vpop.f32.mrf.mxu0
    %v2987 = vadd.f32 0.0, %v2986
    %v2988 = vpop.f32.mrf.mxu0
    %v2989 = vpop.f32.mrf.mxu0
    %v2990 = vadd.f32 0.0, %v2989
    %v2991 = vpop.f32.mrf.mxu0
    %2992 = vmatprep.mubr.bf16.mxu0 0
    %2993 = vmatmul.mubr.bf16.gmra.mxu0 %v1858
    %v2994 = vpop.f32.mrf.mxu0
    %v2995 = vadd.f32 0.0, %v2994
    %v2996 = vpop.f32.mrf.mxu0
    %v2997 = vpop.f32.mrf.mxu0
    %v2998 = vadd.f32 0.0, %v2997
    %v2999 = vpop.f32.mrf.mxu0
    %3000 = vmatprep.mubr.bf16.mxu0 0
    %3001 = vmatmul.mubr.bf16.gmra.mxu0 %v1861
    %v3002 = vpop.f32.mrf.mxu0
    %v3003 = vadd.f32 0.0, %v3002
    %v3004 = vpop.f32.mrf.mxu0
    %v3005 = vpop.f32.mrf.mxu0
    %v3006 = vadd.f32 0.0, %v3005
    %v3007 = vpop.f32.mrf.mxu0
    %3008 = vmatprep.mubr.bf16.mxu0 0
    %3009 = vmatmul.mubr.bf16.gmra.mxu0 %v2947
    %v3010 = vpop.f32.mrf.mxu0
    %v3011 = vadd.f32 0.0, %v3010
    %v3012 = vpop.f32.mrf.mxu0
    %v3013 = vpop.f32.mrf.mxu0
    %v3014 = vadd.f32 0.0, %v3013
    %v3015 = vpop.f32.mrf.mxu0
    %3016 = vmatprep.mubr.bf16.mxu0 0
    %3017 = vmatmul.mubr.bf16.gmra.mxu0 %v1867
    %v3018 = vpop.f32.mrf.mxu0
    %v3019 = vadd.f32 0.0, %v3018
    %v3020 = vpop.f32.mrf.mxu0
    %v3021 = vpop.f32.mrf.mxu0
    %v3022 = vadd.f32 0.0, %v3021
    %v3023 = vpop.f32.mrf.mxu0
    %3024 = vmatprep.mubr.bf16.mxu0 0
    %3025 = vmatmul.mubr.bf16.gmra.mxu0 %v1870
    %v3026 = vpop.f32.mrf.mxu0
    %v3027 = vadd.f32 0.0, %v3026
    %v3028 = vpop.f32.mrf.mxu0
    %v3029 = vpop.f32.mrf.mxu0
    %v3030 = vadd.f32 0.0, %v3029
    %v3031 = vpop.f32.mrf.mxu0
    %3032 = vmatprep.mubr.bf16.mxu0 0
    %3033 = vmatmul.mubr.bf16.gmra.mxu0 %v1873
    %v3034 = vpop.f32.mrf.mxu0
    %v3035 = vadd.f32 0.0, %v3034
    %v3036 = vpop.f32.mrf.mxu0
    %v3037 = vpop.f32.mrf.mxu0
    %v3038 = vadd.f32 0.0, %v3037
    %v3039 = vpop.f32.mrf.mxu0
    %3040 = vmatprep.mubr.bf16.mxu0 0
    %3041 = vmatmul.mubr.bf16.gmra.mxu0 %v2950
    %v3042 = vpop.f32.mrf.mxu0
    %v3043 = vadd.f32 0.0, %v3042
    %v3044 = vpop.f32.mrf.mxu0
    %v3045 = vpop.f32.mrf.mxu0
    %v3046 = vadd.f32 0.0, %v3045
    %v3047 = vpop.f32.mrf.mxu0
    %3048 = vdwg.mxu0
    %v3049 = vadd.f32 %v2908, %v2987
    %v3050 = vadd.f32 %v2909, %v2990
    %v3051 = vadd.f32 %v2910, %v2995
    %v3052 = vadd.f32 %v2911, %v2998
    %v3053 = vadd.f32 %v2912, %v3003
    %v3054 = vadd.f32 %v2913, %v3006
    %v3055 = vadd.f32 %v2914, %v3011
    %v3056 = vadd.f32 %v2915, %v3014
    %v3057 = vadd.f32 %v2916, %v3019
    %v3058 = vadd.f32 %v2917, %v3022
    %v3059 = vadd.f32 %v2918, %v3027
    %v3060 = vadd.f32 %v2919, %v3030
    %v3061 = vadd.f32 %v2920, %v3035
    %v3062 = vadd.f32 %v2921, %v3038
    %v3063 = vadd.f32 %v2922, %v3043
    %v3064 = vadd.f32 %v2923, %v3046
    %v3065 = vrot.slane %v1707, 2
    %v3066 = vrot.slane %v1708, 2
    %v3067 = vsel %vm530, %v3065, %v3066
    %v3068 = vrot.slane %v1727, 2
    %v3069 = vrot.slane %v1728, 2
    %v3070 = vsel %vm530, %v3068, %v3069
    %v3073 = vpack.c.bf16 %v3067, %v2636
    %v3074 = vpack.c.bf16 %v3070, %v2639
    %v3075 = vld [vmem:[%s3 + $0x40] sm:$0xf]
    %v3076 = vld [vmem:[%s3 + $0x44] sm:$0xf]
    %v3079 = vunpack.c.l.b16 %v3075
    %v3080 = vunpack.c.l.b16 %v3076
    %v3081 = vpack.c.b16 %v3080, %v3079
    %v3084 = vsel %vm34, %v3073, 0
    %v3087 = vsel %vm34, %v3074, 0
    %3089 = vmatprep.subr.bf16.mxu0 0
    %3090 = vmatpush1.bf16.msra.mxu0 0
    %3091 = vmatprep.subr.bf16.mxu0 0
    %3092 = vmatpush1.bf16.msra.mxu0 0
    %3093 = vmatprep.subr.bf16.mxu0 0
    %3094 = vmatpush1.bf16.msra.mxu0 0
    %3095 = vmatprep.subr.bf16.mxu0 0
    %3096 = vmatpush1.bf16.msra.mxu0 0
    %3097 = vmatprep.subr.bf16.mxu0 0
    %3098 = vmatpush1.bf16.msra.mxu0 0
    %3099 = vmatprep.subr.bf16.mxu0 0
    %3100 = vmatpush1.bf16.msra.mxu0 0
    %3101 = vmatprep.subr.bf16.mxu0 0
    %3102 = vmatpush1.bf16.msra.mxu0 0
    %3103 = vmatprep.subr.bf16.mxu0 0
    %3104 = vmatpush1.bf16.msra.mxu0 %v3081
    %3105 = vmatprep.subr.bf16.mxu0 0
    %3106 = vmatpush2.bf16.msra.mxu0 0
    %3107 = vmatprep.subr.bf16.mxu0 0
    %3108 = vmatpush2.bf16.msra.mxu0 0
    %3109 = vmatprep.subr.bf16.mxu0 0
    %3110 = vmatpush2.bf16.msra.mxu0 0
    %3111 = vmatprep.subr.bf16.mxu0 0
    %3112 = vmatpush2.bf16.msra.mxu0 0
    %3113 = vmatprep.subr.bf16.mxu0 0
    %3114 = vmatpush2.bf16.msra.mxu0 0
    %3115 = vmatprep.subr.bf16.mxu0 0
    %3116 = vmatpush2.bf16.msra.mxu0 0
    %3117 = vmatprep.subr.bf16.mxu0 0
    %3118 = vmatpush2.bf16.msra.mxu0 0
    %3119 = vmatprep.subr.bf16.mxu0 0
    %3120 = vmatpush2.bf16.msra.mxu0 0
    %3121 = vmatprep.mubr.bf16.mxu0 0
    %3122 = vmatmul.mubr.bf16.gmra.mxu0 %v2183
    %v3123 = vpop.f32.mrf.mxu0
    %v3124 = vadd.f32 0.0, %v3123
    %v3125 = vpop.f32.mrf.mxu0
    %v3126 = vpop.f32.mrf.mxu0
    %v3127 = vadd.f32 0.0, %v3126
    %v3128 = vpop.f32.mrf.mxu0
    %3129 = vmatprep.mubr.bf16.mxu0 0
    %3130 = vmatmul.mubr.bf16.gmra.mxu0 %v2186
    %v3131 = vpop.f32.mrf.mxu0
    %v3132 = vadd.f32 0.0, %v3131
    %v3133 = vpop.f32.mrf.mxu0
    %v3134 = vpop.f32.mrf.mxu0
    %v3135 = vadd.f32 0.0, %v3134
    %v3136 = vpop.f32.mrf.mxu0
    %3137 = vmatprep.mubr.bf16.mxu0 0
    %3138 = vmatmul.mubr.bf16.gmra.mxu0 %v2189
    %v3139 = vpop.f32.mrf.mxu0
    %v3140 = vadd.f32 0.0, %v3139
    %v3141 = vpop.f32.mrf.mxu0
    %v3142 = vpop.f32.mrf.mxu0
    %v3143 = vadd.f32 0.0, %v3142
    %v3144 = vpop.f32.mrf.mxu0
    %3145 = vmatprep.mubr.bf16.mxu0 0
    %3146 = vmatmul.mubr.bf16.gmra.mxu0 %v3084
    %v3147 = vpop.f32.mrf.mxu0
    %v3148 = vadd.f32 0.0, %v3147
    %v3149 = vpop.f32.mrf.mxu0
    %v3150 = vpop.f32.mrf.mxu0
    %v3151 = vadd.f32 0.0, %v3150
    %v3152 = vpop.f32.mrf.mxu0
    %3153 = vmatprep.mubr.bf16.mxu0 0
    %3154 = vmatmul.mubr.bf16.gmra.mxu0 %v2195
    %v3155 = vpop.f32.mrf.mxu0
    %v3156 = vadd.f32 0.0, %v3155
    %v3157 = vpop.f32.mrf.mxu0
    %v3158 = vpop.f32.mrf.mxu0
    %v3159 = vadd.f32 0.0, %v3158
    %v3160 = vpop.f32.mrf.mxu0
    %3161 = vmatprep.mubr.bf16.mxu0 0
    %3162 = vmatmul.mubr.bf16.gmra.mxu0 %v2198
    %v3163 = vpop.f32.mrf.mxu0
    %v3164 = vadd.f32 0.0, %v3163
    %v3165 = vpop.f32.mrf.mxu0
    %v3166 = vpop.f32.mrf.mxu0
    %v3167 = vadd.f32 0.0, %v3166
    %v3168 = vpop.f32.mrf.mxu0
    %3169 = vmatprep.mubr.bf16.mxu0 0
    %3170 = vmatmul.mubr.bf16.gmra.mxu0 %v2201
    %v3171 = vpop.f32.mrf.mxu0
    %v3172 = vadd.f32 0.0, %v3171
    %v3173 = vpop.f32.mrf.mxu0
    %v3174 = vpop.f32.mrf.mxu0
    %v3175 = vadd.f32 0.0, %v3174
    %v3176 = vpop.f32.mrf.mxu0
    %3177 = vmatprep.mubr.bf16.mxu0 0
    %3178 = vmatmul.mubr.bf16.gmra.mxu0 %v3087
    %v3179 = vpop.f32.mrf.mxu0
    %v3180 = vadd.f32 0.0, %v3179
    %v3181 = vpop.f32.mrf.mxu0
    %v3182 = vpop.f32.mrf.mxu0
    %v3183 = vadd.f32 0.0, %v3182
    %v3184 = vpop.f32.mrf.mxu0
    %3185 = vdwg.mxu0
    %v3186 = vadd.f32 %v3049, %v3124
    %v3187 = vadd.f32 %v3050, %v3127
    %v3188 = vadd.f32 %v3051, %v3132
    %v3189 = vadd.f32 %v3052, %v3135
    %v3190 = vadd.f32 %v3053, %v3140
    %v3191 = vadd.f32 %v3054, %v3143
    %v3192 = vadd.f32 %v3055, %v3148
    %v3193 = vadd.f32 %v3056, %v3151
    %v3194 = vadd.f32 %v3057, %v3156
    %v3195 = vadd.f32 %v3058, %v3159
    %v3196 = vadd.f32 %v3059, %v3164
    %v3197 = vadd.f32 %v3060, %v3167
    %v3198 = vadd.f32 %v3061, %v3172
    %v3199 = vadd.f32 %v3062, %v3175
    %v3200 = vadd.f32 %v3063, %v3180
    %v3201 = vadd.f32 %v3064, %v3183
    %v3202 = vld [vmem:[%s4] sm:$0x1]
    %v3204 = vlaneseq
    %v3205 = vshrl.u32 %v3204, 7
    %v3206 = vsub.s32 0, %v3205
    %v3207 = vrot.slane %v3202, %v3206
    %v3209 = vadd.f32 %v3186, %v3207
    %v3210 = vadd.f32 %v3187, %v3207
    %v3211 = vadd.f32 %v3188, %v3207
    %v3212 = vadd.f32 %v3189, %v3207
    %v3213 = vadd.f32 %v3190, %v3207
    %v3214 = vadd.f32 %v3191, %v3207
    %v3215 = vadd.f32 %v3192, %v3207
    %v3216 = vadd.f32 %v3193, %v3207
    %v3217 = vadd.f32 %v3194, %v3207
    %v3218 = vadd.f32 %v3195, %v3207
    %v3219 = vadd.f32 %v3196, %v3207
    %v3220 = vadd.f32 %v3197, %v3207
    %v3221 = vadd.f32 %v3198, %v3207
    %v3222 = vadd.f32 %v3199, %v3207
    %v3223 = vadd.f32 %v3200, %v3207
    %v3224 = vadd.f32 %v3201, %v3207
    %v3225 = vsel %vm34, %v3209, 0.0
    %v3226 = vsel %vm34, %v3210, 0.0
    %v3227 = vadd.f32 %v3225, %v3226
    %v3228 = vsel %vm34, %v3211, 0.0
    %v3229 = vadd.f32 %v3227, %v3228
    %v3230 = vsel %vm34, %v3212, 0.0
    %v3231 = vadd.f32 %v3229, %v3230
    %v3232 = vsel %vm34, %v3213, 0.0
    %v3233 = vadd.f32 %v3231, %v3232
    %v3234 = vsel %vm34, %v3214, 0.0
    %v3235 = vadd.f32 %v3233, %v3234
    %v3236 = vsel %vm34, %v3215, 0.0
    %v3237 = vadd.f32 %v3235, %v3236
    %v3238 = vsel %vm34, %v3216, 0.0
    %v3239 = vadd.f32 %v3237, %v3238
    %v3240 = vrot.slane %v3239, 4
    %v3241 = vadd.f32 %v3239, %v3240
    %v3242 = vrot.slane %v3241, 2
    %v3243 = vadd.f32 %v3241, %v3242
    %v3244 = vrot.slane %v3243, 1
    %v3245 = vadd.f32 %v3243, %v3244
    %v3246 = vsel %vm34, %v3217, 0.0
    %v3247 = vsel %vm34, %v3218, 0.0
    %v3248 = vadd.f32 %v3246, %v3247
    %v3249 = vsel %vm34, %v3219, 0.0
    %v3250 = vadd.f32 %v3248, %v3249
    %v3251 = vsel %vm34, %v3220, 0.0
    %v3252 = vadd.f32 %v3250, %v3251
    %v3253 = vsel %vm34, %v3221, 0.0
    %v3254 = vadd.f32 %v3252, %v3253
    %v3255 = vsel %vm34, %v3222, 0.0
    %v3256 = vadd.f32 %v3254, %v3255
    %v3257 = vsel %vm34, %v3223, 0.0
    %v3258 = vadd.f32 %v3256, %v3257
    %v3259 = vsel %vm34, %v3224, 0.0
    %v3260 = vadd.f32 %v3258, %v3259
    %v3261 = vrot.slane %v3260, 4
    %v3262 = vadd.f32 %v3260, %v3261
    %v3263 = vrot.slane %v3262, 2
    %v3264 = vadd.f32 %v3262, %v3263
    %v3265 = vrot.slane %v3264, 1
    %v3266 = vadd.f32 %v3264, %v3265
    %v3267 = vrcp.pop 64.0
    %v3268 = vmul.f32 %v3245, %v3267
    %v3269 = vmul.f32 %v3266, %v3267
    %v3270 = vld [vmem:[%s5] sm:$0xff]
    %v3271 = vld [vmem:[%s5 + $0x8] sm:$0xff]
    %v3272 = vld [vmem:[%s6] sm:$0x1]
    %v3274 = vlaneseq
    %v3275 = vshrl.u32 %v3274, 7
    %v3276 = vsub.s32 0, %v3275
    %v3277 = vrot.slane %v3272, %v3276
    %vm3281 = vcmask 1041409
    %v3282 = vsel %vm3281, %v3269, %v3268
    %v3283 = vsel %vm34, %v3282, 0
    %3285 = vmatprep.subr.mxu0 0.0
    %3286 = vmatpush1.msra.mxu0 0.0
    %3287 = vmatprep.subr.mxu0 0.0
    %3288 = vmatpush1.msra.mxu0 0.0
    %3289 = vmatprep.subr.mxu0 0.0
    %3290 = vmatpush1.msra.mxu0 0.0
    %3291 = vmatprep.subr.mxu0 0.0
    %3292 = vmatpush1.msra.mxu0 0.0
    %3293 = vmatprep.subr.mxu0 0.0
    %3294 = vmatpush1.msra.mxu0 0.0
    %3295 = vmatprep.subr.mxu0 0.0
    %3296 = vmatpush1.msra.mxu0 0.0
    %3297 = vmatprep.subr.mxu0 0.0
    %3298 = vmatpush1.msra.mxu0 0.0
    %3299 = vmatprep.subr.mxu0 0.0
    %3300 = vmatpush1.msra.mxu0 0.0
    %3301 = vmatprep.subr.mxu0 0.0
    %3302 = vmatpush1.msra.mxu0 0.0
    %3303 = vmatprep.subr.mxu0 0.0
    %3304 = vmatpush1.msra.mxu0 0.0
    %3305 = vmatprep.subr.mxu0 0.0
    %3306 = vmatpush1.msra.mxu0 0.0
    %3307 = vmatprep.subr.mxu0 0.0
    %3308 = vmatpush1.msra.mxu0 0.0
    %3309 = vmatprep.subr.mxu0 0.0
    %3310 = vmatpush1.msra.mxu0 0.0
    %3311 = vmatprep.subr.mxu0 0.0
    %3312 = vmatpush1.msra.mxu0 0.0
    %3313 = vmatprep.subr.mxu0 0.0
    %3314 = vmatpush1.msra.mxu0 %v3271
    %3315 = vmatprep.subr.mxu0 0.0
    %3316 = vmatpush1.msra.mxu0 %v3270
    %3317 = vmatprep.subr.mxu0 0.0
    %3318 = vmatpush2.msra.mxu0 0.0
    %3319 = vmatprep.subr.mxu0 0.0
    %3320 = vmatpush2.msra.mxu0 0.0
    %3321 = vmatprep.subr.mxu0 0.0
    %3322 = vmatpush2.msra.mxu0 0.0
    %3323 = vmatprep.subr.mxu0 0.0
    %3324 = vmatpush2.msra.mxu0 0.0
    %3325 = vmatprep.subr.mxu0 0.0
    %3326 = vmatpush2.msra.mxu0 0.0
    %3327 = vmatprep.subr.mxu0 0.0
    %3328 = vmatpush2.msra.mxu0 0.0
    %3329 = vmatprep.subr.mxu0 0.0
    %3330 = vmatpush2.msra.mxu0 0.0
    %3331 = vmatprep.subr.mxu0 0.0
    %3332 = vmatpush2.msra.mxu0 0.0
    %3333 = vmatprep.subr.mxu0 0.0
    %3334 = vmatpush2.msra.mxu0 0.0
    %3335 = vmatprep.subr.mxu0 0.0
    %3336 = vmatpush2.msra.mxu0 0.0
    %3337 = vmatprep.subr.mxu0 0.0
    %3338 = vmatpush2.msra.mxu0 0.0
    %3339 = vmatprep.subr.mxu0 0.0
    %3340 = vmatpush2.msra.mxu0 0.0
    %3341 = vmatprep.subr.mxu0 0.0
    %3342 = vmatpush2.msra.mxu0 0.0
    %3343 = vmatprep.subr.mxu0 0.0
    %3344 = vmatpush2.msra.mxu0 0.0
    %3345 = vmatprep.subr.mxu0 0.0
    %3346 = vmatpush2.msra.mxu0 0.0
    %3347 = vmatprep.subr.mxu0 0.0
    %3348 = vmatpush2.msra.mxu0 0.0
    %3349 = vmatprep.mubr.f32.mxu0 0.0
    %3350 = vmatmul.mubr.f32.gmra.mxu0 %v3283
    %v3351 = vpop.f32.mrf.mxu0
    %v3352 = vadd.f32 %v3277, %v3351
    %v3353 = vpop.f32.mrf.mxu0
    %3354 = vdwg.mxu0
    %v3355 = vmax.f32 %v3352, 0.0
    %v3356 = vld [vmem:[%s7] sm:$0xf]
    %v3357 = vld [vmem:[%s8] sm:$0x1]
    %v3359 = vlaneseq
    %v3360 = vshrl.u32 %v3359, 7
    %v3361 = vsub.s32 0, %v3360
    %v3362 = vrot.slane %v3357, %v3361
    %vm3364 = vcmask 31744
    %v3366 = vsel %vm3364, %v3355, 0
    %vm3368 = vcmask 1043456
    %v3370 = vsel %vm3368, %v3356, 0
    %3372 = vmatprep.subr.mxu0 0.0
    %3373 = vmatpush1.msra.mxu0 0.0
    %3374 = vmatprep.subr.mxu0 0.0
    %3375 = vmatpush1.msra.mxu0 0.0
    %3376 = vmatprep.subr.mxu0 0.0
    %3377 = vmatpush1.msra.mxu0 0.0
    %3378 = vmatprep.subr.mxu0 0.0
    %3379 = vmatpush1.msra.mxu0 0.0
    %3380 = vmatprep.subr.mxu0 0.0
    %3381 = vmatpush1.msra.mxu0 0.0
    %3382 = vmatprep.subr.mxu0 0.0
    %3383 = vmatpush1.msra.mxu0 0.0
    %3384 = vmatprep.subr.mxu0 0.0
    %3385 = vmatpush1.msra.mxu0 0.0
    %3386 = vmatprep.subr.mxu0 0.0
    %3387 = vmatpush1.msra.mxu0 0.0
    %3388 = vmatprep.subr.mxu0 0.0
    %3389 = vmatpush1.msra.mxu0 0.0
    %3390 = vmatprep.subr.mxu0 0.0
    %3391 = vmatpush1.msra.mxu0 0.0
    %3392 = vmatprep.subr.mxu0 0.0
    %3393 = vmatpush1.msra.mxu0 0.0
    %3394 = vmatprep.subr.mxu0 0.0
    %3395 = vmatpush1.msra.mxu0 0.0
    %3396 = vmatprep.subr.mxu0 0.0
    %3397 = vmatpush1.msra.mxu0 0.0
    %3398 = vmatprep.subr.mxu0 0.0
    %3399 = vmatpush1.msra.mxu0 0.0
    %3400 = vmatprep.subr.mxu0 0.0
    %3401 = vmatpush1.msra.mxu0 0.0
    %3402 = vmatprep.subr.mxu0 0.0
    %3403 = vmatpush1.msra.mxu0 %v3370
    %3404 = vmatprep.subr.mxu0 0.0
    %3405 = vmatpush2.msra.mxu0 0.0
    %3406 = vmatprep.subr.mxu0 0.0
    %3407 = vmatpush2.msra.mxu0 0.0
    %3408 = vmatprep.subr.mxu0 0.0
    %3409 = vmatpush2.msra.mxu0 0.0
    %3410 = vmatprep.subr.mxu0 0.0
    %3411 = vmatpush2.msra.mxu0 0.0
    %3412 = vmatprep.subr.mxu0 0.0
    %3413 = vmatpush2.msra.mxu0 0.0
    %3414 = vmatprep.subr.mxu0 0.0
    %3415 = vmatpush2.msra.mxu0 0.0
    %3416 = vmatprep.subr.mxu0 0.0
    %3417 = vmatpush2.msra.mxu0 0.0
    %3418 = vmatprep.subr.mxu0 0.0
    %3419 = vmatpush2.msra.mxu0 0.0
    %3420 = vmatprep.subr.mxu0 0.0
    %3421 = vmatpush2.msra.mxu0 0.0
    %3422 = vmatprep.subr.mxu0 0.0
    %3423 = vmatpush2.msra.mxu0 0.0
    %3424 = vmatprep.subr.mxu0 0.0
    %3425 = vmatpush2.msra.mxu0 0.0
    %3426 = vmatprep.subr.mxu0 0.0
    %3427 = vmatpush2.msra.mxu0 0.0
    %3428 = vmatprep.subr.mxu0 0.0
    %3429 = vmatpush2.msra.mxu0 0.0
    %3430 = vmatprep.subr.mxu0 0.0
    %3431 = vmatpush2.msra.mxu0 0.0
    %3432 = vmatprep.subr.mxu0 0.0
    %3433 = vmatpush2.msra.mxu0 0.0
    %3434 = vmatprep.subr.mxu0 0.0
    %3435 = vmatpush2.msra.mxu0 0.0
    %3436 = vmatprep.mubr.f32.mxu0 0.0
    %3437 = vmatmul.mubr.f32.gmra.mxu0 %v3366
    %v3438 = vpop.f32.mrf.mxu0
    %v3439 = vadd.f32 %v3362, %v3438
    %v3440 = vpop.f32.mrf.mxu0
    %3441 = vdwg.mxu0
    %v3442 = vxor.u32 %v3439, 2147483648
    %v3443 = vmul.f32 %v3442, 1.442695
    %v3444 = vpow.pop %v3443
    %v3445 = vadd.f32 %v3444, 1.0
    %v3446 = vrcp.pop %v3445
    %v3447 = vmul.f32 1.0, %v3446
    %v3450 = vunpack.c.l.s4 1966171168
    %v3451 = vunpack.c.0.s8 %v3450
    %v3452 = vlaneseq
    %v3453 = vshrl.u32 %v3452, 7
    %v3454 = vsub.s32 %v3451, %v3453
    %v3455 = vrot.slane %v3447, %v3454
    %v3456 = vcombine.high %v3455, %v3455
    %v3458 = vunpack.c.l.s4 1966171168
    %v3459 = vunpack.c.0.s8 %v3458
    %v3460 = vlaneseq
    %v3461 = vshrl.u32 %v3460, 7
    %v3462 = vsub.s32 %v3459, %v3461
    %v3463 = vrot.slane %v3455, %v3462
    %v3465 = vunpack.c.l.s4 1966171168
    %v3466 = vunpack.c.0.s8 %v3465
    %v3467 = vlaneseq
    %v3468 = vshrl.u32 %v3467, 7
    %v3469 = vsub.s32 %v3466, %v3468
    %v3470 = vrot.slane %v3456, %v3469
    %v3471 = vlaneseq
    %v3472 = vshrl.u32 %v3471, 7
    %v3473 = vsub.s32 0, %v3472
    %v3474 = vrot.slane %v3463, %v3473
    %v3475 = vlaneseq
    %v3476 = vshrl.u32 %v3475, 7
    %v3477 = vsub.s32 0, %v3476
    %v3478 = vrot.slane %v3470, %v3477
    %v3481 = vmul.f32 %v3209, %v3474
    %v3482 = vmul.f32 %v3210, %v3474
    %v3483 = vmul.f32 %v3211, %v3474
    %v3484 = vmul.f32 %v3212, %v3474
    %v3485 = vmul.f32 %v3213, %v3474
    %v3486 = vmul.f32 %v3214, %v3474
    %v3487 = vmul.f32 %v3215, %v3474
    %v3488 = vmul.f32 %v3216, %v3474
    %v3489 = vmul.f32 %v3217, %v3478
    %v3490 = vmul.f32 %v3218, %v3478
    %v3491 = vmul.f32 %v3219, %v3478
    %v3492 = vmul.f32 %v3220, %v3478
    %v3493 = vmul.f32 %v3221, %v3478
    %v3494 = vmul.f32 %v3222, %v3478
    %v3495 = vmul.f32 %v3223, %v3478
    %v3496 = vmul.f32 %v3224, %v3478
    %v3497 = vld [vmem:[%s0] sm:$0xff]
    %v3498 = vld [vmem:[%s0 + $0x8] sm:$0xff]
    %v3499 = vld [vmem:[%s0 + $0x10] sm:$0xff]
    %v3500 = vld [vmem:[%s0 + $0x18] sm:$0xff]
    %v3501 = vld [vmem:[%s0 + $0x20] sm:$0xff]
    %v3502 = vld [vmem:[%s0 + $0x28] sm:$0xff]
    %v3503 = vld [vmem:[%s0 + $0x30] sm:$0xff]
    %v3504 = vld [vmem:[%s0 + $0x38] sm:$0xff]
    %v3505 = vld [vmem:[%s0 + $0x40] sm:$0xff]
    %v3506 = vld [vmem:[%s0 + $0x48] sm:$0xff]
    %v3507 = vld [vmem:[%s0 + $0x50] sm:$0xff]
    %v3508 = vld [vmem:[%s0 + $0x58] sm:$0xff]
    %v3509 = vld [vmem:[%s0 + $0x60] sm:$0xff]
    %v3510 = vld [vmem:[%s0 + $0x68] sm:$0xff]
    %v3511 = vld [vmem:[%s0 + $0x70] sm:$0xff]
    %v3512 = vld [vmem:[%s0 + $0x78] sm:$0xff]
    %v3513 = vadd.f32 %v3481, %v3497
    %v3514 = vadd.f32 %v3482, %v3498
    %v3515 = vadd.f32 %v3483, %v3499
    %v3516 = vadd.f32 %v3484, %v3500
    %v3517 = vadd.f32 %v3485, %v3501
    %v3518 = vadd.f32 %v3486, %v3502
    %v3519 = vadd.f32 %v3487, %v3503
    %v3520 = vadd.f32 %v3488, %v3504
    %v3521 = vadd.f32 %v3489, %v3505
    %v3522 = vadd.f32 %v3490, %v3506
    %v3523 = vadd.f32 %v3491, %v3507
    %v3524 = vadd.f32 %v3492, %v3508
    %v3525 = vadd.f32 %v3493, %v3509
    %v3526 = vadd.f32 %v3494, %v3510
    %v3527 = vadd.f32 %v3495, %v3511
    %v3528 = vadd.f32 %v3496, %v3512
    %3529 = vst.msk [vmem:[#allocation3] sm:$0xff] %vm34, %v3513
    %3530 = vst.msk [vmem:[#allocation3 + $0x8] sm:$0xff] %vm34, %v3514
    %3531 = vst.msk [vmem:[#allocation3 + $0x10] sm:$0xff] %vm34, %v3515
    %3532 = vst.msk [vmem:[#allocation3 + $0x18] sm:$0xff] %vm34, %v3516
    %3533 = vst.msk [vmem:[#allocation3 + $0x20] sm:$0xff] %vm34, %v3517
    %3534 = vst.msk [vmem:[#allocation3 + $0x28] sm:$0xff] %vm34, %v3518
    %3535 = vst.msk [vmem:[#allocation3 + $0x30] sm:$0xff] %vm34, %v3519
    %3536 = vst.msk [vmem:[#allocation3 + $0x38] sm:$0xff] %vm34, %v3520
    %3537 = vst.msk [vmem:[#allocation3 + $0x40] sm:$0xff] %vm34, %v3521
    %3538 = vst.msk [vmem:[#allocation3 + $0x48] sm:$0xff] %vm34, %v3522
    %3539 = vst.msk [vmem:[#allocation3 + $0x50] sm:$0xff] %vm34, %v3523
    %3540 = vst.msk [vmem:[#allocation3 + $0x58] sm:$0xff] %vm34, %v3524
    %3541 = vst.msk [vmem:[#allocation3 + $0x60] sm:$0xff] %vm34, %v3525
    %3542 = vst.msk [vmem:[#allocation3 + $0x68] sm:$0xff] %vm34, %v3526
    %3543 = vst.msk [vmem:[#allocation3 + $0x70] sm:$0xff] %vm34, %v3527
    %3544 = vst.msk [vmem:[#allocation3 + $0x78] sm:$0xff] %vm34, %v3528
    // Predicated region
    $region38: #{tpu_custom_call.1} parent=1 // pred_check
      _
    $region39: #{tpu_custom_call.1} parent=1 // pred_check_branch
      %3546 = sbr.rel (0) target = $region41
    $region40: #{tpu_custom_call.1} parent=1 // pred_region
      %s3548 = ssub.s32 2048, 2048
      %3549 = vsyncadd [#allocation4], %s3548
      %s3550 = sshll.u32 [#allocation3], 4
      %s3551 = int_to_ptr.vmem [resolvable:$true] %s3550
      %3556 = dma.vmem_to_hbm [thread:$0]  %s3551, 2048, %s9, [#allocation4], 128, 128, 8
    $region41: #{tpu_custom_call.1} parent=1 // pred_fallthru
      _
    // Predicated region
    $region42: #{tpu_custom_call.1} parent=1 // pred_check
      _
    $region43: #{tpu_custom_call.1} parent=1 // pred_check_branch
      %3558 = sbr.rel (0) target = $region45
    $region44: #{tpu_custom_call.1} parent=1 // pred_region
      %3559 = dma.done [#allocation4], 2048
    $region45: #{tpu_custom_call.1} parent=1 // pred_fallthru
      _
    %3560 = vsyncpa [#allocation4], 1

</llo_original>
